<compile_context>
chip_gen: v7x
topology: tpu7x:2x2x1
jax: 0.10.0
libtpu: 0.0.40
codegen_flags: <defaults>
</compile_context>

<pallas_src>
import functools

import jax
import jax.numpy as jnp
from jax.experimental import pallas as pl
from jax.experimental.pallas import tpu as pltpu

# Row tile over the flattened node axis M = N*L.
# 256 targets v5e/v6e (128 MiB VMEM). On v7x (64 MiB VMEM, 2 TensorCores/chip) prefer
# 128 so the double-buffered (TM, K, 2H) bf16 tiles fit and the grid keeps enough
# steps for megacore sharding.
DEFAULT_TM = 256
_BF16 = jnp.bfloat16


def _round_up(x, m):
    return ((x + m - 1) // m) * m


# ----------------------------------------------------------------------------- #
# Pallas kernels
# ----------------------------------------------------------------------------- #
def _linear_kernel(x_ref, w_ref, b_ref, o_ref):
    # Small one-shot projections (W_v, W_out). HBM-bandwidth bound on the f32
    # in/out tensors, so the matmul stays f32 (bf16 gains nothing here).
    y = jnp.dot(x_ref[...].astype(jnp.float32), w_ref[...],
                preferred_element_type=jnp.float32) + b_ref[...]
    o_ref[...] = y.astype(o_ref.dtype)


def pallas_linear(x, w, b, tm_max=DEFAULT_TM):
    """y = x @ w + b.  Pads cout to a multiple of 128 so stores are lane-dense."""
    lead, cin, cout = x.shape[:-1], x.shape[-1], w.shape[-1]
    coutp = _round_up(cout, 128)
    if coutp != cout:
        w = jnp.pad(w, ((0, 0), (0, coutp - cout)))
        b = jnp.pad(b, (0, coutp - cout))
    x2 = x.reshape(-1, cin)
    m = x2.shape[0]
    tm = min(tm_max, _round_up(m, 8))
    mp = _round_up(m, tm)
    if mp != m:
        x2 = jnp.pad(x2, ((0, mp - m), (0, 0)))
    out = pl.pallas_call(
        _linear_kernel,
        out_shape=jax.ShapeDtypeStruct((mp, coutp), jnp.float32),
        grid=(mp // tm,),
        in_specs=[
            pl.BlockSpec((tm, cin), lambda i: (i, 0)),
            pl.BlockSpec((cin, coutp), lambda i: (0, 0)),
            pl.BlockSpec((1, coutp), lambda i: (0, 0)),
        ],
        out_specs=pl.BlockSpec((tm, coutp), lambda i: (i, 0)),
        compiler_params=pltpu.CompilerParams(dimension_semantics=("parallel",)),
    )(x2, w, b.reshape(1, coutp))
    return out[:m, :cout].reshape(lead + (cout,))


def _edge_prep_kernel(e_ref, hs_ref, em_ref, fm_ref, we_ref, be_ref, o_ref):
    # Layer-invariant part of h_ESV, kept as the reference's two separate chunks:
    #   o[..., :H]   = mask_fw * edge_mask * (edges @ W_e + b_e)   (chunk for W1[H:2H])
    #   o[..., H:2H] = mask_fw * gather(h_S)                       (chunk for W1[2H:3H])
    tm, k, ce = e_ref.shape
    h = we_ref.shape[1]
    he = jnp.dot(e_ref[...].reshape(tm * k, ce), we_ref[...],
                 preferred_element_type=jnp.float32) + be_ref[...]
    he = he.reshape(tm, k, h)
    fm = fm_ref[...][..., None]                      # (TM, K, 1) f32
    em = em_ref[...][..., None]                      # (TM, K, 1) f32
    o_ref[:, :, :h] = (fm * (em * he)).astype(o_ref.dtype)
    o_ref[:, :, h:] = (fm * hs_ref[...].astype(jnp.float32)).astype(o_ref.dtype)


def edge_prep(edges, h_s_gathered, edge_mask, mask_fw, w_e, b_e, tm_max=DEFAULT_TM):
    """Fused W_e projection + edge_mask + mask_fw + gather(h_S) masking.

    Returns the layer-invariant (N, L, K, 2H) bf16 tensor consumed by every
    decoder layer (reference chunks [H:2H] and [2H:3H] of h_ESV).
    """
    N, L, K, Ce = edges.shape
    H = w_e.shape[1]
    M = N * L
    tm = min(tm_max, _round_up(M, 8))
    mp = _round_up(M, tm)
    e2 = edges.reshape(M, K, Ce)
    hs2 = h_s_gathered.reshape(M, K, H).astype(_BF16)   # halve HBM read of biggest input
    em2 = edge_mask.reshape(M, K)
    fm2 = mask_fw.reshape(M, K)
    if mp != M:
        pad = mp - M
        e2 = jnp.pad(e2, ((0, pad), (0, 0), (0, 0)))
        hs2 = jnp.pad(hs2, ((0, pad), (0, 0), (0, 0)))
        em2 = jnp.pad(em2, ((0, pad), (0, 0)))
        fm2 = jnp.pad(fm2, ((0, pad), (0, 0)))
    out = pl.pallas_call(
        _edge_prep_kernel,
        out_shape=jax.ShapeDtypeStruct((mp, K, 2 * H), _BF16),
        grid=(mp // tm,),
        in_specs=[
            pl.BlockSpec((tm, K, Ce), lambda i: (i, 0, 0)),
            pl.BlockSpec((tm, K, H), lambda i: (i, 0, 0)),
            pl.BlockSpec((tm, K), lambda i: (i, 0)),
            pl.BlockSpec((tm, K), lambda i: (i, 0)),
            pl.BlockSpec((Ce, H), lambda i: (0, 0)),
            pl.BlockSpec((1, H), lambda i: (0, 0)),
        ],
        out_specs=pl.BlockSpec((tm, K, 2 * H), lambda i: (i, 0, 0)),
        compiler_params=pltpu.CompilerParams(dimension_semantics=("parallel",)),
    )(e2, hs2, em2, fm2, w_e, b_e.reshape(1, H))
    return out[:M].reshape(N, L, K, 2 * H)


def _mpnn_decoder_kernel(hv_ref, es_ref, g_ref,
                         w1v_ref, w1es_ref, w1g_ref, b1_ref,
                         w2_ref, b2_ref, w3_ref, b3_ref,
                         g0_ref, bt0_ref,
                         win_ref, bin_ref, wo_ref, bo_ref,
                         g1_ref, bt1_ref,
                         o_ref, *, inv_scale):
    f32 = jnp.float32
    hv = hv_ref[...].astype(f32)                       # (TM, H) f32 residual path
    tm, k, h2 = es_ref.shape
    h = hv.shape[1]

    es = es_ref[...]                                   # (TM, K, 2H) bf16, masks pre-applied
    g = g_ref[...]                                     # (TM, K, H)  bf16, mask_fw pre-applied

    # h_EV @ W1 decomposed per chunk (chunk -> W1 row block matches the reference):
    #   h_V_expand            @ W1[0:H]
    #   [edge term, h_S term] @ W1[H:3H]   (layer-invariant 2H block, precomputed)
    #   mask_fw*gather(h_V)   @ W1[3H:4H]
    mv = jnp.dot(hv.astype(_BF16), w1v_ref[...], preferred_element_type=f32)      # (TM, H)
    me = (jnp.dot(es.reshape(tm * k, h2), w1es_ref[...], preferred_element_type=f32)
          + jnp.dot(g.reshape(tm * k, h), w1g_ref[...], preferred_element_type=f32))
    m = me.reshape(tm, k, h) + mv[:, None, :] + b1_ref[...][None]
    m = jnp.maximum(m, 0.0)
    m = jnp.dot(m.reshape(tm * k, h).astype(_BF16), w2_ref[...],
                preferred_element_type=f32) + b2_ref[...]
    m = jnp.maximum(m, 0.0)
    # K-reduction BEFORE W3 (sum commutes with the linear map; bias becomes K*b3;
    # valid because mask_attend is None in the decoder call).
    s = jnp.sum(m.reshape(tm, k, h), axis=1)                                       # (TM, H)
    dh = (jnp.dot(s.astype(_BF16), w3_ref[...], preferred_element_type=f32)
          + k * b3_ref[...]) * inv_scale

    def ln(x, gam, bet):  # eps=1e-6 as in the reference MPNNLayer
        mu = jnp.mean(x, axis=-1, keepdims=True)
        var = jnp.mean((x - mu) ** 2, axis=-1, keepdims=True)
        return (x - mu) * jax.lax.rsqrt(var + 1e-6) * gam + bet

    x = ln(hv + dh, g0_ref[...], bt0_ref[...])
    ff = jnp.maximum(jnp.dot(x.astype(_BF16), win_ref[...],
                             preferred_element_type=f32) + bin_ref[...], 0.0)
    ff = jnp.dot(ff.astype(_BF16), wo_ref[...],
                 preferred_element_type=f32) + bo_ref[...]
    x = ln(x + ff, g1_ref[...], bt1_ref[...])
    o_ref[...] = x.astype(o_ref.dtype)


def mpnn_decoder_layer(h_v, es_term, g, p, scale=30.0, tm_max=DEFAULT_TM):
    """One MPNNLayer forward (eval) with the concat/gather masking fused in-kernel.

    h_v: (N,L,H) f32, es_term: (N,L,K,2H) bf16 (layer-invariant, masks applied),
    g = mask_fw*gather(h_v): (N,L,K,H) bf16  ->  (N,L,H) f32.
    """
    N, L, H = h_v.shape
    K = es_term.shape[2]
    H4 = p["w_in"].shape[1]
    M = N * L
    tm = min(tm_max, _round_up(M, 8))
    mp = _round_up(M, tm)

    hv2 = h_v.reshape(M, H)
    es2 = es_term.reshape(M, K, 2 * H)
    g2 = g.reshape(M, K, H)
    if mp != M:
        pad = mp - M
        hv2 = jnp.pad(hv2, ((0, pad), (0, 0)))
        es2 = jnp.pad(es2, ((0, pad), (0, 0), (0, 0)))
        g2 = jnp.pad(g2, ((0, pad), (0, 0), (0, 0)))

    def full(shape):
        n = len(shape)
        return pl.BlockSpec(shape, lambda i, _n=n: (0,) * _n)

    cost = pl.CostEstimate(
        flops=int(2 * mp * H * H * (4 * K + 11)),
        transcendentals=int(2 * mp),
        bytes_accessed=int(mp * (8 * H + 6 * K * H) + 28 * H * H + 48 * H))

    out = pl.pallas_call(
        functools.partial(_mpnn_decoder_kernel, inv_scale=1.0 / scale),
        out_shape=jax.ShapeDtypeStruct((mp, H), jnp.float32),
        grid=(mp // tm,),
        in_specs=[
            pl.BlockSpec((tm, H), lambda i: (i, 0)),
            pl.BlockSpec((tm, K, 2 * H), lambda i: (i, 0, 0)),
            pl.BlockSpec((tm, K, H), lambda i: (i, 0, 0)),
            full((H, H)), full((2 * H, H)), full((H, H)), full((1, H)),  # W1 splits, b1
            full((H, H)), full((1, H)),                                  # W2, b2
            full((H, H)), full((1, H)),                                  # W3, b3
            full((1, H)), full((1, H)),                                  # LN0 gamma, beta
            full((H, H4)), full((1, H4)),                                # FFN W_in, b_in
            full((H4, H)), full((1, H)),                                 # FFN W_out, b_out
            full((1, H)), full((1, H)),                                  # LN1 gamma, beta
        ],
        out_specs=pl.BlockSpec((tm, H), lambda i: (i, 0)),
        compiler_params=pltpu.CompilerParams(
            dimension_semantics=("parallel",),
            vmem_limit_bytes=48 * 1024 * 1024),   # re-derive for v7x's 64 MiB VMEM
        cost_estimate=cost,
    )(hv2, es2, g2,
      p["w1"][:H].astype(_BF16),            # h_V_expand chunk
      p["w1"][H:3 * H].astype(_BF16),       # [edge, h_S] layer-invariant chunks
      p["w1"][3 * H:].astype(_BF16),        # gather(h_V) chunk
      p["b1"].reshape(1, H),
      p["w2"].astype(_BF16), p["b2"].reshape(1, H),
      p["w3"].astype(_BF16), p["b3"].reshape(1, H),
      p["g0"].reshape(1, H), p["bt0"].reshape(1, H),
      p["w_in"].astype(_BF16), p["b_in"].reshape(1, H4),
      p["w_out"].astype(_BF16), p["b_out"].reshape(1, H),
      p["g1"].reshape(1, H), p["bt1"].reshape(1, H))
    return out[:M].reshape(N, L, H)


# ----------------------------------------------------------------------------- #
# Plain-JAX glue: data-dependent neighbor gather (torch.gather equivalent)
# ----------------------------------------------------------------------------- #
def gather_nodes(nodes, idx):
    # nodes: (N, L, C), idx: (N, L, K) -> (N, L, K, C)
    N, L, K = idx.shape
    flat = idx.reshape(N, L * K, 1)
    g = jnp.take_along_axis(nodes, flat, axis=1)
    return g.reshape(N, L, K, nodes.shape[-1])


# ----------------------------------------------------------------------------- #
# Parameter construction (deterministic synthetic init)
# ----------------------------------------------------------------------------- #
def _lin(key, cin, cout):
    kw, kb = jax.random.split(key)
    w = jax.random.normal(kw, (cin, cout), jnp.float32) * (float(cin) ** -0.5)
    b = jax.random.normal(kb, (cout,), jnp.float32) * 0.01
    return w, b


def _mpnn_params(key, H, num_in):
    ks = jax.random.split(key, 5)
    w1, b1 = _lin(ks[0], H + num_in, H)
    w2, b2 = _lin(ks[1], H, H)
    w3, b3 = _lin(ks[2], H, H)
    w_in, b_in = _lin(ks[3], H, 4 * H)
    w_out, b_out = _lin(ks[4], 4 * H, H)
    return dict(w1=w1, b1=b1, w2=w2, b2=b2, w3=w3, b3=b3,
                w_in=w_in, b_in=b_in, w_out=w_out, b_out=b_out,
                g0=jnp.ones(H, jnp.float32), bt0=jnp.zeros(H, jnp.float32),
                g1=jnp.ones(H, jnp.float32), bt1=jnp.zeros(H, jnp.float32))


def init_model(key, num_letters, node_features, edge_features, hidden_dim,
               num_decoder_layers=3):
    H = hidden_dim
    ks = jax.random.split(key, 4 + num_decoder_layers)
    return dict(
        w_v=_lin(ks[0], node_features, H),
        w_e=_lin(ks[1], edge_features, H),
        w_s=jax.random.normal(ks[2], (num_letters, H), jnp.float32) * 0.1,  # Embedding
        w_out=_lin(ks[3], H, num_letters),
        layers=[_mpnn_params(ks[4 + i], H, 3 * H) for i in range(num_decoder_layers)],
    )


# ----------------------------------------------------------------------------- #
# Struct2SeqDecoder forward
# ----------------------------------------------------------------------------- #
def struct2seq_decoder(params, nodes, edges, connections, src, edge_mask, scale=30.0):
    N, L, K = connections.shape

    # no-structure check on the raw inputs, matching the PyTorch reference.
    no_struct = jnp.logical_and(jnp.all(nodes == 0), jnp.all(edges == 0))
    keep = jnp.where(no_struct, 0.0, 1.0).astype(jnp.float32)

    h_V = pallas_linear(nodes, *params["w_v"]) * keep            # (N,L,H); pe = Identity
    h_S = jnp.take(params["w_s"], src, axis=0)                   # (N,L,H) embedding lookup

    ii = jnp.arange(L, dtype=connections.dtype).reshape(1, L, 1)
    mask_fw = ((connections - ii) < 0).astype(jnp.float32)       # (N,L,K), direction='forward'
    em = edge_mask.reshape(N, L, K).astype(jnp.float32) * keep   # folds the h_E zeroing

    # Layer-invariant chunks of h_ESV (edge term and gathered-sequence term),
    # computed once by a fused Pallas pass and stored bf16; the full 3H/4H-wide
    # h_ES / h_S_encoder / h_ESV / h_EV concats are never materialized in HBM.
    h_S_g = gather_nodes(h_S, connections)                       # (N,L,K,H)
    es_term = edge_prep(edges, h_S_g, em, mask_fw, *params["w_e"])   # (N,L,K,2H) bf16

    for lp in params["layers"]:
        # TODO(synk): the gather itself is data-dependent indexing and stays in XLA
        # (one fused gather*mask_fw->bf16 pass per layer).
        g = (gather_nodes(h_V, connections) * mask_fw[..., None]).astype(_BF16)
        h_V = mpnn_decoder_layer(h_V, es_term, g, lp, scale)

    logits = pallas_linear(h_V, *params["w_out"])                # (N, L, num_letters)
    return logits


# ----------------------------------------------------------------------------- #
if __name__ == "__main__":
    key = jax.random.PRNGKey(0)
    N, L, K = 2, 16, 8
    node_features, edge_features, num_letters = 10, 6, 20
    hidden_dim = 128   # lane-dense hidden size (multiple of 128)

    k1, k2, k3, k4, k5, kp = jax.random.split(key, 6)
    nodes = jax.random.normal(k1, (N, L, node_features), jnp.float32)
    edges = jax.random.normal(k2, (N, L, K, edge_features), jnp.float32)
    connections = jax.random.randint(k3, (N, L, K), 0, L, dtype=jnp.int32)
    src = jax.random.randint(k4, (N, L), 0, num_letters, dtype=jnp.int32)
    edge_mask = (jax.random.uniform(k5, (N, L, K, 1)) > 0.1).astype(jnp.float32)

    params = init_model(kp, num_letters, node_features, edge_features, hidden_dim,
                        num_decoder_layers=3)

    fwd = jax.jit(struct2seq_decoder)
    logits = fwd(params, nodes, edges, connections, src, edge_mask)
    jax.block_until_ready(logits)
    assert logits.shape == (N, L, num_letters), logits.shape
    assert bool(jnp.all(jnp.isfinite(logits)))
    print("KERNEL_OK")
</pallas_src>

<mosaic_0001>
module attributes {stable_mosaic.version = 11 : i64} {
  func.func @_edge_prep_kernel(%arg0: i32, %arg1: memref<32x8x6xf32, #tpu.memory_space<vmem>>, %arg2: memref<32x8x128xbf16, #tpu.memory_space<vmem>>, %arg3: memref<32x8xf32, #tpu.memory_space<vmem>>, %arg4: memref<32x8xf32, #tpu.memory_space<vmem>>, %arg5: memref<6x128xf32, #tpu.memory_space<vmem>>, %arg6: memref<1x128xf32, #tpu.memory_space<vmem>>, %arg7: memref<32x8x256xbf16, #tpu.memory_space<vmem>>) attributes {dimension_semantics = [#tpu.dimension_semantics<parallel>], iteration_bounds = array<i64: 1>, scalar_prefetch = 0 : i64, scratch_operands = 0 : i64, tpu.core_type = #tpu.core_type<tc>, window_params = [{transform_indices = @transform_0, window_bounds = array<i64: 32, 8, 6>}, {transform_indices = @transform_1, window_bounds = array<i64: 32, 8, 128>}, {transform_indices = @transform_2, window_bounds = array<i64: 32, 8>}, {transform_indices = @transform_3, window_bounds = array<i64: 32, 8>}, {pipeline_mode = #tpu.pipeline_mode<synchronous>, transform_indices = @transform_4, window_bounds = array<i64: 6, 128>}, {pipeline_mode = #tpu.pipeline_mode<synchronous>, transform_indices = @transform_5, window_bounds = array<i64: 1, 128>}, {transform_indices = @transform_6, window_bounds = array<i64: 32, 8, 256>}]} {
    %c0 = arith.constant 0 : index
    %c0_0 = arith.constant 0 : index
    %c0_1 = arith.constant 0 : index
    %0 = vector.load %arg1[%c0, %c0_0, %c0_1] : memref<32x8x6xf32, #tpu.memory_space<vmem>>, vector<32x8x6xf32>
    %1 = vector.shape_cast %0 : vector<32x8x6xf32> to vector<256x6xf32>
    %c0_2 = arith.constant 0 : index
    %c0_3 = arith.constant 0 : index
    %2 = vector.load %arg5[%c0_2, %c0_3] : memref<6x128xf32, #tpu.memory_space<vmem>>, vector<6x128xf32>
    %cst = arith.constant dense<0.000000e+00> : vector<256x128xf32>
    %3 = tpu.matmul %1, %2, %cst {dimension_numbers = #tpu.dot_dimension_numbers<[1], [0], [0], [1], [0, 0, 1, 1], [], []>} : vector<256x6xf32>, vector<6x128xf32>, vector<256x128xf32> -> vector<256x128xf32>
    %c0_4 = arith.constant 0 : index
    %c0_5 = arith.constant 0 : index
    %4 = vector.load %arg6[%c0_4, %c0_5] : memref<1x128xf32, #tpu.memory_space<vmem>>, vector<1x128xf32>
    %5 = vector.broadcast %4 : vector<1x128xf32> to vector<256x128xf32>
    %6 = arith.addf %3, %5 : vector<256x128xf32>
    %7 = vector.shape_cast %6 : vector<256x128xf32> to vector<32x8x128xf32>
    %c0_6 = arith.constant 0 : index
    %c0_7 = arith.constant 0 : index
    %8 = vector.load %arg4[%c0_6, %c0_7] : memref<32x8xf32, #tpu.memory_space<vmem>>, vector<32x8xf32>
    %9 = vector.shape_cast %8 : vector<32x8xf32> to vector<32x8x1xf32>
    %c0_8 = arith.constant 0 : index
    %c0_9 = arith.constant 0 : index
    %10 = vector.load %arg3[%c0_8, %c0_9] : memref<32x8xf32, #tpu.memory_space<vmem>>, vector<32x8xf32>
    %11 = vector.shape_cast %10 : vector<32x8xf32> to vector<32x8x1xf32>
    %12 = vector.broadcast %11 : vector<32x8x1xf32> to vector<32x8x128xf32>
    %13 = arith.mulf %12, %7 : vector<32x8x128xf32>
    %14 = vector.broadcast %9 : vector<32x8x1xf32> to vector<32x8x128xf32>
    %15 = arith.mulf %14, %13 : vector<32x8x128xf32>
    %16 = arith.truncf %15 : vector<32x8x128xf32> to vector<32x8x128xbf16>
    %c0_10 = arith.constant 0 : index
    %c0_11 = arith.constant 0 : index
    %c0_12 = arith.constant 0 : index
    %17 = vector.load %arg7[%c0_10, %c0_11, %c0_12] : memref<32x8x256xbf16, #tpu.memory_space<vmem>>, vector<32x8x128xbf16>
    tpu.vector_store %arg7[%c0_10, %c0_11, %c0_12], %16 {strides = array<i32>} : memref<32x8x256xbf16, #tpu.memory_space<vmem>>, vector<32x8x128xbf16>,
    %c0_13 = arith.constant 0 : index
    %c0_14 = arith.constant 0 : index
    %c0_15 = arith.constant 0 : index
    %18 = vector.load %arg2[%c0_13, %c0_14, %c0_15] : memref<32x8x128xbf16, #tpu.memory_space<vmem>>, vector<32x8x128xbf16>
    %19 = arith.extf %18 : vector<32x8x128xbf16> to vector<32x8x128xf32>
    %20 = vector.broadcast %9 : vector<32x8x1xf32> to vector<32x8x128xf32>
    %21 = arith.mulf %20, %19 : vector<32x8x128xf32>
    %22 = arith.truncf %21 : vector<32x8x128xf32> to vector<32x8x128xbf16>
    %c0_16 = arith.constant 0 : index
    %c0_17 = arith.constant 0 : index
    %c128 = arith.constant 128 : index
    %23 = vector.load %arg7[%c0_16, %c0_17, %c128] : memref<32x8x256xbf16, #tpu.memory_space<vmem>>, vector<32x8x128xbf16>
    tpu.vector_store %arg7[%c0_16, %c0_17, %c128], %22 {strides = array<i32>} : memref<32x8x256xbf16, #tpu.memory_space<vmem>>, vector<32x8x128xbf16>,
    return
  }
  func.func @transform_0(%arg0: i32) -> (i32, i32, i32) {
    %c0_i32 = arith.constant 0 : i32
    %c0_i32_0 = arith.constant 0 : i32
    %c0_i32_1 = arith.constant 0 : i32
    return %arg0, %c0_i32, %c0_i32_0 : i32, i32, i32
  }
  func.func @transform_1(%arg0: i32) -> (i32, i32, i32) {
    %c0_i32 = arith.constant 0 : i32
    %c0_i32_0 = arith.constant 0 : i32
    %c0_i32_1 = arith.constant 0 : i32
    return %arg0, %c0_i32, %c0_i32_0 : i32, i32, i32
  }
  func.func @transform_2(%arg0: i32) -> (i32, i32) {
    %c0_i32 = arith.constant 0 : i32
    %c0_i32_0 = arith.constant 0 : i32
    return %arg0, %c0_i32 : i32, i32
  }
  func.func @transform_3(%arg0: i32) -> (i32, i32) {
    %c0_i32 = arith.constant 0 : i32
    %c0_i32_0 = arith.constant 0 : i32
    return %arg0, %c0_i32 : i32, i32
  }
  func.func @transform_4(%arg0: i32) -> (i32, i32) {
    %c0_i32 = arith.constant 0 : i32
    %c0_i32_0 = arith.constant 0 : i32
    %c0_i32_1 = arith.constant 0 : i32
    return %c0_i32, %c0_i32_0 : i32, i32
  }
  func.func @transform_5(%arg0: i32) -> (i32, i32) {
    %c0_i32 = arith.constant 0 : i32
    %c0_i32_0 = arith.constant 0 : i32
    %c0_i32_1 = arith.constant 0 : i32
    return %c0_i32, %c0_i32_0 : i32, i32
  }
  func.func @transform_6(%arg0: i32) -> (i32, i32, i32) {
    %c0_i32 = arith.constant 0 : i32
    %c0_i32_0 = arith.constant 0 : i32
    %c0_i32_1 = arith.constant 0 : i32
    return %arg0, %c0_i32, %c0_i32_0 : i32, i32, i32
  }
}

module attributes {stable_mosaic.version = 11 : i64} {
  func.func @_linear_kernel(%arg0: i32, %arg1: memref<32x10xf32, #tpu.memory_space<vmem>>, %arg2: memref<10x128xf32, #tpu.memory_space<vmem>>, %arg3: memref<1x128xf32, #tpu.memory_space<vmem>>, %arg4: memref<32x128xf32, #tpu.memory_space<vmem>>) attributes {dimension_semantics = [#tpu.dimension_semantics<parallel>], iteration_bounds = array<i64: 1>, scalar_prefetch = 0 : i64, scratch_operands = 0 : i64, tpu.core_type = #tpu.core_type<tc>, window_params = [{transform_indices = @transform_0, window_bounds = array<i64: 32, 10>}, {pipeline_mode = #tpu.pipeline_mode<synchronous>, transform_indices = @transform_1, window_bounds = array<i64: 10, 128>}, {pipeline_mode = #tpu.pipeline_mode<synchronous>, transform_indices = @transform_2, window_bounds = array<i64: 1, 128>}, {transform_indices = @transform_3, window_bounds = array<i64: 32, 128>}]} {
    %c0 = arith.constant 0 : index
    %c0_0 = arith.constant 0 : index
    %0 = vector.load %arg1[%c0, %c0_0] : memref<32x10xf32, #tpu.memory_space<vmem>>, vector<32x10xf32>
    %c0_1 = arith.constant 0 : index
    %c0_2 = arith.constant 0 : index
    %1 = vector.load %arg2[%c0_1, %c0_2] : memref<10x128xf32, #tpu.memory_space<vmem>>, vector<10x128xf32>
    %cst = arith.constant dense<0.000000e+00> : vector<32x128xf32>
    %2 = tpu.matmul %0, %1, %cst {dimension_numbers = #tpu.dot_dimension_numbers<[1], [0], [0], [1], [0, 0, 1, 1], [], []>} : vector<32x10xf32>, vector<10x128xf32>, vector<32x128xf32> -> vector<32x128xf32>
    %c0_3 = arith.constant 0 : index
    %c0_4 = arith.constant 0 : index
    %3 = vector.load %arg3[%c0_3, %c0_4] : memref<1x128xf32, #tpu.memory_space<vmem>>, vector<1x128xf32>
    %4 = vector.broadcast %3 : vector<1x128xf32> to vector<32x128xf32>
    %5 = arith.addf %2, %4 : vector<32x128xf32>
    %c0_5 = arith.constant 0 : index
    %c0_6 = arith.constant 0 : index
    %6 = vector.load %arg4[%c0_5, %c0_6] : memref<32x128xf32, #tpu.memory_space<vmem>>, vector<32x128xf32>
    tpu.vector_store %arg4[%c0_5, %c0_6], %5 {strides = array<i32>} : memref<32x128xf32, #tpu.memory_space<vmem>>, vector<32x128xf32>,
    return
  }
  func.func @transform_0(%arg0: i32) -> (i32, i32) {
    %c0_i32 = arith.constant 0 : i32
    %c0_i32_0 = arith.constant 0 : i32
    return %arg0, %c0_i32 : i32, i32
  }
  func.func @transform_1(%arg0: i32) -> (i32, i32) {
    %c0_i32 = arith.constant 0 : i32
    %c0_i32_0 = arith.constant 0 : i32
    %c0_i32_1 = arith.constant 0 : i32
    return %c0_i32, %c0_i32_0 : i32, i32
  }
  func.func @transform_2(%arg0: i32) -> (i32, i32) {
    %c0_i32 = arith.constant 0 : i32
    %c0_i32_0 = arith.constant 0 : i32
    %c0_i32_1 = arith.constant 0 : i32
    return %c0_i32, %c0_i32_0 : i32, i32
  }
  func.func @transform_3(%arg0: i32) -> (i32, i32) {
    %c0_i32 = arith.constant 0 : i32
    %c0_i32_0 = arith.constant 0 : i32
    return %arg0, %c0_i32 : i32, i32
  }
}

module attributes {stable_mosaic.version = 11 : i64} {
  func.func @_linear_kernel(%arg0: i32, %arg1: memref<32x128xf32, #tpu.memory_space<vmem>>, %arg2: memref<128x128xf32, #tpu.memory_space<vmem>>, %arg3: memref<1x128xf32, #tpu.memory_space<vmem>>, %arg4: memref<32x128xf32, #tpu.memory_space<vmem>>) attributes {dimension_semantics = [#tpu.dimension_semantics<parallel>], iteration_bounds = array<i64: 1>, scalar_prefetch = 0 : i64, scratch_operands = 0 : i64, tpu.core_type = #tpu.core_type<tc>, window_params = [{transform_indices = @transform_0, window_bounds = array<i64: 32, 128>}, {pipeline_mode = #tpu.pipeline_mode<synchronous>, transform_indices = @transform_1, window_bounds = array<i64: 128, 128>}, {pipeline_mode = #tpu.pipeline_mode<synchronous>, transform_indices = @transform_2, window_bounds = array<i64: 1, 128>}, {transform_indices = @transform_3, window_bounds = array<i64: 32, 128>}]} {
    %c0 = arith.constant 0 : index
    %c0_0 = arith.constant 0 : index
    %0 = vector.load %arg1[%c0, %c0_0] : memref<32x128xf32, #tpu.memory_space<vmem>>, vector<32x128xf32>
    %c0_1 = arith.constant 0 : index
    %c0_2 = arith.constant 0 : index
    %1 = vector.load %arg2[%c0_1, %c0_2] : memref<128x128xf32, #tpu.memory_space<vmem>>, vector<128x128xf32>
    %cst = arith.constant dense<0.000000e+00> : vector<32x128xf32>
    %2 = tpu.matmul %0, %1, %cst {dimension_numbers = #tpu.dot_dimension_numbers<[1], [0], [0], [1], [0, 0, 1, 1], [], []>} : vector<32x128xf32>, vector<128x128xf32>, vector<32x128xf32> -> vector<32x128xf32>
    %c0_3 = arith.constant 0 : index
    %c0_4 = arith.constant 0 : index
    %3 = vector.load %arg3[%c0_3, %c0_4] : memref<1x128xf32, #tpu.memory_space<vmem>>, vector<1x128xf32>
    %4 = vector.broadcast %3 : vector<1x128xf32> to vector<32x128xf32>
    %5 = arith.addf %2, %4 : vector<32x128xf32>
    %c0_5 = arith.constant 0 : index
    %c0_6 = arith.constant 0 : index
    %6 = vector.load %arg4[%c0_5, %c0_6] : memref<32x128xf32, #tpu.memory_space<vmem>>, vector<32x128xf32>
    tpu.vector_store %arg4[%c0_5, %c0_6], %5 {strides = array<i32>} : memref<32x128xf32, #tpu.memory_space<vmem>>, vector<32x128xf32>,
    return
  }
  func.func @transform_0(%arg0: i32) -> (i32, i32) {
    %c0_i32 = arith.constant 0 : i32
    %c0_i32_0 = arith.constant 0 : i32
    return %arg0, %c0_i32 : i32, i32
  }
  func.func @transform_1(%arg0: i32) -> (i32, i32) {
    %c0_i32 = arith.constant 0 : i32
    %c0_i32_0 = arith.constant 0 : i32
    %c0_i32_1 = arith.constant 0 : i32
    return %c0_i32, %c0_i32_0 : i32, i32
  }
  func.func @transform_2(%arg0: i32) -> (i32, i32) {
    %c0_i32 = arith.constant 0 : i32
    %c0_i32_0 = arith.constant 0 : i32
    %c0_i32_1 = arith.constant 0 : i32
    return %c0_i32, %c0_i32_0 : i32, i32
  }
  func.func @transform_3(%arg0: i32) -> (i32, i32) {
    %c0_i32 = arith.constant 0 : i32
    %c0_i32_0 = arith.constant 0 : i32
    return %arg0, %c0_i32 : i32, i32
  }
}

module attributes {stable_mosaic.version = 11 : i64} {
  func.func @_mpnn_decoder_kernel(%arg0: i32, %arg1: memref<32x128xf32, #tpu.memory_space<vmem>>, %arg2: memref<32x8x256xbf16, #tpu.memory_space<vmem>>, %arg3: memref<32x8x128xbf16, #tpu.memory_space<vmem>>, %arg4: memref<128x128xbf16, #tpu.memory_space<vmem>>, %arg5: memref<256x128xbf16, #tpu.memory_space<vmem>>, %arg6: memref<128x128xbf16, #tpu.memory_space<vmem>>, %arg7: memref<1x128xf32, #tpu.memory_space<vmem>>, %arg8: memref<128x128xbf16, #tpu.memory_space<vmem>>, %arg9: memref<1x128xf32, #tpu.memory_space<vmem>>, %arg10: memref<128x128xbf16, #tpu.memory_space<vmem>>, %arg11: memref<1x128xf32, #tpu.memory_space<vmem>>, %arg12: memref<1x128xf32, #tpu.memory_space<vmem>>, %arg13: memref<1x128xf32, #tpu.memory_space<vmem>>, %arg14: memref<128x512xbf16, #tpu.memory_space<vmem>>, %arg15: memref<1x512xf32, #tpu.memory_space<vmem>>, %arg16: memref<512x128xbf16, #tpu.memory_space<vmem>>, %arg17: memref<1x128xf32, #tpu.memory_space<vmem>>, %arg18: memref<1x128xf32, #tpu.memory_space<vmem>>, %arg19: memref<1x128xf32, #tpu.memory_space<vmem>>, %arg20: memref<32x128xf32, #tpu.memory_space<vmem>>) attributes {dimension_semantics = [#tpu.dimension_semantics<parallel>], iteration_bounds = array<i64: 1>, scalar_prefetch = 0 : i64, scratch_operands = 0 : i64, tpu.core_type = #tpu.core_type<tc>, window_params = [{transform_indices = @transform_0, window_bounds = array<i64: 32, 128>}, {transform_indices = @transform_1, window_bounds = array<i64: 32, 8, 256>}, {transform_indices = @transform_2, window_bounds = array<i64: 32, 8, 128>}, {pipeline_mode = #tpu.pipeline_mode<synchronous>, transform_indices = @transform_3, window_bounds = array<i64: 128, 128>}, {pipeline_mode = #tpu.pipeline_mode<synchronous>, transform_indices = @transform_4, window_bounds = array<i64: 256, 128>}, {pipeline_mode = #tpu.pipeline_mode<synchronous>, transform_indices = @transform_5, window_bounds = array<i64: 128, 128>}, {pipeline_mode = #tpu.pipeline_mode<synchronous>, transform_indices = @transform_6, window_bounds = array<i64: 1, 128>}, {pipeline_mode = #tpu.pipeline_mode<synchronous>, transform_indices = @transform_7, window_bounds = array<i64: 128, 128>}, {pipeline_mode = #tpu.pipeline_mode<synchronous>, transform_indices = @transform_8, window_bounds = array<i64: 1, 128>}, {pipeline_mode = #tpu.pipeline_mode<synchronous>, transform_indices = @transform_9, window_bounds = array<i64: 128, 128>}, {pipeline_mode = #tpu.pipeline_mode<synchronous>, transform_indices = @transform_10, window_bounds = array<i64: 1, 128>}, {pipeline_mode = #tpu.pipeline_mode<synchronous>, transform_indices = @transform_11, window_bounds = array<i64: 1, 128>}, {pipeline_mode = #tpu.pipeline_mode<synchronous>, transform_indices = @transform_12, window_bounds = array<i64: 1, 128>}, {pipeline_mode = #tpu.pipeline_mode<synchronous>, transform_indices = @transform_13, window_bounds = array<i64: 128, 512>}, {pipeline_mode = #tpu.pipeline_mode<synchronous>, transform_indices = @transform_14, window_bounds = array<i64: 1, 512>}, {pipeline_mode = #tpu.pipeline_mode<synchronous>, transform_indices = @transform_15, window_bounds = array<i64: 512, 128>}, {pipeline_mode = #tpu.pipeline_mode<synchronous>, transform_indices = @transform_16, window_bounds = array<i64: 1, 128>}, {pipeline_mode = #tpu.pipeline_mode<synchronous>, transform_indices = @transform_17, window_bounds = array<i64: 1, 128>}, {pipeline_mode = #tpu.pipeline_mode<synchronous>, transform_indices = @transform_18, window_bounds = array<i64: 1, 128>}, {transform_indices = @transform_19, window_bounds = array<i64: 32, 128>}]} {
    %c0 = arith.constant 0 : index
    %c0_0 = arith.constant 0 : index
    %0 = vector.load %arg1[%c0, %c0_0] : memref<32x128xf32, #tpu.memory_space<vmem>>, vector<32x128xf32>
    %c0_1 = arith.constant 0 : index
    %c0_2 = arith.constant 0 : index
    %c0_3 = arith.constant 0 : index
    %1 = vector.load %arg2[%c0_1, %c0_2, %c0_3] : memref<32x8x256xbf16, #tpu.memory_space<vmem>>, vector<32x8x256xbf16>
    %c0_4 = arith.constant 0 : index
    %c0_5 = arith.constant 0 : index
    %c0_6 = arith.constant 0 : index
    %2 = vector.load %arg3[%c0_4, %c0_5, %c0_6] : memref<32x8x128xbf16, #tpu.memory_space<vmem>>, vector<32x8x128xbf16>
    %3 = arith.truncf %0 : vector<32x128xf32> to vector<32x128xbf16>
    %c0_7 = arith.constant 0 : index
    %c0_8 = arith.constant 0 : index
    %4 = vector.load %arg4[%c0_7, %c0_8] : memref<128x128xbf16, #tpu.memory_space<vmem>>, vector<128x128xbf16>
    %cst = arith.constant dense<0.000000e+00> : vector<32x128xf32>
    %5 = tpu.matmul %3, %4, %cst {dimension_numbers = #tpu.dot_dimension_numbers<[1], [0], [0], [1], [0, 0, 1, 1], [], []>} : vector<32x128xbf16>, vector<128x128xbf16>, vector<32x128xf32> -> vector<32x128xf32>
    %6 = vector.shape_cast %1 : vector<32x8x256xbf16> to vector<256x256xbf16>
    %c0_9 = arith.constant 0 : index
    %c0_10 = arith.constant 0 : index
    %7 = vector.load %arg5[%c0_9, %c0_10] : memref<256x128xbf16, #tpu.memory_space<vmem>>, vector<256x128xbf16>
    %cst_11 = arith.constant dense<0.000000e+00> : vector<256x128xf32>
    %8 = tpu.matmul %6, %7, %cst_11 {dimension_numbers = #tpu.dot_dimension_numbers<[1], [0], [0], [1], [0, 0, 1, 1], [], []>} : vector<256x256xbf16>, vector<256x128xbf16>, vector<256x128xf32> -> vector<256x128xf32>
    %9 = vector.shape_cast %2 : vector<32x8x128xbf16> to vector<256x128xbf16>
    %c0_12 = arith.constant 0 : index
    %c0_13 = arith.constant 0 : index
    %10 = vector.load %arg6[%c0_12, %c0_13] : memref<128x128xbf16, #tpu.memory_space<vmem>>, vector<128x128xbf16>
    %cst_14 = arith.constant dense<0.000000e+00> : vector<256x128xf32>
    %11 = tpu.matmul %9, %10, %cst_14 {dimension_numbers = #tpu.dot_dimension_numbers<[1], [0], [0], [1], [0, 0, 1, 1], [], []>} : vector<256x128xbf16>, vector<128x128xbf16>, vector<256x128xf32> -> vector<256x128xf32>
    %12 = arith.addf %8, %11 : vector<256x128xf32>
    %13 = vector.shape_cast %12 : vector<256x128xf32> to vector<32x8x128xf32>
    %14 = vector.shape_cast %5 : vector<32x128xf32> to vector<32x1x128xf32>
    %15 = vector.broadcast %14 : vector<32x1x128xf32> to vector<32x8x128xf32>
    %16 = arith.addf %13, %15 : vector<32x8x128xf32>
    %c0_15 = arith.constant 0 : index
    %c0_16 = arith.constant 0 : index
    %17 = vector.load %arg7[%c0_15, %c0_16] : memref<1x128xf32, #tpu.memory_space<vmem>>, vector<1x128xf32>
    %18 = vector.shape_cast %17 : vector<1x128xf32> to vector<1x1x128xf32>
    %19 = vector.broadcast %18 : vector<1x1x128xf32> to vector<32x8x128xf32>
    %20 = arith.addf %16, %19 : vector<32x8x128xf32>
    %cst_17 = arith.constant 0.000000e+00 : f32
    %21 = vector.broadcast %cst_17 : f32 to vector<32x8x128xf32>
    %22 = arith.maximumf %20, %21 : vector<32x8x128xf32>
    %23 = vector.shape_cast %22 : vector<32x8x128xf32> to vector<256x128xf32>
    %24 = arith.truncf %23 : vector<256x128xf32> to vector<256x128xbf16>
    %c0_18 = arith.constant 0 : index
    %c0_19 = arith.constant 0 : index
    %25 = vector.load %arg8[%c0_18, %c0_19] : memref<128x128xbf16, #tpu.memory_space<vmem>>, vector<128x128xbf16>
    %cst_20 = arith.constant dense<0.000000e+00> : vector<256x128xf32>
    %26 = tpu.matmul %24, %25, %cst_20 {dimension_numbers = #tpu.dot_dimension_numbers<[1], [0], [0], [1], [0, 0, 1, 1], [], []>} : vector<256x128xbf16>, vector<128x128xbf16>, vector<256x128xf32> -> vector<256x128xf32>
    %c0_21 = arith.constant 0 : index
    %c0_22 = arith.constant 0 : index
    %27 = vector.load %arg9[%c0_21, %c0_22] : memref<1x128xf32, #tpu.memory_space<vmem>>, vector<1x128xf32>
    %28 = vector.broadcast %27 : vector<1x128xf32> to vector<256x128xf32>
    %29 = arith.addf %26, %28 : vector<256x128xf32>
    %cst_23 = arith.constant 0.000000e+00 : f32
    %30 = vector.broadcast %cst_23 : f32 to vector<256x128xf32>
    %31 = arith.maximumf %29, %30 : vector<256x128xf32>
    %32 = vector.shape_cast %31 : vector<256x128xf32> to vector<32x8x128xf32>
    %cst_24 = arith.constant dense<0.000000e+00> : vector<32x128xf32>
    %33 = vector.multi_reduction <add>, %32, %cst_24 [1] : vector<32x8x128xf32> to vector<32x128xf32>
    %34 = arith.truncf %33 : vector<32x128xf32> to vector<32x128xbf16>
    %c0_25 = arith.constant 0 : index
    %c0_26 = arith.constant 0 : index
    %35 = vector.load %arg10[%c0_25, %c0_26] : memref<128x128xbf16, #tpu.memory_space<vmem>>, vector<128x128xbf16>
    %cst_27 = arith.constant dense<0.000000e+00> : vector<32x128xf32>
    %36 = tpu.matmul %34, %35, %cst_27 {dimension_numbers = #tpu.dot_dimension_numbers<[1], [0], [0], [1], [0, 0, 1, 1], [], []>} : vector<32x128xbf16>, vector<128x128xbf16>, vector<32x128xf32> -> vector<32x128xf32>
    %c0_28 = arith.constant 0 : index
    %c0_29 = arith.constant 0 : index
    %37 = vector.load %arg11[%c0_28, %c0_29] : memref<1x128xf32, #tpu.memory_space<vmem>>, vector<1x128xf32>
    %cst_30 = arith.constant 8.000000e+00 : f32
    %38 = vector.broadcast %cst_30 : f32 to vector<1x128xf32>
    %39 = arith.mulf %38, %37 : vector<1x128xf32>
    %40 = vector.broadcast %39 : vector<1x128xf32> to vector<32x128xf32>
    %41 = arith.addf %36, %40 : vector<32x128xf32>
    %cst_31 = arith.constant 0.0333333351 : f32
    %42 = vector.broadcast %cst_31 : f32 to vector<32x128xf32>
    %43 = arith.mulf %41, %42 : vector<32x128xf32>
    %44 = arith.addf %0, %43 : vector<32x128xf32>
    %c0_32 = arith.constant 0 : index
    %c0_33 = arith.constant 0 : index
    %45 = vector.load %arg12[%c0_32, %c0_33] : memref<1x128xf32, #tpu.memory_space<vmem>>, vector<1x128xf32>
    %c0_34 = arith.constant 0 : index
    %c0_35 = arith.constant 0 : index
    %46 = vector.load %arg13[%c0_34, %c0_35] : memref<1x128xf32, #tpu.memory_space<vmem>>, vector<1x128xf32>
    %cst_36 = arith.constant dense<0.000000e+00> : vector<32xf32>
    %47 = vector.multi_reduction <add>, %44, %cst_36 [1] : vector<32x128xf32> to vector<32xf32>
    %48 = vector.shape_cast %47 : vector<32xf32> to vector<32x1xf32>
    %cst_37 = arith.constant 1.280000e+02 : f32
    %49 = vector.broadcast %cst_37 : f32 to vector<32x1xf32>
    %50 = arith.divf %48, %49 : vector<32x1xf32>
    %51 = vector.broadcast %50 : vector<32x1xf32> to vector<32x128xf32>
    %52 = arith.subf %44, %51 : vector<32x128xf32>
    %53 = arith.mulf %52, %52 : vector<32x128xf32>
    %cst_38 = arith.constant dense<0.000000e+00> : vector<32xf32>
    %54 = vector.multi_reduction <add>, %53, %cst_38 [1] : vector<32x128xf32> to vector<32xf32>
    %55 = vector.shape_cast %54 : vector<32xf32> to vector<32x1xf32>
    %cst_39 = arith.constant 1.280000e+02 : f32
    %56 = vector.broadcast %cst_39 : f32 to vector<32x1xf32>
    %57 = arith.divf %55, %56 : vector<32x1xf32>
    %58 = vector.broadcast %50 : vector<32x1xf32> to vector<32x128xf32>
    %59 = arith.subf %44, %58 : vector<32x128xf32>
    %cst_40 = arith.constant 9.99999997E-7 : f32
    %60 = vector.broadcast %cst_40 : f32 to vector<32x1xf32>
    %61 = arith.addf %57, %60 : vector<32x1xf32>
    %62 = math.rsqrt %61 : vector<32x1xf32>
    %63 = vector.broadcast %62 : vector<32x1xf32> to vector<32x128xf32>
    %64 = arith.mulf %59, %63 : vector<32x128xf32>
    %65 = vector.broadcast %45 : vector<1x128xf32> to vector<32x128xf32>
    %66 = arith.mulf %64, %65 : vector<32x128xf32>
    %67 = vector.broadcast %46 : vector<1x128xf32> to vector<32x128xf32>
    %68 = arith.addf %66, %67 : vector<32x128xf32>
    %69 = arith.truncf %68 : vector<32x128xf32> to vector<32x128xbf16>
    %c0_41 = arith.constant 0 : index
    %c0_42 = arith.constant 0 : index
    %70 = vector.load %arg14[%c0_41, %c0_42] : memref<128x512xbf16, #tpu.memory_space<vmem>>, vector<128x512xbf16>
    %cst_43 = arith.constant dense<0.000000e+00> : vector<32x512xf32>
    %71 = tpu.matmul %69, %70, %cst_43 {dimension_numbers = #tpu.dot_dimension_numbers<[1], [0], [0], [1], [0, 0, 1, 1], [], []>} : vector<32x128xbf16>, vector<128x512xbf16>, vector<32x512xf32> -> vector<32x512xf32>
    %c0_44 = arith.constant 0 : index
    %c0_45 = arith.constant 0 : index
    %72 = vector.load %arg15[%c0_44, %c0_45] : memref<1x512xf32, #tpu.memory_space<vmem>>, vector<1x512xf32>
    %73 = vector.broadcast %72 : vector<1x512xf32> to vector<32x512xf32>
    %74 = arith.addf %71, %73 : vector<32x512xf32>
    %cst_46 = arith.constant 0.000000e+00 : f32
    %75 = vector.broadcast %cst_46 : f32 to vector<32x512xf32>
    %76 = arith.maximumf %74, %75 : vector<32x512xf32>
    %77 = arith.truncf %76 : vector<32x512xf32> to vector<32x512xbf16>
    %c0_47 = arith.constant 0 : index
    %c0_48 = arith.constant 0 : index
    %78 = vector.load %arg16[%c0_47, %c0_48] : memref<512x128xbf16, #tpu.memory_space<vmem>>, vector<512x128xbf16>
    %cst_49 = arith.constant dense<0.000000e+00> : vector<32x128xf32>
    %79 = tpu.matmul %77, %78, %cst_49 {dimension_numbers = #tpu.dot_dimension_numbers<[1], [0], [0], [1], [0, 0, 1, 1], [], []>} : vector<32x512xbf16>, vector<512x128xbf16>, vector<32x128xf32> -> vector<32x128xf32>
    %c0_50 = arith.constant 0 : index
    %c0_51 = arith.constant 0 : index
    %80 = vector.load %arg17[%c0_50, %c0_51] : memref<1x128xf32, #tpu.memory_space<vmem>>, vector<1x128xf32>
    %81 = vector.broadcast %80 : vector<1x128xf32> to vector<32x128xf32>
    %82 = arith.addf %79, %81 : vector<32x128xf32>
    %83 = arith.addf %68, %82 : vector<32x128xf32>
    %c0_52 = arith.constant 0 : index
    %c0_53 = arith.constant 0 : index
    %84 = vector.load %arg18[%c0_52, %c0_53] : memref<1x128xf32, #tpu.memory_space<vmem>>, vector<1x128xf32>
    %c0_54 = arith.constant 0 : index
    %c0_55 = arith.constant 0 : index
    %85 = vector.load %arg19[%c0_54, %c0_55] : memref<1x128xf32, #tpu.memory_space<vmem>>, vector<1x128xf32>
    %cst_56 = arith.constant dense<0.000000e+00> : vector<32xf32>
    %86 = vector.multi_reduction <add>, %83, %cst_56 [1] : vector<32x128xf32> to vector<32xf32>
    %87 = vector.shape_cast %86 : vector<32xf32> to vector<32x1xf32>
    %cst_57 = arith.constant 1.280000e+02 : f32
    %88 = vector.broadcast %cst_57 : f32 to vector<32x1xf32>
    %89 = arith.divf %87, %88 : vector<32x1xf32>
    %90 = vector.broadcast %89 : vector<32x1xf32> to vector<32x128xf32>
    %91 = arith.subf %83, %90 : vector<32x128xf32>
    %92 = arith.mulf %91, %91 : vector<32x128xf32>
    %cst_58 = arith.constant dense<0.000000e+00> : vector<32xf32>
    %93 = vector.multi_reduction <add>, %92, %cst_58 [1] : vector<32x128xf32> to vector<32xf32>
    %94 = vector.shape_cast %93 : vector<32xf32> to vector<32x1xf32>
    %cst_59 = arith.constant 1.280000e+02 : f32
    %95 = vector.broadcast %cst_59 : f32 to vector<32x1xf32>
    %96 = arith.divf %94, %95 : vector<32x1xf32>
    %97 = vector.broadcast %89 : vector<32x1xf32> to vector<32x128xf32>
    %98 = arith.subf %83, %97 : vector<32x128xf32>
    %cst_60 = arith.constant 9.99999997E-7 : f32
    %99 = vector.broadcast %cst_60 : f32 to vector<32x1xf32>
    %100 = arith.addf %96, %99 : vector<32x1xf32>
    %101 = math.rsqrt %100 : vector<32x1xf32>
    %102 = vector.broadcast %101 : vector<32x1xf32> to vector<32x128xf32>
    %103 = arith.mulf %98, %102 : vector<32x128xf32>
    %104 = vector.broadcast %84 : vector<1x128xf32> to vector<32x128xf32>
    %105 = arith.mulf %103, %104 : vector<32x128xf32>
    %106 = vector.broadcast %85 : vector<1x128xf32> to vector<32x128xf32>
    %107 = arith.addf %105, %106 : vector<32x128xf32>
    %c0_61 = arith.constant 0 : index
    %c0_62 = arith.constant 0 : index
    %108 = vector.load %arg20[%c0_61, %c0_62] : memref<32x128xf32, #tpu.memory_space<vmem>>, vector<32x128xf32>
    tpu.vector_store %arg20[%c0_61, %c0_62], %107 {strides = array<i32>} : memref<32x128xf32, #tpu.memory_space<vmem>>, vector<32x128xf32>,
    return
  }
  func.func @transform_0(%arg0: i32) -> (i32, i32) {
    %c0_i32 = arith.constant 0 : i32
    %c0_i32_0 = arith.constant 0 : i32
    return %arg0, %c0_i32 : i32, i32
  }
  func.func @transform_1(%arg0: i32) -> (i32, i32, i32) {
    %c0_i32 = arith.constant 0 : i32
    %c0_i32_0 = arith.constant 0 : i32
    %c0_i32_1 = arith.constant 0 : i32
    return %arg0, %c0_i32, %c0_i32_0 : i32, i32, i32
  }
  func.func @transform_2(%arg0: i32) -> (i32, i32, i32) {
    %c0_i32 = arith.constant 0 : i32
    %c0_i32_0 = arith.constant 0 : i32
    %c0_i32_1 = arith.constant 0 : i32
    return %arg0, %c0_i32, %c0_i32_0 : i32, i32, i32
  }
  func.func @transform_3(%arg0: i32) -> (i32, i32) {
    %c0_i32 = arith.constant 0 : i32
    %c0_i32_0 = arith.constant 0 : i32
    %c0_i32_1 = arith.constant 0 : i32
    return %c0_i32, %c0_i32_0 : i32, i32
  }
  func.func @transform_4(%arg0: i32) -> (i32, i32) {
    %c0_i32 = arith.constant 0 : i32
    %c0_i32_0 = arith.constant 0 : i32
    %c0_i32_1 = arith.constant 0 : i32
    return %c0_i32, %c0_i32_0 : i32, i32
  }
  func.func @transform_5(%arg0: i32) -> (i32, i32) {
    %c0_i32 = arith.constant 0 : i32
    %c0_i32_0 = arith.constant 0 : i32
    %c0_i32_1 = arith.constant 0 : i32
    return %c0_i32, %c0_i32_0 : i32, i32
  }
  func.func @transform_6(%arg0: i32) -> (i32, i32) {
    %c0_i32 = arith.constant 0 : i32
    %c0_i32_0 = arith.constant 0 : i32
    %c0_i32_1 = arith.constant 0 : i32
    return %c0_i32, %c0_i32_0 : i32, i32
  }
  func.func @transform_7(%arg0: i32) -> (i32, i32) {
    %c0_i32 = arith.constant 0 : i32
    %c0_i32_0 = arith.constant 0 : i32
    %c0_i32_1 = arith.constant 0 : i32
    return %c0_i32, %c0_i32_0 : i32, i32
  }
  func.func @transform_8(%arg0: i32) -> (i32, i32) {
    %c0_i32 = arith.constant 0 : i32
    %c0_i32_0 = arith.constant 0 : i32
    %c0_i32_1 = arith.constant 0 : i32
    return %c0_i32, %c0_i32_0 : i32, i32
  }
  func.func @transform_9(%arg0: i32) -> (i32, i32) {
    %c0_i32 = arith.constant 0 : i32
    %c0_i32_0 = arith.constant 0 : i32
    %c0_i32_1 = arith.constant 0 : i32
    return %c0_i32, %c0_i32_0 : i32, i32
  }
  func.func @transform_10(%arg0: i32) -> (i32, i32) {
    %c0_i32 = arith.constant 0 : i32
    %c0_i32_0 = arith.constant 0 : i32
    %c0_i32_1 = arith.constant 0 : i32
    return %c0_i32, %c0_i32_0 : i32, i32
  }
  func.func @transform_11(%arg0: i32) -> (i32, i32) {
    %c0_i32 = arith.constant 0 : i32
    %c0_i32_0 = arith.constant 0 : i32
    %c0_i32_1 = arith.constant 0 : i32
    return %c0_i32, %c0_i32_0 : i32, i32
  }
  func.func @transform_12(%arg0: i32) -> (i32, i32) {
    %c0_i32 = arith.constant 0 : i32
    %c0_i32_0 = arith.constant 0 : i32
    %c0_i32_1 = arith.constant 0 : i32
    return %c0_i32, %c0_i32_0 : i32, i32
  }
  func.func @transform_13(%arg0: i32) -> (i32, i32) {
    %c0_i32 = arith.constant 0 : i32
    %c0_i32_0 = arith.constant 0 : i32
    %c0_i32_1 = arith.constant 0 : i32
    return %c0_i32, %c0_i32_0 : i32, i32
  }
  func.func @transform_14(%arg0: i32) -> (i32, i32) {
    %c0_i32 = arith.constant 0 : i32
    %c0_i32_0 = arith.constant 0 : i32
    %c0_i32_1 = arith.constant 0 : i32
    return %c0_i32, %c0_i32_0 : i32, i32
  }
  func.func @transform_15(%arg0: i32) -> (i32, i32) {
    %c0_i32 = arith.constant 0 : i32
    %c0_i32_0 = arith.constant 0 : i32
    %c0_i32_1 = arith.constant 0 : i32
    return %c0_i32, %c0_i32_0 : i32, i32
  }
  func.func @transform_16(%arg0: i32) -> (i32, i32) {
    %c0_i32 = arith.constant 0 : i32
    %c0_i32_0 = arith.constant 0 : i32
    %c0_i32_1 = arith.constant 0 : i32
    return %c0_i32, %c0_i32_0 : i32, i32
  }
  func.func @transform_17(%arg0: i32) -> (i32, i32) {
    %c0_i32 = arith.constant 0 : i32
    %c0_i32_0 = arith.constant 0 : i32
    %c0_i32_1 = arith.constant 0 : i32
    return %c0_i32, %c0_i32_0 : i32, i32
  }
  func.func @transform_18(%arg0: i32) -> (i32, i32) {
    %c0_i32 = arith.constant 0 : i32
    %c0_i32_0 = arith.constant 0 : i32
    %c0_i32_1 = arith.constant 0 : i32
    return %c0_i32, %c0_i32_0 : i32, i32
  }
  func.func @transform_19(%arg0: i32) -> (i32, i32) {
    %c0_i32 = arith.constant 0 : i32
    %c0_i32_0 = arith.constant 0 : i32
    return %arg0, %c0_i32 : i32, i32
  }
}

</mosaic_0001>

<llo_original>
// kernel: struct2seq_decoder.6
$region0: #{struct2seq_decoder.6}
  #allocation0 [shape = 'u32[]', space=smem, size = 0x4, offset = 0x4, fixed_abs, tag = 'smem constant byte address 0x4 - core index']
  #allocation1 [shape = 'u32[144,128]{1,0:T(1,128)}', space=vmem, size = 0x12000, scoped, tag = 'internal scratch']
  %s0 = inlined_call_operand.vmem [shape: f32[32,10], index: 0, kind: input, shape index: {}]
  %s1 = inlined_call_operand.vmem [shape: f32[10,128], index: 1, kind: input, shape index: {}]
  %s2 = inlined_call_operand.vmem [shape: f32[1,128], index: 2, kind: input, shape index: {}]
  %s3 = inlined_call_operand.vmem [shape: f32[32,128], index: 3, kind: output, shape index: {}]
  %s4 = sld [smem:[#allocation0]]
  $region22: #{struct2seq_decoder.6} parent=0
    _
  %s6 = ssub.s32 1, %s4
  %s7 = scalar_select 0, %s6, %s4
  // Predicated region
  $region2: #{struct2seq_decoder.6} parent=0 // pred_check
    _
  $region3: #{struct2seq_decoder.6} parent=0 // pred_check_branch
    %9 = sbr.rel (0) target = $region5
  $region4: #{struct2seq_decoder.6} parent=0 // pred_region
    _
  $region5: #{struct2seq_decoder.6} parent=0 // pred_fallthru
    _
  // Predicated region
  $region6: #{struct2seq_decoder.6} parent=0 // pred_check
    _
  $region7: #{struct2seq_decoder.6} parent=0 // pred_check_branch
    %11 = sbr.rel (0) target = $region9
  $region8: #{struct2seq_decoder.6} parent=0 // pred_region
    _
  $region9: #{struct2seq_decoder.6} parent=0 // pred_fallthru
    _
  // Predicated region
  $region10: #{struct2seq_decoder.6} parent=0 // pred_check
    _
  $region11: #{struct2seq_decoder.6} parent=0 // pred_check_branch
    %13 = sbr.rel (0) target = $region13
  $region12: #{struct2seq_decoder.6} parent=0 // pred_region
    _
  $region13: #{struct2seq_decoder.6} parent=0 // pred_fallthru
    _
  %v14 = vld [vmem:[%s0] sm:$0xff]
  %v15 = vld [vmem:[%s0 + $0x8] sm:$0xff]
  %v16 = vld [vmem:[%s0 + $0x10] sm:$0xff]
  %v17 = vld [vmem:[%s0 + $0x18] sm:$0xff]
  %v18 = vld [vmem:[%s1] sm:$0xff]
  %v19 = vld [vmem:[%s1 + $0x8] sm:$0x3]
  %v20 = vld [vmem:[%s2] sm:$0x1]
  %v22 = vlaneseq
  %v23 = vshrl.u32 %v22, 7
  %v24 = vsub.s32 0, %v23
  %v25 = vrot.slane %v20, %v24
  %vm27 = vcmask 80896
  %v29 = vsel %vm27, %v14, 0
  %v32 = vsel %vm27, %v15, 0
  %v35 = vsel %vm27, %v16, 0
  %v38 = vsel %vm27, %v17, 0
  %vm40 = vcmask 1041408
  %v42 = vsel %vm40, %v19, 0
  %44 = vmatprep.subr.mxu0 0.0
  %45 = vmatpush1.msra.mxu0 %v18
  %46 = vmatprep.subr.mxu0 0.0
  %47 = vmatpush1.msra.mxu0 %v42
  %48 = vmatprep.subr.mxu0 0.0
  %49 = vmatpush1.msra.mxu0 0.0
  %50 = vmatprep.subr.mxu0 0.0
  %51 = vmatpush1.msra.mxu0 0.0
  %52 = vmatprep.subr.mxu0 0.0
  %53 = vmatpush1.msra.mxu0 0.0
  %54 = vmatprep.subr.mxu0 0.0
  %55 = vmatpush1.msra.mxu0 0.0
  %56 = vmatprep.subr.mxu0 0.0
  %57 = vmatpush1.msra.mxu0 0.0
  %58 = vmatprep.subr.mxu0 0.0
  %59 = vmatpush1.msra.mxu0 0.0
  %60 = vmatprep.subr.mxu0 0.0
  %61 = vmatpush1.msra.mxu0 0.0
  %62 = vmatprep.subr.mxu0 0.0
  %63 = vmatpush1.msra.mxu0 0.0
  %64 = vmatprep.subr.mxu0 0.0
  %65 = vmatpush1.msra.mxu0 0.0
  %66 = vmatprep.subr.mxu0 0.0
  %67 = vmatpush1.msra.mxu0 0.0
  %68 = vmatprep.subr.mxu0 0.0
  %69 = vmatpush1.msra.mxu0 0.0
  %70 = vmatprep.subr.mxu0 0.0
  %71 = vmatpush1.msra.mxu0 0.0
  %72 = vmatprep.subr.mxu0 0.0
  %73 = vmatpush1.msra.mxu0 0.0
  %74 = vmatprep.subr.mxu0 0.0
  %75 = vmatpush1.msra.mxu0 0.0
  %76 = vmatprep.subr.mxu0 0.0
  %77 = vmatpush1.msra.mxu0 0.0
  %78 = vmatprep.subr.mxu0 0.0
  %79 = vmatpush1.msra.mxu0 0.0
  %80 = vmatprep.subr.mxu0 0.0
  %81 = vmatpush1.msra.mxu0 0.0
  %82 = vmatprep.subr.mxu0 0.0
  %83 = vmatpush1.msra.mxu0 0.0
  %84 = vmatprep.subr.mxu0 0.0
  %85 = vmatpush1.msra.mxu0 0.0
  %86 = vmatprep.subr.mxu0 0.0
  %87 = vmatpush1.msra.mxu0 0.0
  %88 = vmatprep.subr.mxu0 0.0
  %89 = vmatpush1.msra.mxu0 0.0
  %90 = vmatprep.subr.mxu0 0.0
  %91 = vmatpush1.msra.mxu0 0.0
  %92 = vmatprep.subr.mxu0 0.0
  %93 = vmatpush1.msra.mxu0 0.0
  %94 = vmatprep.subr.mxu0 0.0
  %95 = vmatpush1.msra.mxu0 0.0
  %96 = vmatprep.subr.mxu0 0.0
  %97 = vmatpush1.msra.mxu0 0.0
  %98 = vmatprep.subr.mxu0 0.0
  %99 = vmatpush1.msra.mxu0 0.0
  %100 = vmatprep.subr.mxu0 0.0
  %101 = vmatpush1.msra.mxu0 0.0
  %102 = vmatprep.subr.mxu0 0.0
  %103 = vmatpush1.msra.mxu0 0.0
  %104 = vmatprep.subr.mxu0 0.0
  %105 = vmatpush1.msra.mxu0 0.0
  %106 = vmatprep.subr.mxu0 0.0
  %107 = vmatpush1.msra.mxu0 0.0
  %108 = vmatprep.mubr.f32.mxu0 0.0
  %109 = vmatmul.mubr.f32.gmra.mrb[0].mxu0 %v29
  %v110 = vpop.f32.mrb[0].mxu0
  %v111 = vadd.f32 %v25, %v110
  %v112 = vpop.f32.mrb[0].mxu0
  %113 = vmatprep.mubr.f32.mxu0 0.0
  %114 = vmatmul.mubr.f32.gmra.mrb[0].mxu0 %v32
  %v115 = vpop.f32.mrb[0].mxu0
  %v116 = vadd.f32 %v25, %v115
  %v117 = vpop.f32.mrb[0].mxu0
  %118 = vmatprep.mubr.f32.mxu0 0.0
  %119 = vmatmul.mubr.f32.gmra.mrb[0].mxu0 %v35
  %v120 = vpop.f32.mrb[0].mxu0
  %v121 = vadd.f32 %v25, %v120
  %v122 = vpop.f32.mrb[0].mxu0
  %123 = vmatprep.mubr.f32.mxu0 0.0
  %124 = vmatmul.mubr.f32.gmra.mrb[0].mxu0 %v38
  %v125 = vpop.f32.mrb[0].mxu0
  %v126 = vadd.f32 %v25, %v125
  %v127 = vpop.f32.mrb[0].mxu0
  %128 = vdwg.mxu0
  %129 = vst [vmem:[%s3] sm:$0xff] %v111
  %130 = vst [vmem:[%s3 + $0x8] sm:$0xff] %v116
  %131 = vst [vmem:[%s3 + $0x10] sm:$0xff] %v121
  %132 = vst [vmem:[%s3 + $0x18] sm:$0xff] %v126
  // Predicated region
  $region14: #{struct2seq_decoder.6} parent=0 // pred_check
    _
  $region15: #{struct2seq_decoder.6} parent=0 // pred_check_branch
    %134 = sbr.rel (0) target = $region17
  $region16: #{struct2seq_decoder.6} parent=0 // pred_region
    _
  $region17: #{struct2seq_decoder.6} parent=0 // pred_fallthru
    _
  // Predicated region
  $region18: #{struct2seq_decoder.6} parent=0 // pred_check
    _
  $region19: #{struct2seq_decoder.6} parent=0 // pred_check_branch
    %136 = sbr.rel (0) target = $region21
  $region20: #{struct2seq_decoder.6} parent=0 // pred_region
    _
  $region21: #{struct2seq_decoder.6} parent=0 // pred_fallthru
    _

// kernel: struct2seq_decoder.7
$region0: #{struct2seq_decoder.7}
  #allocation0 [shape = 'u32[]', space=smem, size = 0x4, offset = 0x4, fixed_abs, tag = 'smem constant byte address 0x4 - core index']
  #allocation1 [shape = 'u32[144,128]{1,0:T(1,128)}', space=vmem, size = 0x12000, scoped, tag = 'internal scratch']
  %s0 = inlined_call_operand.vmem [shape: f32[32,8,6], index: 0, kind: input, shape index: {}]
  %s1 = inlined_call_operand.vmem [shape: bf16[32,8,128], index: 1, kind: input, shape index: {}]
  %s2 = inlined_call_operand.vmem [shape: f32[32,8], index: 2, kind: input, shape index: {}]
  %s3 = inlined_call_operand.vmem [shape: f32[32,8], index: 3, kind: input, shape index: {}]
  %s4 = inlined_call_operand.vmem [shape: f32[6,128], index: 4, kind: input, shape index: {}]
  %s5 = inlined_call_operand.vmem [shape: f32[1,128], index: 5, kind: input, shape index: {}]
  %s6 = inlined_call_operand.vmem [shape: bf16[32,8,256], index: 6, kind: output, shape index: {}]
  %s7 = sld [smem:[#allocation0]]
  $region34: #{struct2seq_decoder.7} parent=0
    _
  %s9 = ssub.s32 1, %s7
  %s10 = scalar_select 0, %s9, %s7
  // Predicated region
  $region2: #{struct2seq_decoder.7} parent=0 // pred_check
    _
  $region3: #{struct2seq_decoder.7} parent=0 // pred_check_branch
    %12 = sbr.rel (0) target = $region5
  $region4: #{struct2seq_decoder.7} parent=0 // pred_region
    _
  $region5: #{struct2seq_decoder.7} parent=0 // pred_fallthru
    _
  // Predicated region
  $region6: #{struct2seq_decoder.7} parent=0 // pred_check
    _
  $region7: #{struct2seq_decoder.7} parent=0 // pred_check_branch
    %14 = sbr.rel (0) target = $region9
  $region8: #{struct2seq_decoder.7} parent=0 // pred_region
    _
  $region9: #{struct2seq_decoder.7} parent=0 // pred_fallthru
    _
  // Predicated region
  $region10: #{struct2seq_decoder.7} parent=0 // pred_check
    _
  $region11: #{struct2seq_decoder.7} parent=0 // pred_check_branch
    %16 = sbr.rel (0) target = $region13
  $region12: #{struct2seq_decoder.7} parent=0 // pred_region
    _
  $region13: #{struct2seq_decoder.7} parent=0 // pred_fallthru
    _
  // Predicated region
  $region14: #{struct2seq_decoder.7} parent=0 // pred_check
    _
  $region15: #{struct2seq_decoder.7} parent=0 // pred_check_branch
    %18 = sbr.rel (0) target = $region17
  $region16: #{struct2seq_decoder.7} parent=0 // pred_region
    _
  $region17: #{struct2seq_decoder.7} parent=0 // pred_fallthru
    _
  // Predicated region
  $region18: #{struct2seq_decoder.7} parent=0 // pred_check
    _
  $region19: #{struct2seq_decoder.7} parent=0 // pred_check_branch
    %20 = sbr.rel (0) target = $region21
  $region20: #{struct2seq_decoder.7} parent=0 // pred_region
    _
  $region21: #{struct2seq_decoder.7} parent=0 // pred_fallthru
    _
  // Predicated region
  $region22: #{struct2seq_decoder.7} parent=0 // pred_check
    _
  $region23: #{struct2seq_decoder.7} parent=0 // pred_check_branch
    %22 = sbr.rel (0) target = $region25
  $region24: #{struct2seq_decoder.7} parent=0 // pred_region
    _
  $region25: #{struct2seq_decoder.7} parent=0 // pred_fallthru
    _
  %v23 = vld [vmem:[%s0] sm:$0xff]
  %v24 = vld [vmem:[%s0 + $0x8] sm:$0xff]
  %v25 = vld [vmem:[%s0 + $0x10] sm:$0xff]
  %v26 = vld [vmem:[%s0 + $0x18] sm:$0xff]
  %v27 = vld [vmem:[%s0 + $0x20] sm:$0xff]
  %v28 = vld [vmem:[%s0 + $0x28] sm:$0xff]
  %v29 = vld [vmem:[%s0 + $0x30] sm:$0xff]
  %v30 = vld [vmem:[%s0 + $0x38] sm:$0xff]
  %v31 = vld [vmem:[%s0 + $0x40] sm:$0xff]
  %v32 = vld [vmem:[%s0 + $0x48] sm:$0xff]
  %v33 = vld [vmem:[%s0 + $0x50] sm:$0xff]
  %v34 = vld [vmem:[%s0 + $0x58] sm:$0xff]
  %v35 = vld [vmem:[%s0 + $0x60] sm:$0xff]
  %v36 = vld [vmem:[%s0 + $0x68] sm:$0xff]
  %v37 = vld [vmem:[%s0 + $0x70] sm:$0xff]
  %v38 = vld [vmem:[%s0 + $0x78] sm:$0xff]
  %v39 = vld [vmem:[%s0 + $0x80] sm:$0xff]
  %v40 = vld [vmem:[%s0 + $0x88] sm:$0xff]
  %v41 = vld [vmem:[%s0 + $0x90] sm:$0xff]
  %v42 = vld [vmem:[%s0 + $0x98] sm:$0xff]
  %v43 = vld [vmem:[%s0 + $0xa0] sm:$0xff]
  %v44 = vld [vmem:[%s0 + $0xa8] sm:$0xff]
  %v45 = vld [vmem:[%s0 + $0xb0] sm:$0xff]
  %v46 = vld [vmem:[%s0 + $0xb8] sm:$0xff]
  %v47 = vld [vmem:[%s0 + $0xc0] sm:$0xff]
  %v48 = vld [vmem:[%s0 + $0xc8] sm:$0xff]
  %v49 = vld [vmem:[%s0 + $0xd0] sm:$0xff]
  %v50 = vld [vmem:[%s0 + $0xd8] sm:$0xff]
  %v51 = vld [vmem:[%s0 + $0xe0] sm:$0xff]
  %v52 = vld [vmem:[%s0 + $0xe8] sm:$0xff]
  %v53 = vld [vmem:[%s0 + $0xf0] sm:$0xff]
  %v54 = vld [vmem:[%s0 + $0xf8] sm:$0xff]
  %v55 = vld [vmem:[%s4] sm:$0x3f]
  %v56 = vld [vmem:[%s5] sm:$0x1]
  %v58 = vlaneseq
  %v59 = vshrl.u32 %v58, 7
  %v60 = vsub.s32 0, %v59
  %v61 = vrot.slane %v56, %v60
  %vm63 = vcmask 48128
  %v65 = vsel %vm63, %v23, 0
  %v68 = vsel %vm63, %v24, 0
  %v71 = vsel %vm63, %v25, 0
  %v74 = vsel %vm63, %v26, 0
  %v77 = vsel %vm63, %v27, 0
  %v80 = vsel %vm63, %v28, 0
  %v83 = vsel %vm63, %v29, 0
  %v86 = vsel %vm63, %v30, 0
  %v89 = vsel %vm63, %v31, 0
  %v92 = vsel %vm63, %v32, 0
  %v95 = vsel %vm63, %v33, 0
  %v98 = vsel %vm63, %v34, 0
  %v101 = vsel %vm63, %v35, 0
  %v104 = vsel %vm63, %v36, 0
  %v107 = vsel %vm63, %v37, 0
  %v110 = vsel %vm63, %v38, 0
  %v113 = vsel %vm63, %v39, 0
  %v116 = vsel %vm63, %v40, 0
  %v119 = vsel %vm63, %v41, 0
  %v122 = vsel %vm63, %v42, 0
  %v125 = vsel %vm63, %v43, 0
  %v128 = vsel %vm63, %v44, 0
  %v131 = vsel %vm63, %v45, 0
  %v134 = vsel %vm63, %v46, 0
  %v137 = vsel %vm63, %v47, 0
  %v140 = vsel %vm63, %v48, 0
  %v143 = vsel %vm63, %v49, 0
  %v146 = vsel %vm63, %v50, 0
  %v149 = vsel %vm63, %v51, 0
  %v152 = vsel %vm63, %v52, 0
  %v155 = vsel %vm63, %v53, 0
  %v158 = vsel %vm63, %v54, 0
  %vm160 = vcmask 1045504
  %v162 = vsel %vm160, %v55, 0
  %164 = vmatprep.subr.mxu0 0.0
  %165 = vmatpush1.msra.mxu0 %v162
  %166 = vmatprep.subr.mxu0 0.0
  %167 = vmatpush1.msra.mxu0 0.0
  %168 = vmatprep.subr.mxu0 0.0
  %169 = vmatpush1.msra.mxu0 0.0
  %170 = vmatprep.subr.mxu0 0.0
  %171 = vmatpush1.msra.mxu0 0.0
  %172 = vmatprep.subr.mxu0 0.0
  %173 = vmatpush1.msra.mxu0 0.0
  %174 = vmatprep.subr.mxu0 0.0
  %175 = vmatpush1.msra.mxu0 0.0
  %176 = vmatprep.subr.mxu0 0.0
  %177 = vmatpush1.msra.mxu0 0.0
  %178 = vmatprep.subr.mxu0 0.0
  %179 = vmatpush1.msra.mxu0 0.0
  %180 = vmatprep.subr.mxu0 0.0
  %181 = vmatpush1.msra.mxu0 0.0
  %182 = vmatprep.subr.mxu0 0.0
  %183 = vmatpush1.msra.mxu0 0.0
  %184 = vmatprep.subr.mxu0 0.0
  %185 = vmatpush1.msra.mxu0 0.0
  %186 = vmatprep.subr.mxu0 0.0
  %187 = vmatpush1.msra.mxu0 0.0
  %188 = vmatprep.subr.mxu0 0.0
  %189 = vmatpush1.msra.mxu0 0.0
  %190 = vmatprep.subr.mxu0 0.0
  %191 = vmatpush1.msra.mxu0 0.0
  %192 = vmatprep.subr.mxu0 0.0
  %193 = vmatpush1.msra.mxu0 0.0
  %194 = vmatprep.subr.mxu0 0.0
  %195 = vmatpush1.msra.mxu0 0.0
  %196 = vmatprep.subr.mxu0 0.0
  %197 = vmatpush1.msra.mxu0 0.0
  %198 = vmatprep.subr.mxu0 0.0
  %199 = vmatpush1.msra.mxu0 0.0
  %200 = vmatprep.subr.mxu0 0.0
  %201 = vmatpush1.msra.mxu0 0.0
  %202 = vmatprep.subr.mxu0 0.0
  %203 = vmatpush1.msra.mxu0 0.0
  %204 = vmatprep.subr.mxu0 0.0
  %205 = vmatpush1.msra.mxu0 0.0
  %206 = vmatprep.subr.mxu0 0.0
  %207 = vmatpush1.msra.mxu0 0.0
  %208 = vmatprep.subr.mxu0 0.0
  %209 = vmatpush1.msra.mxu0 0.0
  %210 = vmatprep.subr.mxu0 0.0
  %211 = vmatpush1.msra.mxu0 0.0
  %212 = vmatprep.subr.mxu0 0.0
  %213 = vmatpush1.msra.mxu0 0.0
  %214 = vmatprep.subr.mxu0 0.0
  %215 = vmatpush1.msra.mxu0 0.0
  %216 = vmatprep.subr.mxu0 0.0
  %217 = vmatpush1.msra.mxu0 0.0
  %218 = vmatprep.subr.mxu0 0.0
  %219 = vmatpush1.msra.mxu0 0.0
  %220 = vmatprep.subr.mxu0 0.0
  %221 = vmatpush1.msra.mxu0 0.0
  %222 = vmatprep.subr.mxu0 0.0
  %223 = vmatpush1.msra.mxu0 0.0
  %224 = vmatprep.subr.mxu0 0.0
  %225 = vmatpush1.msra.mxu0 0.0
  %226 = vmatprep.subr.mxu0 0.0
  %227 = vmatpush1.msra.mxu0 0.0
  %228 = vmatprep.mubr.f32.mxu0 0.0
  %229 = vmatmul.mubr.f32.gmra.mrb[0].mxu0 %v65
  %v230 = vpop.f32.mrb[0].mxu0
  %v231 = vadd.f32 %v61, %v230
  %v232 = vpop.f32.mrb[0].mxu0
  %233 = vmatprep.mubr.f32.mxu0 0.0
  %234 = vmatmul.mubr.f32.gmra.mrb[0].mxu0 %v68
  %v235 = vpop.f32.mrb[0].mxu0
  %v236 = vadd.f32 %v61, %v235
  %v237 = vpop.f32.mrb[0].mxu0
  %238 = vmatprep.mubr.f32.mxu0 0.0
  %239 = vmatmul.mubr.f32.gmra.mrb[0].mxu0 %v71
  %v240 = vpop.f32.mrb[0].mxu0
  %v241 = vadd.f32 %v61, %v240
  %v242 = vpop.f32.mrb[0].mxu0
  %243 = vmatprep.mubr.f32.mxu0 0.0
  %244 = vmatmul.mubr.f32.gmra.mrb[0].mxu0 %v74
  %v245 = vpop.f32.mrb[0].mxu0
  %v246 = vadd.f32 %v61, %v245
  %v247 = vpop.f32.mrb[0].mxu0
  %248 = vmatprep.mubr.f32.mxu0 0.0
  %249 = vmatmul.mubr.f32.gmra.mrb[0].mxu0 %v77
  %v250 = vpop.f32.mrb[0].mxu0
  %v251 = vadd.f32 %v61, %v250
  %v252 = vpop.f32.mrb[0].mxu0
  %253 = vmatprep.mubr.f32.mxu0 0.0
  %254 = vmatmul.mubr.f32.gmra.mrb[0].mxu0 %v80
  %v255 = vpop.f32.mrb[0].mxu0
  %v256 = vadd.f32 %v61, %v255
  %v257 = vpop.f32.mrb[0].mxu0
  %258 = vmatprep.mubr.f32.mxu0 0.0
  %259 = vmatmul.mubr.f32.gmra.mrb[0].mxu0 %v83
  %v260 = vpop.f32.mrb[0].mxu0
  %v261 = vadd.f32 %v61, %v260
  %v262 = vpop.f32.mrb[0].mxu0
  %263 = vmatprep.mubr.f32.mxu0 0.0
  %264 = vmatmul.mubr.f32.gmra.mrb[0].mxu0 %v86
  %v265 = vpop.f32.mrb[0].mxu0
  %v266 = vadd.f32 %v61, %v265
  %v267 = vpop.f32.mrb[0].mxu0
  %268 = vmatprep.mubr.f32.mxu0 0.0
  %269 = vmatmul.mubr.f32.gmra.mrb[0].mxu0 %v89
  %v270 = vpop.f32.mrb[0].mxu0
  %v271 = vadd.f32 %v61, %v270
  %v272 = vpop.f32.mrb[0].mxu0
  %273 = vmatprep.mubr.f32.mxu0 0.0
  %274 = vmatmul.mubr.f32.gmra.mrb[0].mxu0 %v92
  %v275 = vpop.f32.mrb[0].mxu0
  %v276 = vadd.f32 %v61, %v275
  %v277 = vpop.f32.mrb[0].mxu0
  %278 = vmatprep.mubr.f32.mxu0 0.0
  %279 = vmatmul.mubr.f32.gmra.mrb[0].mxu0 %v95
  %v280 = vpop.f32.mrb[0].mxu0
  %v281 = vadd.f32 %v61, %v280
  %v282 = vpop.f32.mrb[0].mxu0
  %283 = vmatprep.mubr.f32.mxu0 0.0
  %284 = vmatmul.mubr.f32.gmra.mrb[0].mxu0 %v98
  %v285 = vpop.f32.mrb[0].mxu0
  %v286 = vadd.f32 %v61, %v285
  %v287 = vpop.f32.mrb[0].mxu0
  %288 = vmatprep.mubr.f32.mxu0 0.0
  %289 = vmatmul.mubr.f32.gmra.mrb[0].mxu0 %v101
  %v290 = vpop.f32.mrb[0].mxu0
  %v291 = vadd.f32 %v61, %v290
  %v292 = vpop.f32.mrb[0].mxu0
  %293 = vmatprep.mubr.f32.mxu0 0.0
  %294 = vmatmul.mubr.f32.gmra.mrb[0].mxu0 %v104
  %v295 = vpop.f32.mrb[0].mxu0
  %v296 = vadd.f32 %v61, %v295
  %v297 = vpop.f32.mrb[0].mxu0
  %298 = vmatprep.mubr.f32.mxu0 0.0
  %299 = vmatmul.mubr.f32.gmra.mrb[0].mxu0 %v107
  %v300 = vpop.f32.mrb[0].mxu0
  %v301 = vadd.f32 %v61, %v300
  %v302 = vpop.f32.mrb[0].mxu0
  %303 = vmatprep.mubr.f32.mxu0 0.0
  %304 = vmatmul.mubr.f32.gmra.mrb[0].mxu0 %v110
  %v305 = vpop.f32.mrb[0].mxu0
  %v306 = vadd.f32 %v61, %v305
  %v307 = vpop.f32.mrb[0].mxu0
  %308 = vmatprep.mubr.f32.mxu0 0.0
  %309 = vmatmul.mubr.f32.gmra.mrb[0].mxu0 %v113
  %v310 = vpop.f32.mrb[0].mxu0
  %v311 = vadd.f32 %v61, %v310
  %v312 = vpop.f32.mrb[0].mxu0
  %313 = vmatprep.mubr.f32.mxu0 0.0
  %314 = vmatmul.mubr.f32.gmra.mrb[0].mxu0 %v116
  %v315 = vpop.f32.mrb[0].mxu0
  %v316 = vadd.f32 %v61, %v315
  %v317 = vpop.f32.mrb[0].mxu0
  %318 = vmatprep.mubr.f32.mxu0 0.0
  %319 = vmatmul.mubr.f32.gmra.mrb[0].mxu0 %v119
  %v320 = vpop.f32.mrb[0].mxu0
  %v321 = vadd.f32 %v61, %v320
  %v322 = vpop.f32.mrb[0].mxu0
  %323 = vmatprep.mubr.f32.mxu0 0.0
  %324 = vmatmul.mubr.f32.gmra.mrb[0].mxu0 %v122
  %v325 = vpop.f32.mrb[0].mxu0
  %v326 = vadd.f32 %v61, %v325
  %v327 = vpop.f32.mrb[0].mxu0
  %328 = vmatprep.mubr.f32.mxu0 0.0
  %329 = vmatmul.mubr.f32.gmra.mrb[0].mxu0 %v125
  %v330 = vpop.f32.mrb[0].mxu0
  %v331 = vadd.f32 %v61, %v330
  %v332 = vpop.f32.mrb[0].mxu0
  %333 = vmatprep.mubr.f32.mxu0 0.0
  %334 = vmatmul.mubr.f32.gmra.mrb[0].mxu0 %v128
  %v335 = vpop.f32.mrb[0].mxu0
  %v336 = vadd.f32 %v61, %v335
  %v337 = vpop.f32.mrb[0].mxu0
  %338 = vmatprep.mubr.f32.mxu0 0.0
  %339 = vmatmul.mubr.f32.gmra.mrb[0].mxu0 %v131
  %v340 = vpop.f32.mrb[0].mxu0
  %v341 = vadd.f32 %v61, %v340
  %v342 = vpop.f32.mrb[0].mxu0
  %343 = vmatprep.mubr.f32.mxu0 0.0
  %344 = vmatmul.mubr.f32.gmra.mrb[0].mxu0 %v134
  %v345 = vpop.f32.mrb[0].mxu0
  %v346 = vadd.f32 %v61, %v345
  %v347 = vpop.f32.mrb[0].mxu0
  %348 = vmatprep.mubr.f32.mxu0 0.0
  %349 = vmatmul.mubr.f32.gmra.mrb[0].mxu0 %v137
  %v350 = vpop.f32.mrb[0].mxu0
  %v351 = vadd.f32 %v61, %v350
  %v352 = vpop.f32.mrb[0].mxu0
  %353 = vmatprep.mubr.f32.mxu0 0.0
  %354 = vmatmul.mubr.f32.gmra.mrb[0].mxu0 %v140
  %v355 = vpop.f32.mrb[0].mxu0
  %v356 = vadd.f32 %v61, %v355
  %v357 = vpop.f32.mrb[0].mxu0
  %358 = vmatprep.mubr.f32.mxu0 0.0
  %359 = vmatmul.mubr.f32.gmra.mrb[0].mxu0 %v143
  %v360 = vpop.f32.mrb[0].mxu0
  %v361 = vadd.f32 %v61, %v360
  %v362 = vpop.f32.mrb[0].mxu0
  %363 = vmatprep.mubr.f32.mxu0 0.0
  %364 = vmatmul.mubr.f32.gmra.mrb[0].mxu0 %v146
  %v365 = vpop.f32.mrb[0].mxu0
  %v366 = vadd.f32 %v61, %v365
  %v367 = vpop.f32.mrb[0].mxu0
  %368 = vmatprep.mubr.f32.mxu0 0.0
  %369 = vmatmul.mubr.f32.gmra.mrb[0].mxu0 %v149
  %v370 = vpop.f32.mrb[0].mxu0
  %v371 = vadd.f32 %v61, %v370
  %v372 = vpop.f32.mrb[0].mxu0
  %373 = vmatprep.mubr.f32.mxu0 0.0
  %374 = vmatmul.mubr.f32.gmra.mrb[0].mxu0 %v152
  %v375 = vpop.f32.mrb[0].mxu0
  %v376 = vadd.f32 %v61, %v375
  %v377 = vpop.f32.mrb[0].mxu0
  %378 = vmatprep.mubr.f32.mxu0 0.0
  %379 = vmatmul.mubr.f32.gmra.mrb[0].mxu0 %v155
  %v380 = vpop.f32.mrb[0].mxu0
  %v381 = vadd.f32 %v61, %v380
  %v382 = vpop.f32.mrb[0].mxu0
  %383 = vmatprep.mubr.f32.mxu0 0.0
  %384 = vmatmul.mubr.f32.gmra.mrb[0].mxu0 %v158
  %v385 = vpop.f32.mrb[0].mxu0
  %v386 = vadd.f32 %v61, %v385
  %v387 = vpop.f32.mrb[0].mxu0
  %388 = vdwg.mxu0
  %v389 = vld [vmem:[%s3] sm:$0xff]
  %v390 = vld [vmem:[%s3 + $0x8] sm:$0xff]
  %v391 = vld [vmem:[%s3 + $0x10] sm:$0xff]
  %v392 = vld [vmem:[%s3 + $0x18] sm:$0xff]
  %v393 = vlaneseq
  %v394 = vshrl.u32 %v393, 7
  %v395 = vsub.s32 0, %v394
  %v396 = vrot.slane %v389, %v395
  %398 = vbcast.lane.b32.xlu0 %v396, 256
  %v399 = vpop.permute.xlu0 %398
  %v400 = vlaneseq
  %v401 = vshrl.u32 %v400, 7
  %v402 = vsub.s32 1, %v401
  %v403 = vrot.slane %v389, %v402
  %405 = vbcast.lane.b32.xlu0 %v403, 256
  %v406 = vpop.permute.xlu0 %405
  %v407 = vlaneseq
  %v408 = vshrl.u32 %v407, 7
  %v409 = vsub.s32 2, %v408
  %v410 = vrot.slane %v389, %v409
  %412 = vbcast.lane.b32.xlu0 %v410, 256
  %v413 = vpop.permute.xlu0 %412
  %v414 = vlaneseq
  %v415 = vshrl.u32 %v414, 7
  %v416 = vsub.s32 3, %v415
  %v417 = vrot.slane %v389, %v416
  %419 = vbcast.lane.b32.xlu0 %v417, 256
  %v420 = vpop.permute.xlu0 %419
  %v421 = vlaneseq
  %v422 = vshrl.u32 %v421, 7
  %v423 = vsub.s32 4, %v422
  %v424 = vrot.slane %v389, %v423
  %426 = vbcast.lane.b32.xlu0 %v424, 256
  %v427 = vpop.permute.xlu0 %426
  %v428 = vlaneseq
  %v429 = vshrl.u32 %v428, 7
  %v430 = vsub.s32 5, %v429
  %v431 = vrot.slane %v389, %v430
  %433 = vbcast.lane.b32.xlu0 %v431, 256
  %v434 = vpop.permute.xlu0 %433
  %v435 = vlaneseq
  %v436 = vshrl.u32 %v435, 7
  %v437 = vsub.s32 6, %v436
  %v438 = vrot.slane %v389, %v437
  %440 = vbcast.lane.b32.xlu0 %v438, 256
  %v441 = vpop.permute.xlu0 %440
  %v442 = vlaneseq
  %v443 = vshrl.u32 %v442, 7
  %v444 = vsub.s32 7, %v443
  %v445 = vrot.slane %v389, %v444
  %447 = vbcast.lane.b32.xlu0 %v445, 256
  %v448 = vpop.permute.xlu0 %447
  %v449 = vlaneseq
  %v450 = vshrl.u32 %v449, 7
  %v451 = vsub.s32 0, %v450
  %v452 = vrot.slane %v390, %v451
  %454 = vbcast.lane.b32.xlu0 %v452, 256
  %v455 = vpop.permute.xlu0 %454
  %v456 = vlaneseq
  %v457 = vshrl.u32 %v456, 7
  %v458 = vsub.s32 1, %v457
  %v459 = vrot.slane %v390, %v458
  %461 = vbcast.lane.b32.xlu0 %v459, 256
  %v462 = vpop.permute.xlu0 %461
  %v463 = vlaneseq
  %v464 = vshrl.u32 %v463, 7
  %v465 = vsub.s32 2, %v464
  %v466 = vrot.slane %v390, %v465
  %468 = vbcast.lane.b32.xlu0 %v466, 256
  %v469 = vpop.permute.xlu0 %468
  %v470 = vlaneseq
  %v471 = vshrl.u32 %v470, 7
  %v472 = vsub.s32 3, %v471
  %v473 = vrot.slane %v390, %v472
  %475 = vbcast.lane.b32.xlu0 %v473, 256
  %v476 = vpop.permute.xlu0 %475
  %v477 = vlaneseq
  %v478 = vshrl.u32 %v477, 7
  %v479 = vsub.s32 4, %v478
  %v480 = vrot.slane %v390, %v479
  %482 = vbcast.lane.b32.xlu0 %v480, 256
  %v483 = vpop.permute.xlu0 %482
  %v484 = vlaneseq
  %v485 = vshrl.u32 %v484, 7
  %v486 = vsub.s32 5, %v485
  %v487 = vrot.slane %v390, %v486
  %489 = vbcast.lane.b32.xlu0 %v487, 256
  %v490 = vpop.permute.xlu0 %489
  %v491 = vlaneseq
  %v492 = vshrl.u32 %v491, 7
  %v493 = vsub.s32 6, %v492
  %v494 = vrot.slane %v390, %v493
  %496 = vbcast.lane.b32.xlu0 %v494, 256
  %v497 = vpop.permute.xlu0 %496
  %v498 = vlaneseq
  %v499 = vshrl.u32 %v498, 7
  %v500 = vsub.s32 7, %v499
  %v501 = vrot.slane %v390, %v500
  %503 = vbcast.lane.b32.xlu0 %v501, 256
  %v504 = vpop.permute.xlu0 %503
  %v505 = vlaneseq
  %v506 = vshrl.u32 %v505, 7
  %v507 = vsub.s32 0, %v506
  %v508 = vrot.slane %v391, %v507
  %510 = vbcast.lane.b32.xlu0 %v508, 256
  %v511 = vpop.permute.xlu0 %510
  %v512 = vlaneseq
  %v513 = vshrl.u32 %v512, 7
  %v514 = vsub.s32 1, %v513
  %v515 = vrot.slane %v391, %v514
  %517 = vbcast.lane.b32.xlu0 %v515, 256
  %v518 = vpop.permute.xlu0 %517
  %v519 = vlaneseq
  %v520 = vshrl.u32 %v519, 7
  %v521 = vsub.s32 2, %v520
  %v522 = vrot.slane %v391, %v521
  %524 = vbcast.lane.b32.xlu0 %v522, 256
  %v525 = vpop.permute.xlu0 %524
  %v526 = vlaneseq
  %v527 = vshrl.u32 %v526, 7
  %v528 = vsub.s32 3, %v527
  %v529 = vrot.slane %v391, %v528
  %531 = vbcast.lane.b32.xlu0 %v529, 256
  %v532 = vpop.permute.xlu0 %531
  %v533 = vlaneseq
  %v534 = vshrl.u32 %v533, 7
  %v535 = vsub.s32 4, %v534
  %v536 = vrot.slane %v391, %v535
  %538 = vbcast.lane.b32.xlu0 %v536, 256
  %v539 = vpop.permute.xlu0 %538
  %v540 = vlaneseq
  %v541 = vshrl.u32 %v540, 7
  %v542 = vsub.s32 5, %v541
  %v543 = vrot.slane %v391, %v542
  %545 = vbcast.lane.b32.xlu0 %v543, 256
  %v546 = vpop.permute.xlu0 %545
  %v547 = vlaneseq
  %v548 = vshrl.u32 %v547, 7
  %v549 = vsub.s32 6, %v548
  %v550 = vrot.slane %v391, %v549
  %552 = vbcast.lane.b32.xlu0 %v550, 256
  %v553 = vpop.permute.xlu0 %552
  %v554 = vlaneseq
  %v555 = vshrl.u32 %v554, 7
  %v556 = vsub.s32 7, %v555
  %v557 = vrot.slane %v391, %v556
  %559 = vbcast.lane.b32.xlu0 %v557, 256
  %v560 = vpop.permute.xlu0 %559
  %v561 = vlaneseq
  %v562 = vshrl.u32 %v561, 7
  %v563 = vsub.s32 0, %v562
  %v564 = vrot.slane %v392, %v563
  %566 = vbcast.lane.b32.xlu0 %v564, 256
  %v567 = vpop.permute.xlu0 %566
  %v568 = vlaneseq
  %v569 = vshrl.u32 %v568, 7
  %v570 = vsub.s32 1, %v569
  %v571 = vrot.slane %v392, %v570
  %573 = vbcast.lane.b32.xlu0 %v571, 256
  %v574 = vpop.permute.xlu0 %573
  %v575 = vlaneseq
  %v576 = vshrl.u32 %v575, 7
  %v577 = vsub.s32 2, %v576
  %v578 = vrot.slane %v392, %v577
  %580 = vbcast.lane.b32.xlu0 %v578, 256
  %v581 = vpop.permute.xlu0 %580
  %v582 = vlaneseq
  %v583 = vshrl.u32 %v582, 7
  %v584 = vsub.s32 3, %v583
  %v585 = vrot.slane %v392, %v584
  %587 = vbcast.lane.b32.xlu0 %v585, 256
  %v588 = vpop.permute.xlu0 %587
  %v589 = vlaneseq
  %v590 = vshrl.u32 %v589, 7
  %v591 = vsub.s32 4, %v590
  %v592 = vrot.slane %v392, %v591
  %594 = vbcast.lane.b32.xlu0 %v592, 256
  %v595 = vpop.permute.xlu0 %594
  %v596 = vlaneseq
  %v597 = vshrl.u32 %v596, 7
  %v598 = vsub.s32 5, %v597
  %v599 = vrot.slane %v392, %v598
  %601 = vbcast.lane.b32.xlu0 %v599, 256
  %v602 = vpop.permute.xlu0 %601
  %v603 = vlaneseq
  %v604 = vshrl.u32 %v603, 7
  %v605 = vsub.s32 6, %v604
  %v606 = vrot.slane %v392, %v605
  %608 = vbcast.lane.b32.xlu0 %v606, 256
  %v609 = vpop.permute.xlu0 %608
  %v610 = vlaneseq
  %v611 = vshrl.u32 %v610, 7
  %v612 = vsub.s32 7, %v611
  %v613 = vrot.slane %v392, %v612
  %615 = vbcast.lane.b32.xlu0 %v613, 256
  %v616 = vpop.permute.xlu0 %615
  %v617 = vld [vmem:[%s2] sm:$0xff]
  %v618 = vld [vmem:[%s2 + $0x8] sm:$0xff]
  %v619 = vld [vmem:[%s2 + $0x10] sm:$0xff]
  %v620 = vld [vmem:[%s2 + $0x18] sm:$0xff]
  %v621 = vlaneseq
  %v622 = vshrl.u32 %v621, 7
  %v623 = vsub.s32 0, %v622
  %v624 = vrot.slane %v617, %v623
  %626 = vbcast.lane.b32.xlu0 %v624, 256
  %v627 = vpop.permute.xlu0 %626
  %v628 = vlaneseq
  %v629 = vshrl.u32 %v628, 7
  %v630 = vsub.s32 1, %v629
  %v631 = vrot.slane %v617, %v630
  %633 = vbcast.lane.b32.xlu0 %v631, 256
  %v634 = vpop.permute.xlu0 %633
  %v635 = vlaneseq
  %v636 = vshrl.u32 %v635, 7
  %v637 = vsub.s32 2, %v636
  %v638 = vrot.slane %v617, %v637
  %640 = vbcast.lane.b32.xlu0 %v638, 256
  %v641 = vpop.permute.xlu0 %640
  %v642 = vlaneseq
  %v643 = vshrl.u32 %v642, 7
  %v644 = vsub.s32 3, %v643
  %v645 = vrot.slane %v617, %v644
  %647 = vbcast.lane.b32.xlu0 %v645, 256
  %v648 = vpop.permute.xlu0 %647
  %v649 = vlaneseq
  %v650 = vshrl.u32 %v649, 7
  %v651 = vsub.s32 4, %v650
  %v652 = vrot.slane %v617, %v651
  %654 = vbcast.lane.b32.xlu0 %v652, 256
  %v655 = vpop.permute.xlu0 %654
  %v656 = vlaneseq
  %v657 = vshrl.u32 %v656, 7
  %v658 = vsub.s32 5, %v657
  %v659 = vrot.slane %v617, %v658
  %661 = vbcast.lane.b32.xlu0 %v659, 256
  %v662 = vpop.permute.xlu0 %661
  %v663 = vlaneseq
  %v664 = vshrl.u32 %v663, 7
  %v665 = vsub.s32 6, %v664
  %v666 = vrot.slane %v617, %v665
  %668 = vbcast.lane.b32.xlu0 %v666, 256
  %v669 = vpop.permute.xlu0 %668
  %v670 = vlaneseq
  %v671 = vshrl.u32 %v670, 7
  %v672 = vsub.s32 7, %v671
  %v673 = vrot.slane %v617, %v672
  %675 = vbcast.lane.b32.xlu0 %v673, 256
  %v676 = vpop.permute.xlu0 %675
  %v677 = vlaneseq
  %v678 = vshrl.u32 %v677, 7
  %v679 = vsub.s32 0, %v678
  %v680 = vrot.slane %v618, %v679
  %682 = vbcast.lane.b32.xlu0 %v680, 256
  %v683 = vpop.permute.xlu0 %682
  %v684 = vlaneseq
  %v685 = vshrl.u32 %v684, 7
  %v686 = vsub.s32 1, %v685
  %v687 = vrot.slane %v618, %v686
  %689 = vbcast.lane.b32.xlu0 %v687, 256
  %v690 = vpop.permute.xlu0 %689
  %v691 = vlaneseq
  %v692 = vshrl.u32 %v691, 7
  %v693 = vsub.s32 2, %v692
  %v694 = vrot.slane %v618, %v693
  %696 = vbcast.lane.b32.xlu0 %v694, 256
  %v697 = vpop.permute.xlu0 %696
  %v698 = vlaneseq
  %v699 = vshrl.u32 %v698, 7
  %v700 = vsub.s32 3, %v699
  %v701 = vrot.slane %v618, %v700
  %703 = vbcast.lane.b32.xlu0 %v701, 256
  %v704 = vpop.permute.xlu0 %703
  %v705 = vlaneseq
  %v706 = vshrl.u32 %v705, 7
  %v707 = vsub.s32 4, %v706
  %v708 = vrot.slane %v618, %v707
  %710 = vbcast.lane.b32.xlu0 %v708, 256
  %v711 = vpop.permute.xlu0 %710
  %v712 = vlaneseq
  %v713 = vshrl.u32 %v712, 7
  %v714 = vsub.s32 5, %v713
  %v715 = vrot.slane %v618, %v714
  %717 = vbcast.lane.b32.xlu0 %v715, 256
  %v718 = vpop.permute.xlu0 %717
  %v719 = vlaneseq
  %v720 = vshrl.u32 %v719, 7
  %v721 = vsub.s32 6, %v720
  %v722 = vrot.slane %v618, %v721
  %724 = vbcast.lane.b32.xlu0 %v722, 256
  %v725 = vpop.permute.xlu0 %724
  %v726 = vlaneseq
  %v727 = vshrl.u32 %v726, 7
  %v728 = vsub.s32 7, %v727
  %v729 = vrot.slane %v618, %v728
  %731 = vbcast.lane.b32.xlu0 %v729, 256
  %v732 = vpop.permute.xlu0 %731
  %v733 = vlaneseq
  %v734 = vshrl.u32 %v733, 7
  %v735 = vsub.s32 0, %v734
  %v736 = vrot.slane %v619, %v735
  %738 = vbcast.lane.b32.xlu0 %v736, 256
  %v739 = vpop.permute.xlu0 %738
  %v740 = vlaneseq
  %v741 = vshrl.u32 %v740, 7
  %v742 = vsub.s32 1, %v741
  %v743 = vrot.slane %v619, %v742
  %745 = vbcast.lane.b32.xlu0 %v743, 256
  %v746 = vpop.permute.xlu0 %745
  %v747 = vlaneseq
  %v748 = vshrl.u32 %v747, 7
  %v749 = vsub.s32 2, %v748
  %v750 = vrot.slane %v619, %v749
  %752 = vbcast.lane.b32.xlu0 %v750, 256
  %v753 = vpop.permute.xlu0 %752
  %v754 = vlaneseq
  %v755 = vshrl.u32 %v754, 7
  %v756 = vsub.s32 3, %v755
  %v757 = vrot.slane %v619, %v756
  %759 = vbcast.lane.b32.xlu0 %v757, 256
  %v760 = vpop.permute.xlu0 %759
  %v761 = vlaneseq
  %v762 = vshrl.u32 %v761, 7
  %v763 = vsub.s32 4, %v762
  %v764 = vrot.slane %v619, %v763
  %766 = vbcast.lane.b32.xlu0 %v764, 256
  %v767 = vpop.permute.xlu0 %766
  %v768 = vlaneseq
  %v769 = vshrl.u32 %v768, 7
  %v770 = vsub.s32 5, %v769
  %v771 = vrot.slane %v619, %v770
  %773 = vbcast.lane.b32.xlu0 %v771, 256
  %v774 = vpop.permute.xlu0 %773
  %v775 = vlaneseq
  %v776 = vshrl.u32 %v775, 7
  %v777 = vsub.s32 6, %v776
  %v778 = vrot.slane %v619, %v777
  %780 = vbcast.lane.b32.xlu0 %v778, 256
  %v781 = vpop.permute.xlu0 %780
  %v782 = vlaneseq
  %v783 = vshrl.u32 %v782, 7
  %v784 = vsub.s32 7, %v783
  %v785 = vrot.slane %v619, %v784
  %787 = vbcast.lane.b32.xlu0 %v785, 256
  %v788 = vpop.permute.xlu0 %787
  %v789 = vlaneseq
  %v790 = vshrl.u32 %v789, 7
  %v791 = vsub.s32 0, %v790
  %v792 = vrot.slane %v620, %v791
  %794 = vbcast.lane.b32.xlu0 %v792, 256
  %v795 = vpop.permute.xlu0 %794
  %v796 = vlaneseq
  %v797 = vshrl.u32 %v796, 7
  %v798 = vsub.s32 1, %v797
  %v799 = vrot.slane %v620, %v798
  %801 = vbcast.lane.b32.xlu0 %v799, 256
  %v802 = vpop.permute.xlu0 %801
  %v803 = vlaneseq
  %v804 = vshrl.u32 %v803, 7
  %v805 = vsub.s32 2, %v804
  %v806 = vrot.slane %v620, %v805
  %808 = vbcast.lane.b32.xlu0 %v806, 256
  %v809 = vpop.permute.xlu0 %808
  %v810 = vlaneseq
  %v811 = vshrl.u32 %v810, 7
  %v812 = vsub.s32 3, %v811
  %v813 = vrot.slane %v620, %v812
  %815 = vbcast.lane.b32.xlu0 %v813, 256
  %v816 = vpop.permute.xlu0 %815
  %v817 = vlaneseq
  %v818 = vshrl.u32 %v817, 7
  %v819 = vsub.s32 4, %v818
  %v820 = vrot.slane %v620, %v819
  %822 = vbcast.lane.b32.xlu0 %v820, 256
  %v823 = vpop.permute.xlu0 %822
  %v824 = vlaneseq
  %v825 = vshrl.u32 %v824, 7
  %v826 = vsub.s32 5, %v825
  %v827 = vrot.slane %v620, %v826
  %829 = vbcast.lane.b32.xlu0 %v827, 256
  %v830 = vpop.permute.xlu0 %829
  %v831 = vlaneseq
  %v832 = vshrl.u32 %v831, 7
  %v833 = vsub.s32 6, %v832
  %v834 = vrot.slane %v620, %v833
  %836 = vbcast.lane.b32.xlu0 %v834, 256
  %v837 = vpop.permute.xlu0 %836
  %v838 = vlaneseq
  %v839 = vshrl.u32 %v838, 7
  %v840 = vsub.s32 7, %v839
  %v841 = vrot.slane %v620, %v840
  %843 = vbcast.lane.b32.xlu0 %v841, 256
  %v844 = vpop.permute.xlu0 %843
  %v845 = vmul.f32 %v627, %v231
  %v846 = vmul.f32 %v634, %v236
  %v847 = vmul.f32 %v641, %v241
  %v848 = vmul.f32 %v648, %v246
  %v849 = vmul.f32 %v655, %v251
  %v850 = vmul.f32 %v662, %v256
  %v851 = vmul.f32 %v669, %v261
  %v852 = vmul.f32 %v676, %v266
  %v853 = vmul.f32 %v683, %v271
  %v854 = vmul.f32 %v690, %v276
  %v855 = vmul.f32 %v697, %v281
  %v856 = vmul.f32 %v704, %v286
  %v857 = vmul.f32 %v711, %v291
  %v858 = vmul.f32 %v718, %v296
  %v859 = vmul.f32 %v725, %v301
  %v860 = vmul.f32 %v732, %v306
  %v861 = vmul.f32 %v739, %v311
  %v862 = vmul.f32 %v746, %v316
  %v863 = vmul.f32 %v753, %v321
  %v864 = vmul.f32 %v760, %v326
  %v865 = vmul.f32 %v767, %v331
  %v866 = vmul.f32 %v774, %v336
  %v867 = vmul.f32 %v781, %v341
  %v868 = vmul.f32 %v788, %v346
  %v869 = vmul.f32 %v795, %v351
  %v870 = vmul.f32 %v802, %v356
  %v871 = vmul.f32 %v809, %v361
  %v872 = vmul.f32 %v816, %v366
  %v873 = vmul.f32 %v823, %v371
  %v874 = vmul.f32 %v830, %v376
  %v875 = vmul.f32 %v837, %v381
  %v876 = vmul.f32 %v844, %v386
  %v877 = vmul.f32 %v399, %v845
  %v878 = vmul.f32 %v406, %v846
  %v879 = vmul.f32 %v413, %v847
  %v880 = vmul.f32 %v420, %v848
  %v881 = vmul.f32 %v427, %v849
  %v882 = vmul.f32 %v434, %v850
  %v883 = vmul.f32 %v441, %v851
  %v884 = vmul.f32 %v448, %v852
  %v885 = vmul.f32 %v455, %v853
  %v886 = vmul.f32 %v462, %v854
  %v887 = vmul.f32 %v469, %v855
  %v888 = vmul.f32 %v476, %v856
  %v889 = vmul.f32 %v483, %v857
  %v890 = vmul.f32 %v490, %v858
  %v891 = vmul.f32 %v497, %v859
  %v892 = vmul.f32 %v504, %v860
  %v893 = vmul.f32 %v511, %v861
  %v894 = vmul.f32 %v518, %v862
  %v895 = vmul.f32 %v525, %v863
  %v896 = vmul.f32 %v532, %v864
  %v897 = vmul.f32 %v539, %v865
  %v898 = vmul.f32 %v546, %v866
  %v899 = vmul.f32 %v553, %v867
  %v900 = vmul.f32 %v560, %v868
  %v901 = vmul.f32 %v567, %v869
  %v902 = vmul.f32 %v574, %v870
  %v903 = vmul.f32 %v581, %v871
  %v904 = vmul.f32 %v588, %v872
  %v905 = vmul.f32 %v595, %v873
  %v906 = vmul.f32 %v602, %v874
  %v907 = vmul.f32 %v609, %v875
  %v908 = vmul.f32 %v616, %v876
  %v909 = vpack.c.bf16 %v877, %v877
  %v910 = vpack.c.bf16 %v878, %v878
  %v911 = vpack.c.bf16 %v879, %v879
  %v912 = vpack.c.bf16 %v880, %v880
  %v913 = vpack.c.bf16 %v881, %v881
  %v914 = vpack.c.bf16 %v882, %v882
  %v915 = vpack.c.bf16 %v883, %v883
  %v916 = vpack.c.bf16 %v884, %v884
  %v917 = vpack.c.bf16 %v885, %v885
  %v918 = vpack.c.bf16 %v886, %v886
  %v919 = vpack.c.bf16 %v887, %v887
  %v920 = vpack.c.bf16 %v888, %v888
  %v921 = vpack.c.bf16 %v889, %v889
  %v922 = vpack.c.bf16 %v890, %v890
  %v923 = vpack.c.bf16 %v891, %v891
  %v924 = vpack.c.bf16 %v892, %v892
  %v925 = vpack.c.bf16 %v893, %v893
  %v926 = vpack.c.bf16 %v894, %v894
  %v927 = vpack.c.bf16 %v895, %v895
  %v928 = vpack.c.bf16 %v896, %v896
  %v929 = vpack.c.bf16 %v897, %v897
  %v930 = vpack.c.bf16 %v898, %v898
  %v931 = vpack.c.bf16 %v899, %v899
  %v932 = vpack.c.bf16 %v900, %v900
  %v933 = vpack.c.bf16 %v901, %v901
  %v934 = vpack.c.bf16 %v902, %v902
  %v935 = vpack.c.bf16 %v903, %v903
  %v936 = vpack.c.bf16 %v904, %v904
  %v937 = vpack.c.bf16 %v905, %v905
  %v938 = vpack.c.bf16 %v906, %v906
  %v939 = vpack.c.bf16 %v907, %v907
  %v940 = vpack.c.bf16 %v908, %v908
  %941 = vst [vmem:[%s6] sm:$0xf] %v909
  %942 = vst [vmem:[%s6 + $0x8] sm:$0xf] %v910
  %943 = vst [vmem:[%s6 + $0x10] sm:$0xf] %v911
  %944 = vst [vmem:[%s6 + $0x18] sm:$0xf] %v912
  %945 = vst [vmem:[%s6 + $0x20] sm:$0xf] %v913
  %946 = vst [vmem:[%s6 + $0x28] sm:$0xf] %v914
  %947 = vst [vmem:[%s6 + $0x30] sm:$0xf] %v915
  %948 = vst [vmem:[%s6 + $0x38] sm:$0xf] %v916
  %949 = vst [vmem:[%s6 + $0x40] sm:$0xf] %v917
  %950 = vst [vmem:[%s6 + $0x48] sm:$0xf] %v918
  %951 = vst [vmem:[%s6 + $0x50] sm:$0xf] %v919
  %952 = vst [vmem:[%s6 + $0x58] sm:$0xf] %v920
  %953 = vst [vmem:[%s6 + $0x60] sm:$0xf] %v921
  %954 = vst [vmem:[%s6 + $0x68] sm:$0xf] %v922
  %955 = vst [vmem:[%s6 + $0x70] sm:$0xf] %v923
  %956 = vst [vmem:[%s6 + $0x78] sm:$0xf] %v924
  %957 = vst [vmem:[%s6 + $0x80] sm:$0xf] %v925
  %958 = vst [vmem:[%s6 + $0x88] sm:$0xf] %v926
  %959 = vst [vmem:[%s6 + $0x90] sm:$0xf] %v927
  %960 = vst [vmem:[%s6 + $0x98] sm:$0xf] %v928
  %961 = vst [vmem:[%s6 + $0xa0] sm:$0xf] %v929
  %962 = vst [vmem:[%s6 + $0xa8] sm:$0xf] %v930
  %963 = vst [vmem:[%s6 + $0xb0] sm:$0xf] %v931
  %964 = vst [vmem:[%s6 + $0xb8] sm:$0xf] %v932
  %965 = vst [vmem:[%s6 + $0xc0] sm:$0xf] %v933
  %966 = vst [vmem:[%s6 + $0xc8] sm:$0xf] %v934
  %967 = vst [vmem:[%s6 + $0xd0] sm:$0xf] %v935
  %968 = vst [vmem:[%s6 + $0xd8] sm:$0xf] %v936
  %969 = vst [vmem:[%s6 + $0xe0] sm:$0xf] %v937
  %970 = vst [vmem:[%s6 + $0xe8] sm:$0xf] %v938
  %971 = vst [vmem:[%s6 + $0xf0] sm:$0xf] %v939
  %972 = vst [vmem:[%s6 + $0xf8] sm:$0xf] %v940
  %v973 = vld [vmem:[%s1] sm:$0xf]
  %v974 = vld [vmem:[%s1 + $0x4] sm:$0xf]
  %v975 = vld [vmem:[%s1 + $0x8] sm:$0xf]
  %v976 = vld [vmem:[%s1 + $0xc] sm:$0xf]
  %v977 = vld [vmem:[%s1 + $0x10] sm:$0xf]
  %v978 = vld [vmem:[%s1 + $0x14] sm:$0xf]
  %v979 = vld [vmem:[%s1 + $0x18] sm:$0xf]
  %v980 = vld [vmem:[%s1 + $0x1c] sm:$0xf]
  %v981 = vld [vmem:[%s1 + $0x20] sm:$0xf]
  %v982 = vld [vmem:[%s1 + $0x24] sm:$0xf]
  %v983 = vld [vmem:[%s1 + $0x28] sm:$0xf]
  %v984 = vld [vmem:[%s1 + $0x2c] sm:$0xf]
  %v985 = vld [vmem:[%s1 + $0x30] sm:$0xf]
  %v986 = vld [vmem:[%s1 + $0x34] sm:$0xf]
  %v987 = vld [vmem:[%s1 + $0x38] sm:$0xf]
  %v988 = vld [vmem:[%s1 + $0x3c] sm:$0xf]
  %v989 = vld [vmem:[%s1 + $0x40] sm:$0xf]
  %v990 = vld [vmem:[%s1 + $0x44] sm:$0xf]
  %v991 = vld [vmem:[%s1 + $0x48] sm:$0xf]
  %v992 = vld [vmem:[%s1 + $0x4c] sm:$0xf]
  %v993 = vld [vmem:[%s1 + $0x50] sm:$0xf]
  %v994 = vld [vmem:[%s1 + $0x54] sm:$0xf]
  %v995 = vld [vmem:[%s1 + $0x58] sm:$0xf]
  %v996 = vld [vmem:[%s1 + $0x5c] sm:$0xf]
  %v997 = vld [vmem:[%s1 + $0x60] sm:$0xf]
  %v998 = vld [vmem:[%s1 + $0x64] sm:$0xf]
  %v999 = vld [vmem:[%s1 + $0x68] sm:$0xf]
  %v1000 = vld [vmem:[%s1 + $0x6c] sm:$0xf]
  %v1001 = vld [vmem:[%s1 + $0x70] sm:$0xf]
  %v1002 = vld [vmem:[%s1 + $0x74] sm:$0xf]
  %v1003 = vld [vmem:[%s1 + $0x78] sm:$0xf]
  %v1004 = vld [vmem:[%s1 + $0x7c] sm:$0xf]
  %v1005 = vunpack.c.l.bf16 %v973
  %v1006 = vunpack.c.l.bf16 %v974
  %v1007 = vunpack.c.l.bf16 %v975
  %v1008 = vunpack.c.l.bf16 %v976
  %v1009 = vunpack.c.l.bf16 %v977
  %v1010 = vunpack.c.l.bf16 %v978
  %v1011 = vunpack.c.l.bf16 %v979
  %v1012 = vunpack.c.l.bf16 %v980
  %v1013 = vunpack.c.l.bf16 %v981
  %v1014 = vunpack.c.l.bf16 %v982
  %v1015 = vunpack.c.l.bf16 %v983
  %v1016 = vunpack.c.l.bf16 %v984
  %v1017 = vunpack.c.l.bf16 %v985
  %v1018 = vunpack.c.l.bf16 %v986
  %v1019 = vunpack.c.l.bf16 %v987
  %v1020 = vunpack.c.l.bf16 %v988
  %v1021 = vunpack.c.l.bf16 %v989
  %v1022 = vunpack.c.l.bf16 %v990
  %v1023 = vunpack.c.l.bf16 %v991
  %v1024 = vunpack.c.l.bf16 %v992
  %v1025 = vunpack.c.l.bf16 %v993
  %v1026 = vunpack.c.l.bf16 %v994
  %v1027 = vunpack.c.l.bf16 %v995
  %v1028 = vunpack.c.l.bf16 %v996
  %v1029 = vunpack.c.l.bf16 %v997
  %v1030 = vunpack.c.l.bf16 %v998
  %v1031 = vunpack.c.l.bf16 %v999
  %v1032 = vunpack.c.l.bf16 %v1000
  %v1033 = vunpack.c.l.bf16 %v1001
  %v1034 = vunpack.c.l.bf16 %v1002
  %v1035 = vunpack.c.l.bf16 %v1003
  %v1036 = vunpack.c.l.bf16 %v1004
  %v1037 = vmul.f32 %v399, %v1005
  %v1038 = vmul.f32 %v406, %v1006
  %v1039 = vmul.f32 %v413, %v1007
  %v1040 = vmul.f32 %v420, %v1008
  %v1041 = vmul.f32 %v427, %v1009
  %v1042 = vmul.f32 %v434, %v1010
  %v1043 = vmul.f32 %v441, %v1011
  %v1044 = vmul.f32 %v448, %v1012
  %v1045 = vmul.f32 %v455, %v1013
  %v1046 = vmul.f32 %v462, %v1014
  %v1047 = vmul.f32 %v469, %v1015
  %v1048 = vmul.f32 %v476, %v1016
  %v1049 = vmul.f32 %v483, %v1017
  %v1050 = vmul.f32 %v490, %v1018
  %v1051 = vmul.f32 %v497, %v1019
  %v1052 = vmul.f32 %v504, %v1020
  %v1053 = vmul.f32 %v511, %v1021
  %v1054 = vmul.f32 %v518, %v1022
  %v1055 = vmul.f32 %v525, %v1023
  %v1056 = vmul.f32 %v532, %v1024
  %v1057 = vmul.f32 %v539, %v1025
  %v1058 = vmul.f32 %v546, %v1026
  %v1059 = vmul.f32 %v553, %v1027
  %v1060 = vmul.f32 %v560, %v1028
  %v1061 = vmul.f32 %v567, %v1029
  %v1062 = vmul.f32 %v574, %v1030
  %v1063 = vmul.f32 %v581, %v1031
  %v1064 = vmul.f32 %v588, %v1032
  %v1065 = vmul.f32 %v595, %v1033
  %v1066 = vmul.f32 %v602, %v1034
  %v1067 = vmul.f32 %v609, %v1035
  %v1068 = vmul.f32 %v616, %v1036
  %v1069 = vpack.c.bf16 %v1037, %v1037
  %v1070 = vpack.c.bf16 %v1038, %v1038
  %v1071 = vpack.c.bf16 %v1039, %v1039
  %v1072 = vpack.c.bf16 %v1040, %v1040
  %v1073 = vpack.c.bf16 %v1041, %v1041
  %v1074 = vpack.c.bf16 %v1042, %v1042
  %v1075 = vpack.c.bf16 %v1043, %v1043
  %v1076 = vpack.c.bf16 %v1044, %v1044
  %v1077 = vpack.c.bf16 %v1045, %v1045
  %v1078 = vpack.c.bf16 %v1046, %v1046
  %v1079 = vpack.c.bf16 %v1047, %v1047
  %v1080 = vpack.c.bf16 %v1048, %v1048
  %v1081 = vpack.c.bf16 %v1049, %v1049
  %v1082 = vpack.c.bf16 %v1050, %v1050
  %v1083 = vpack.c.bf16 %v1051, %v1051
  %v1084 = vpack.c.bf16 %v1052, %v1052
  %v1085 = vpack.c.bf16 %v1053, %v1053
  %v1086 = vpack.c.bf16 %v1054, %v1054
  %v1087 = vpack.c.bf16 %v1055, %v1055
  %v1088 = vpack.c.bf16 %v1056, %v1056
  %v1089 = vpack.c.bf16 %v1057, %v1057
  %v1090 = vpack.c.bf16 %v1058, %v1058
  %v1091 = vpack.c.bf16 %v1059, %v1059
  %v1092 = vpack.c.bf16 %v1060, %v1060
  %v1093 = vpack.c.bf16 %v1061, %v1061
  %v1094 = vpack.c.bf16 %v1062, %v1062
  %v1095 = vpack.c.bf16 %v1063, %v1063
  %v1096 = vpack.c.bf16 %v1064, %v1064
  %v1097 = vpack.c.bf16 %v1065, %v1065
  %v1098 = vpack.c.bf16 %v1066, %v1066
  %v1099 = vpack.c.bf16 %v1067, %v1067
  %v1100 = vpack.c.bf16 %v1068, %v1068
  %1101 = vst [vmem:[%s6 + $0x4] sm:$0xf] %v1069
  %1102 = vst [vmem:[%s6 + $0xc] sm:$0xf] %v1070
  %1103 = vst [vmem:[%s6 + $0x14] sm:$0xf] %v1071
  %1104 = vst [vmem:[%s6 + $0x1c] sm:$0xf] %v1072
  %1105 = vst [vmem:[%s6 + $0x24] sm:$0xf] %v1073
  %1106 = vst [vmem:[%s6 + $0x2c] sm:$0xf] %v1074
  %1107 = vst [vmem:[%s6 + $0x34] sm:$0xf] %v1075
  %1108 = vst [vmem:[%s6 + $0x3c] sm:$0xf] %v1076
  %1109 = vst [vmem:[%s6 + $0x44] sm:$0xf] %v1077
  %1110 = vst [vmem:[%s6 + $0x4c] sm:$0xf] %v1078
  %1111 = vst [vmem:[%s6 + $0x54] sm:$0xf] %v1079
  %1112 = vst [vmem:[%s6 + $0x5c] sm:$0xf] %v1080
  %1113 = vst [vmem:[%s6 + $0x64] sm:$0xf] %v1081
  %1114 = vst [vmem:[%s6 + $0x6c] sm:$0xf] %v1082
  %1115 = vst [vmem:[%s6 + $0x74] sm:$0xf] %v1083
  %1116 = vst [vmem:[%s6 + $0x7c] sm:$0xf] %v1084
  %1117 = vst [vmem:[%s6 + $0x84] sm:$0xf] %v1085
  %1118 = vst [vmem:[%s6 + $0x8c] sm:$0xf] %v1086
  %1119 = vst [vmem:[%s6 + $0x94] sm:$0xf] %v1087
  %1120 = vst [vmem:[%s6 + $0x9c] sm:$0xf] %v1088
  %1121 = vst [vmem:[%s6 + $0xa4] sm:$0xf] %v1089
  %1122 = vst [vmem:[%s6 + $0xac] sm:$0xf] %v1090
  %1123 = vst [vmem:[%s6 + $0xb4] sm:$0xf] %v1091
  %1124 = vst [vmem:[%s6 + $0xbc] sm:$0xf] %v1092
  %1125 = vst [vmem:[%s6 + $0xc4] sm:$0xf] %v1093
  %1126 = vst [vmem:[%s6 + $0xcc] sm:$0xf] %v1094
  %1127 = vst [vmem:[%s6 + $0xd4] sm:$0xf] %v1095
  %1128 = vst [vmem:[%s6 + $0xdc] sm:$0xf] %v1096
  %1129 = vst [vmem:[%s6 + $0xe4] sm:$0xf] %v1097
  %1130 = vst [vmem:[%s6 + $0xec] sm:$0xf] %v1098
  %1131 = vst [vmem:[%s6 + $0xf4] sm:$0xf] %v1099
  %1132 = vst [vmem:[%s6 + $0xfc] sm:$0xf] %v1100
  // Predicated region
  $region26: #{struct2seq_decoder.7} parent=0 // pred_check
    _
  $region27: #{struct2seq_decoder.7} parent=0 // pred_check_branch
    %1134 = sbr.rel (0) target = $region29
  $region28: #{struct2seq_decoder.7} parent=0 // pred_region
    _
  $region29: #{struct2seq_decoder.7} parent=0 // pred_fallthru
    _
  // Predicated region
  $region30: #{struct2seq_decoder.7} parent=0 // pred_check
    _
  $region31: #{struct2seq_decoder.7} parent=0 // pred_check_branch
    %1136 = sbr.rel (0) target = $region33
  $region32: #{struct2seq_decoder.7} parent=0 // pred_region
    _
  $region33: #{struct2seq_decoder.7} parent=0 // pred_fallthru
    _

// kernel: struct2seq_decoder.11
$region0: #{struct2seq_decoder.11}
  #allocation0 [shape = 'u32[]', space=smem, size = 0x4, offset = 0x4, fixed_abs, tag = 'smem constant byte address 0x4 - core index']
  #allocation1 [shape = 'u32[144,128]{1,0:T(1,128)}', space=vmem, size = 0x12000, scoped, tag = 'internal scratch']
  %s0 = inlined_call_operand.vmem [shape: f32[32,128], index: 0, kind: input, shape index: {}]
  %s1 = inlined_call_operand.vmem [shape: f32[128,128], index: 1, kind: input, shape index: {}]
  %s2 = inlined_call_operand.vmem [shape: f32[1,128], index: 2, kind: input, shape index: {}]
  %s3 = inlined_call_operand.hbm [shape: f32[32,128], index: 3, kind: output, shape index: {}]
  %s4 = sld [smem:[#allocation0]]
  $region22: #{struct2seq_decoder.11} parent=0
    _
  %s6 = ssub.s32 1, %s4
  %s7 = scalar_select 0, %s6, %s4
  $region1: #{struct2seq_decoder.11} parent=0
    #allocation2 [shape = 'u8[16384]{0}', space=vmem, size = 0x4000, scoped, tag = 'output window, operand 0, single buffered']
    #allocation3 [shape = 's32[1]{0}', space=sflag, size = 0x4, scoped, tag = 'scoped memory for struct2seq_decoder.11']
    %8 = vsyncpa [#allocation3], 0
    // Predicated region
    $region2: #{struct2seq_decoder.11} parent=1 // pred_check
      _
    $region3: #{struct2seq_decoder.11} parent=1 // pred_check_branch
      %10 = sbr.rel (0) target = $region5
    $region4: #{struct2seq_decoder.11} parent=1 // pred_region
      _
    $region5: #{struct2seq_decoder.11} parent=1 // pred_fallthru
      _
    // Predicated region
    $region6: #{struct2seq_decoder.11} parent=1 // pred_check
      _
    $region7: #{struct2seq_decoder.11} parent=1 // pred_check_branch
      %12 = sbr.rel (0) target = $region9
    $region8: #{struct2seq_decoder.11} parent=1 // pred_region
      _
    $region9: #{struct2seq_decoder.11} parent=1 // pred_fallthru
      _
    // Predicated region
    $region10: #{struct2seq_decoder.11} parent=1 // pred_check
      _
    $region11: #{struct2seq_decoder.11} parent=1 // pred_check_branch
      %14 = sbr.rel (0) target = $region13
    $region12: #{struct2seq_decoder.11} parent=1 // pred_region
      _
    $region13: #{struct2seq_decoder.11} parent=1 // pred_fallthru
      _
    %v15 = vld [vmem:[%s0] sm:$0xff]
    %v16 = vld [vmem:[%s0 + $0x8] sm:$0xff]
    %v17 = vld [vmem:[%s0 + $0x10] sm:$0xff]
    %v18 = vld [vmem:[%s0 + $0x18] sm:$0xff]
    %v19 = vld [vmem:[%s1] sm:$0xff]
    %v20 = vld [vmem:[%s1 + $0x8] sm:$0xff]
    %v21 = vld [vmem:[%s1 + $0x10] sm:$0xff]
    %v22 = vld [vmem:[%s1 + $0x18] sm:$0xff]
    %v23 = vld [vmem:[%s1 + $0x20] sm:$0xff]
    %v24 = vld [vmem:[%s1 + $0x28] sm:$0xff]
    %v25 = vld [vmem:[%s1 + $0x30] sm:$0xff]
    %v26 = vld [vmem:[%s1 + $0x38] sm:$0xff]
    %v27 = vld [vmem:[%s1 + $0x40] sm:$0xff]
    %v28 = vld [vmem:[%s1 + $0x48] sm:$0xff]
    %v29 = vld [vmem:[%s1 + $0x50] sm:$0xff]
    %v30 = vld [vmem:[%s1 + $0x58] sm:$0xff]
    %v31 = vld [vmem:[%s1 + $0x60] sm:$0xff]
    %v32 = vld [vmem:[%s1 + $0x68] sm:$0xff]
    %v33 = vld [vmem:[%s1 + $0x70] sm:$0xff]
    %v34 = vld [vmem:[%s1 + $0x78] sm:$0xff]
    %v35 = vld [vmem:[%s2] sm:$0x1]
    %v37 = vlaneseq
    %v38 = vshrl.u32 %v37, 7
    %v39 = vsub.s32 0, %v38
    %v40 = vrot.slane %v35, %v39
    %42 = vmatprep.subr.mxu0 0.0
    %43 = vmatpush1.msra.mxu0 %v19
    %44 = vmatprep.subr.mxu0 0.0
    %45 = vmatpush1.msra.mxu0 %v20
    %46 = vmatprep.subr.mxu0 0.0
    %47 = vmatpush1.msra.mxu0 %v21
    %48 = vmatprep.subr.mxu0 0.0
    %49 = vmatpush1.msra.mxu0 %v22
    %50 = vmatprep.subr.mxu0 0.0
    %51 = vmatpush1.msra.mxu0 %v23
    %52 = vmatprep.subr.mxu0 0.0
    %53 = vmatpush1.msra.mxu0 %v24
    %54 = vmatprep.subr.mxu0 0.0
    %55 = vmatpush1.msra.mxu0 %v25
    %56 = vmatprep.subr.mxu0 0.0
    %57 = vmatpush1.msra.mxu0 %v26
    %58 = vmatprep.subr.mxu0 0.0
    %59 = vmatpush1.msra.mxu0 %v27
    %60 = vmatprep.subr.mxu0 0.0
    %61 = vmatpush1.msra.mxu0 %v28
    %62 = vmatprep.subr.mxu0 0.0
    %63 = vmatpush1.msra.mxu0 %v29
    %64 = vmatprep.subr.mxu0 0.0
    %65 = vmatpush1.msra.mxu0 %v30
    %66 = vmatprep.subr.mxu0 0.0
    %67 = vmatpush1.msra.mxu0 %v31
    %68 = vmatprep.subr.mxu0 0.0
    %69 = vmatpush1.msra.mxu0 %v32
    %70 = vmatprep.subr.mxu0 0.0
    %71 = vmatpush1.msra.mxu0 %v33
    %72 = vmatprep.subr.mxu0 0.0
    %73 = vmatpush1.msra.mxu0 %v34
    %74 = vmatprep.subr.mxu0 0.0
    %75 = vmatpush1.msra.mxu0 0.0
    %76 = vmatprep.subr.mxu0 0.0
    %77 = vmatpush1.msra.mxu0 0.0
    %78 = vmatprep.subr.mxu0 0.0
    %79 = vmatpush1.msra.mxu0 0.0
    %80 = vmatprep.subr.mxu0 0.0
    %81 = vmatpush1.msra.mxu0 0.0
    %82 = vmatprep.subr.mxu0 0.0
    %83 = vmatpush1.msra.mxu0 0.0
    %84 = vmatprep.subr.mxu0 0.0
    %85 = vmatpush1.msra.mxu0 0.0
    %86 = vmatprep.subr.mxu0 0.0
    %87 = vmatpush1.msra.mxu0 0.0
    %88 = vmatprep.subr.mxu0 0.0
    %89 = vmatpush1.msra.mxu0 0.0
    %90 = vmatprep.subr.mxu0 0.0
    %91 = vmatpush1.msra.mxu0 0.0
    %92 = vmatprep.subr.mxu0 0.0
    %93 = vmatpush1.msra.mxu0 0.0
    %94 = vmatprep.subr.mxu0 0.0
    %95 = vmatpush1.msra.mxu0 0.0
    %96 = vmatprep.subr.mxu0 0.0
    %97 = vmatpush1.msra.mxu0 0.0
    %98 = vmatprep.subr.mxu0 0.0
    %99 = vmatpush1.msra.mxu0 0.0
    %100 = vmatprep.subr.mxu0 0.0
    %101 = vmatpush1.msra.mxu0 0.0
    %102 = vmatprep.subr.mxu0 0.0
    %103 = vmatpush1.msra.mxu0 0.0
    %104 = vmatprep.subr.mxu0 0.0
    %105 = vmatpush1.msra.mxu0 0.0
    %106 = vmatprep.mubr.f32.mxu0 0.0
    %107 = vmatmul.mubr.f32.gmra.mrb[0].mxu0 %v15
    %v108 = vpop.f32.mrb[0].mxu0
    %v109 = vadd.f32 %v40, %v108
    %v110 = vpop.f32.mrb[0].mxu0
    %111 = vmatprep.mubr.f32.mxu0 0.0
    %112 = vmatmul.mubr.f32.gmra.mrb[0].mxu0 %v16
    %v113 = vpop.f32.mrb[0].mxu0
    %v114 = vadd.f32 %v40, %v113
    %v115 = vpop.f32.mrb[0].mxu0
    %116 = vmatprep.mubr.f32.mxu0 0.0
    %117 = vmatmul.mubr.f32.gmra.mrb[0].mxu0 %v17
    %v118 = vpop.f32.mrb[0].mxu0
    %v119 = vadd.f32 %v40, %v118
    %v120 = vpop.f32.mrb[0].mxu0
    %121 = vmatprep.mubr.f32.mxu0 0.0
    %122 = vmatmul.mubr.f32.gmra.mrb[0].mxu0 %v18
    %v123 = vpop.f32.mrb[0].mxu0
    %v124 = vadd.f32 %v40, %v123
    %v125 = vpop.f32.mrb[0].mxu0
    %126 = vdwg.mxu0
    %127 = vst [vmem:[#allocation2] sm:$0xff] %v109
    %128 = vst [vmem:[#allocation2 + $0x8] sm:$0xff] %v114
    %129 = vst [vmem:[#allocation2 + $0x10] sm:$0xff] %v119
    %130 = vst [vmem:[#allocation2 + $0x18] sm:$0xff] %v124
    // Predicated region
    $region14: #{struct2seq_decoder.11} parent=1 // pred_check
      _
    $region15: #{struct2seq_decoder.11} parent=1 // pred_check_branch
      %132 = sbr.rel (0) target = $region17
    $region16: #{struct2seq_decoder.11} parent=1 // pred_region
      %s134 = ssub.s32 512, 512
      %135 = vsyncadd [#allocation3], %s134
      %s136 = sshll.u32 [#allocation2], 4
      %s137 = int_to_ptr.vmem [resolvable:$true] %s136
      %142 = dma.vmem_to_hbm [thread:$0]  %s137, 512, %s3, [#allocation3], 128, 128, 8
    $region17: #{struct2seq_decoder.11} parent=1 // pred_fallthru
      _
    // Predicated region
    $region18: #{struct2seq_decoder.11} parent=1 // pred_check
      _
    $region19: #{struct2seq_decoder.11} parent=1 // pred_check_branch
      %144 = sbr.rel (0) target = $region21
    $region20: #{struct2seq_decoder.11} parent=1 // pred_region
      %145 = dma.done [#allocation3], 512
    $region21: #{struct2seq_decoder.11} parent=1 // pred_fallthru
      _
    %146 = vsyncpa [#allocation3], 1

// kernel: struct2seq_decoder.8
$region0: #{struct2seq_decoder.8}
  #allocation0 [shape = 'u32[]', space=smem, size = 0x4, offset = 0x4, fixed_abs, tag = 'smem constant byte address 0x4 - core index']
  #allocation1 [shape = 'u32[144,128]{1,0:T(1,128)}', space=vmem, size = 0x12000, scoped, tag = 'internal scratch']
  %s0 = inlined_call_operand.vmem [shape: f32[32,128], index: 0, kind: input, shape index: {}]
  %s1 = inlined_call_operand.vmem [shape: bf16[32,8,256], index: 1, kind: input, shape index: {}]
  %s2 = inlined_call_operand.vmem [shape: bf16[32,8,128], index: 2, kind: input, shape index: {}]
  %s3 = inlined_call_operand.vmem [shape: bf16[128,128], index: 3, kind: input, shape index: {}]
  %s4 = inlined_call_operand.vmem [shape: bf16[256,128], index: 4, kind: input, shape index: {}]
  %s5 = inlined_call_operand.vmem [shape: bf16[128,128], index: 5, kind: input, shape index: {}]
  %s6 = inlined_call_operand.vmem [shape: f32[1,128], index: 6, kind: input, shape index: {}]
  %s7 = inlined_call_operand.vmem [shape: bf16[128,128], index: 7, kind: input, shape index: {}]
  %s8 = inlined_call_operand.vmem [shape: f32[1,128], index: 8, kind: input, shape index: {}]
  %s9 = inlined_call_operand.vmem [shape: bf16[128,128], index: 9, kind: input, shape index: {}]
  %s10 = inlined_call_operand.vmem [shape: f32[1,128], index: 10, kind: input, shape index: {}]
  %s11 = inlined_call_operand.vmem [shape: f32[1,128], index: 11, kind: input, shape index: {}]
  %s12 = inlined_call_operand.vmem [shape: f32[1,128], index: 12, kind: input, shape index: {}]
  %s13 = inlined_call_operand.vmem [shape: bf16[128,512], index: 13, kind: input, shape index: {}]
  %s14 = inlined_call_operand.vmem [shape: f32[1,512], index: 14, kind: input, shape index: {}]
  %s15 = inlined_call_operand.vmem [shape: bf16[512,128], index: 15, kind: input, shape index: {}]
  %s16 = inlined_call_operand.vmem [shape: f32[1,128], index: 16, kind: input, shape index: {}]
  %s17 = inlined_call_operand.vmem [shape: f32[1,128], index: 17, kind: input, shape index: {}]
  %s18 = inlined_call_operand.vmem [shape: f32[1,128], index: 18, kind: input, shape index: {}]
  %s19 = inlined_call_operand.vmem [shape: f32[32,128], index: 19, kind: output, shape index: {}]
  %s20 = sld [smem:[#allocation0]]
  $region86: #{struct2seq_decoder.8} parent=0
    _
  %s22 = ssub.s32 1, %s20
  %s23 = scalar_select 0, %s22, %s20
  // Predicated region
  $region2: #{struct2seq_decoder.8} parent=0 // pred_check
    _
  $region3: #{struct2seq_decoder.8} parent=0 // pred_check_branch
    %25 = sbr.rel (0) target = $region5
  $region4: #{struct2seq_decoder.8} parent=0 // pred_region
    _
  $region5: #{struct2seq_decoder.8} parent=0 // pred_fallthru
    _
  // Predicated region
  $region6: #{struct2seq_decoder.8} parent=0 // pred_check
    _
  $region7: #{struct2seq_decoder.8} parent=0 // pred_check_branch
    %27 = sbr.rel (0) target = $region9
  $region8: #{struct2seq_decoder.8} parent=0 // pred_region
    _
  $region9: #{struct2seq_decoder.8} parent=0 // pred_fallthru
    _
  // Predicated region
  $region10: #{struct2seq_decoder.8} parent=0 // pred_check
    _
  $region11: #{struct2seq_decoder.8} parent=0 // pred_check_branch
    %29 = sbr.rel (0) target = $region13
  $region12: #{struct2seq_decoder.8} parent=0 // pred_region
    _
  $region13: #{struct2seq_decoder.8} parent=0 // pred_fallthru
    _
  // Predicated region
  $region14: #{struct2seq_decoder.8} parent=0 // pred_check
    _
  $region15: #{struct2seq_decoder.8} parent=0 // pred_check_branch
    %31 = sbr.rel (0) target = $region17
  $region16: #{struct2seq_decoder.8} parent=0 // pred_region
    _
  $region17: #{struct2seq_decoder.8} parent=0 // pred_fallthru
    _
  // Predicated region
  $region18: #{struct2seq_decoder.8} parent=0 // pred_check
    _
  $region19: #{struct2seq_decoder.8} parent=0 // pred_check_branch
    %33 = sbr.rel (0) target = $region21
  $region20: #{struct2seq_decoder.8} parent=0 // pred_region
    _
  $region21: #{struct2seq_decoder.8} parent=0 // pred_fallthru
    _
  // Predicated region
  $region22: #{struct2seq_decoder.8} parent=0 // pred_check
    _
  $region23: #{struct2seq_decoder.8} parent=0 // pred_check_branch
    %35 = sbr.rel (0) target = $region25
  $region24: #{struct2seq_decoder.8} parent=0 // pred_region
    _
  $region25: #{struct2seq_decoder.8} parent=0 // pred_fallthru
    _
  // Predicated region
  $region26: #{struct2seq_decoder.8} parent=0 // pred_check
    _
  $region27: #{struct2seq_decoder.8} parent=0 // pred_check_branch
    %37 = sbr.rel (0) target = $region29
  $region28: #{struct2seq_decoder.8} parent=0 // pred_region
    _
  $region29: #{struct2seq_decoder.8} parent=0 // pred_fallthru
    _
  // Predicated region
  $region30: #{struct2seq_decoder.8} parent=0 // pred_check
    _
  $region31: #{struct2seq_decoder.8} parent=0 // pred_check_branch
    %39 = sbr.rel (0) target = $region33
  $region32: #{struct2seq_decoder.8} parent=0 // pred_region
    _
  $region33: #{struct2seq_decoder.8} parent=0 // pred_fallthru
    _
  // Predicated region
  $region34: #{struct2seq_decoder.8} parent=0 // pred_check
    _
  $region35: #{struct2seq_decoder.8} parent=0 // pred_check_branch
    %41 = sbr.rel (0) target = $region37
  $region36: #{struct2seq_decoder.8} parent=0 // pred_region
    _
  $region37: #{struct2seq_decoder.8} parent=0 // pred_fallthru
    _
  // Predicated region
  $region38: #{struct2seq_decoder.8} parent=0 // pred_check
    _
  $region39: #{struct2seq_decoder.8} parent=0 // pred_check_branch
    %43 = sbr.rel (0) target = $region41
  $region40: #{struct2seq_decoder.8} parent=0 // pred_region
    _
  $region41: #{struct2seq_decoder.8} parent=0 // pred_fallthru
    _
  // Predicated region
  $region42: #{struct2seq_decoder.8} parent=0 // pred_check
    _
  $region43: #{struct2seq_decoder.8} parent=0 // pred_check_branch
    %45 = sbr.rel (0) target = $region45
  $region44: #{struct2seq_decoder.8} parent=0 // pred_region
    _
  $region45: #{struct2seq_decoder.8} parent=0 // pred_fallthru
    _
  // Predicated region
  $region46: #{struct2seq_decoder.8} parent=0 // pred_check
    _
  $region47: #{struct2seq_decoder.8} parent=0 // pred_check_branch
    %47 = sbr.rel (0) target = $region49
  $region48: #{struct2seq_decoder.8} parent=0 // pred_region
    _
  $region49: #{struct2seq_decoder.8} parent=0 // pred_fallthru
    _
  // Predicated region
  $region50: #{struct2seq_decoder.8} parent=0 // pred_check
    _
  $region51: #{struct2seq_decoder.8} parent=0 // pred_check_branch
    %49 = sbr.rel (0) target = $region53
  $region52: #{struct2seq_decoder.8} parent=0 // pred_region
    _
  $region53: #{struct2seq_decoder.8} parent=0 // pred_fallthru
    _
  // Predicated region
  $region54: #{struct2seq_decoder.8} parent=0 // pred_check
    _
  $region55: #{struct2seq_decoder.8} parent=0 // pred_check_branch
    %51 = sbr.rel (0) target = $region57
  $region56: #{struct2seq_decoder.8} parent=0 // pred_region
    _
  $region57: #{struct2seq_decoder.8} parent=0 // pred_fallthru
    _
  // Predicated region
  $region58: #{struct2seq_decoder.8} parent=0 // pred_check
    _
  $region59: #{struct2seq_decoder.8} parent=0 // pred_check_branch
    %53 = sbr.rel (0) target = $region61
  $region60: #{struct2seq_decoder.8} parent=0 // pred_region
    _
  $region61: #{struct2seq_decoder.8} parent=0 // pred_fallthru
    _
  // Predicated region
  $region62: #{struct2seq_decoder.8} parent=0 // pred_check
    _
  $region63: #{struct2seq_decoder.8} parent=0 // pred_check_branch
    %55 = sbr.rel (0) target = $region65
  $region64: #{struct2seq_decoder.8} parent=0 // pred_region
    _
  $region65: #{struct2seq_decoder.8} parent=0 // pred_fallthru
    _
  // Predicated region
  $region66: #{struct2seq_decoder.8} parent=0 // pred_check
    _
  $region67: #{struct2seq_decoder.8} parent=0 // pred_check_branch
    %57 = sbr.rel (0) target = $region69
  $region68: #{struct2seq_decoder.8} parent=0 // pred_region
    _
  $region69: #{struct2seq_decoder.8} parent=0 // pred_fallthru
    _
  // Predicated region
  $region70: #{struct2seq_decoder.8} parent=0 // pred_check
    _
  $region71: #{struct2seq_decoder.8} parent=0 // pred_check_branch
    %59 = sbr.rel (0) target = $region73
  $region72: #{struct2seq_decoder.8} parent=0 // pred_region
    _
  $region73: #{struct2seq_decoder.8} parent=0 // pred_fallthru
    _
  // Predicated region
  $region74: #{struct2seq_decoder.8} parent=0 // pred_check
    _
  $region75: #{struct2seq_decoder.8} parent=0 // pred_check_branch
    %61 = sbr.rel (0) target = $region77
  $region76: #{struct2seq_decoder.8} parent=0 // pred_region
    _
  $region77: #{struct2seq_decoder.8} parent=0 // pred_fallthru
    _
  %v63 = vld [vmem:[%s0] sm:$0xff]
  %v64 = vld [vmem:[%s0 + $0x8] sm:$0xff]
  %v65 = vld [vmem:[%s0 + $0x10] sm:$0xff]
  %v66 = vld [vmem:[%s0 + $0x18] sm:$0xff]
  %v67 = vld [vmem:[%s1] sm:$0xff]
  %v68 = vld [vmem:[%s1 + $0x8] sm:$0xff]
  %v69 = vld [vmem:[%s1 + $0x10] sm:$0xff]
  %v70 = vld [vmem:[%s1 + $0x18] sm:$0xff]
  %v71 = vld [vmem:[%s1 + $0x20] sm:$0xff]
  %v72 = vld [vmem:[%s1 + $0x28] sm:$0xff]
  %v73 = vld [vmem:[%s1 + $0x30] sm:$0xff]
  %v74 = vld [vmem:[%s1 + $0x38] sm:$0xff]
  %v75 = vld [vmem:[%s1 + $0x40] sm:$0xff]
  %v76 = vld [vmem:[%s1 + $0x48] sm:$0xff]
  %v77 = vld [vmem:[%s1 + $0x50] sm:$0xff]
  %v78 = vld [vmem:[%s1 + $0x58] sm:$0xff]
  %v79 = vld [vmem:[%s1 + $0x60] sm:$0xff]
  %v80 = vld [vmem:[%s1 + $0x68] sm:$0xff]
  %v81 = vld [vmem:[%s1 + $0x70] sm:$0xff]
  %v82 = vld [vmem:[%s1 + $0x78] sm:$0xff]
  %v83 = vld [vmem:[%s1 + $0x80] sm:$0xff]
  %v84 = vld [vmem:[%s1 + $0x88] sm:$0xff]
  %v85 = vld [vmem:[%s1 + $0x90] sm:$0xff]
  %v86 = vld [vmem:[%s1 + $0x98] sm:$0xff]
  %v87 = vld [vmem:[%s1 + $0xa0] sm:$0xff]
  %v88 = vld [vmem:[%s1 + $0xa8] sm:$0xff]
  %v89 = vld [vmem:[%s1 + $0xb0] sm:$0xff]
  %v90 = vld [vmem:[%s1 + $0xb8] sm:$0xff]
  %v91 = vld [vmem:[%s1 + $0xc0] sm:$0xff]
  %v92 = vld [vmem:[%s1 + $0xc8] sm:$0xff]
  %v93 = vld [vmem:[%s1 + $0xd0] sm:$0xff]
  %v94 = vld [vmem:[%s1 + $0xd8] sm:$0xff]
  %v95 = vld [vmem:[%s1 + $0xe0] sm:$0xff]
  %v96 = vld [vmem:[%s1 + $0xe8] sm:$0xff]
  %v97 = vld [vmem:[%s1 + $0xf0] sm:$0xff]
  %v98 = vld [vmem:[%s1 + $0xf8] sm:$0xff]
  %v99 = vld [vmem:[%s2] sm:$0xf]
  %v100 = vld [vmem:[%s2 + $0x4] sm:$0xf]
  %v101 = vld [vmem:[%s2 + $0x8] sm:$0xf]
  %v102 = vld [vmem:[%s2 + $0xc] sm:$0xf]
  %v103 = vld [vmem:[%s2 + $0x10] sm:$0xf]
  %v104 = vld [vmem:[%s2 + $0x14] sm:$0xf]
  %v105 = vld [vmem:[%s2 + $0x18] sm:$0xf]
  %v106 = vld [vmem:[%s2 + $0x1c] sm:$0xf]
  %v107 = vld [vmem:[%s2 + $0x20] sm:$0xf]
  %v108 = vld [vmem:[%s2 + $0x24] sm:$0xf]
  %v109 = vld [vmem:[%s2 + $0x28] sm:$0xf]
  %v110 = vld [vmem:[%s2 + $0x2c] sm:$0xf]
  %v111 = vld [vmem:[%s2 + $0x30] sm:$0xf]
  %v112 = vld [vmem:[%s2 + $0x34] sm:$0xf]
  %v113 = vld [vmem:[%s2 + $0x38] sm:$0xf]
  %v114 = vld [vmem:[%s2 + $0x3c] sm:$0xf]
  %v115 = vld [vmem:[%s2 + $0x40] sm:$0xf]
  %v116 = vld [vmem:[%s2 + $0x44] sm:$0xf]
  %v117 = vld [vmem:[%s2 + $0x48] sm:$0xf]
  %v118 = vld [vmem:[%s2 + $0x4c] sm:$0xf]
  %v119 = vld [vmem:[%s2 + $0x50] sm:$0xf]
  %v120 = vld [vmem:[%s2 + $0x54] sm:$0xf]
  %v121 = vld [vmem:[%s2 + $0x58] sm:$0xf]
  %v122 = vld [vmem:[%s2 + $0x5c] sm:$0xf]
  %v123 = vld [vmem:[%s2 + $0x60] sm:$0xf]
  %v124 = vld [vmem:[%s2 + $0x64] sm:$0xf]
  %v125 = vld [vmem:[%s2 + $0x68] sm:$0xf]
  %v126 = vld [vmem:[%s2 + $0x6c] sm:$0xf]
  %v127 = vld [vmem:[%s2 + $0x70] sm:$0xf]
  %v128 = vld [vmem:[%s2 + $0x74] sm:$0xf]
  %v129 = vld [vmem:[%s2 + $0x78] sm:$0xf]
  %v130 = vld [vmem:[%s2 + $0x7c] sm:$0xf]
  %v131 = vpack.c.bf16 %v64, %v63
  %v132 = vpack.c.bf16 %v66, %v65
  %v133 = vld [vmem:[%s3] sm:$0xf]
  %v134 = vld [vmem:[%s3 + $0x4] sm:$0xf]
  %v135 = vld [vmem:[%s3 + $0x8] sm:$0xf]
  %v136 = vld [vmem:[%s3 + $0xc] sm:$0xf]
  %v137 = vld [vmem:[%s3 + $0x10] sm:$0xf]
  %v138 = vld [vmem:[%s3 + $0x14] sm:$0xf]
  %v139 = vld [vmem:[%s3 + $0x18] sm:$0xf]
  %v140 = vld [vmem:[%s3 + $0x1c] sm:$0xf]
  %v141 = vld [vmem:[%s3 + $0x20] sm:$0xf]
  %v142 = vld [vmem:[%s3 + $0x24] sm:$0xf]
  %v143 = vld [vmem:[%s3 + $0x28] sm:$0xf]
  %v144 = vld [vmem:[%s3 + $0x2c] sm:$0xf]
  %v145 = vld [vmem:[%s3 + $0x30] sm:$0xf]
  %v146 = vld [vmem:[%s3 + $0x34] sm:$0xf]
  %v147 = vld [vmem:[%s3 + $0x38] sm:$0xf]
  %v148 = vld [vmem:[%s3 + $0x3c] sm:$0xf]
  %v165 = vunpack.c.l.b16 %v133
  %v166 = vunpack.c.l.b16 %v134
  %v167 = vunpack.c.l.b16 %v135
  %v168 = vunpack.c.l.b16 %v136
  %v169 = vunpack.c.l.b16 %v137
  %v170 = vunpack.c.l.b16 %v138
  %v171 = vunpack.c.l.b16 %v139
  %v172 = vunpack.c.l.b16 %v140
  %v173 = vunpack.c.l.b16 %v141
  %v174 = vunpack.c.l.b16 %v142
  %v175 = vunpack.c.l.b16 %v143
  %v176 = vunpack.c.l.b16 %v144
  %v177 = vunpack.c.l.b16 %v145
  %v178 = vunpack.c.l.b16 %v146
  %v179 = vunpack.c.l.b16 %v147
  %v180 = vunpack.c.l.b16 %v148
  %v181 = vpack.c.b16 %v166, %v165
  %v182 = vpack.c.b16 %v168, %v167
  %v183 = vpack.c.b16 %v170, %v169
  %v184 = vpack.c.b16 %v172, %v171
  %v185 = vpack.c.b16 %v174, %v173
  %v186 = vpack.c.b16 %v176, %v175
  %v187 = vpack.c.b16 %v178, %v177
  %v188 = vpack.c.b16 %v180, %v179
  %197 = vmatprep.subr.bf16.mxu0 0
  %198 = vmatpush1.bf16.msra.mxu0 %v181
  %199 = vmatprep.subr.bf16.mxu0 0
  %200 = vmatpush1.bf16.msra.mxu0 %v182
  %201 = vmatprep.subr.bf16.mxu0 0
  %202 = vmatpush1.bf16.msra.mxu0 %v183
  %203 = vmatprep.subr.bf16.mxu0 0
  %204 = vmatpush1.bf16.msra.mxu0 %v184
  %205 = vmatprep.subr.bf16.mxu0 0
  %206 = vmatpush1.bf16.msra.mxu0 %v185
  %207 = vmatprep.subr.bf16.mxu0 0
  %208 = vmatpush1.bf16.msra.mxu0 %v186
  %209 = vmatprep.subr.bf16.mxu0 0
  %210 = vmatpush1.bf16.msra.mxu0 %v187
  %211 = vmatprep.subr.bf16.mxu0 0
  %212 = vmatpush1.bf16.msra.mxu0 %v188
  %213 = vmatprep.subr.bf16.mxu0 0
  %214 = vmatpush1.bf16.msra.mxu0 0
  %215 = vmatprep.subr.bf16.mxu0 0
  %216 = vmatpush1.bf16.msra.mxu0 0
  %217 = vmatprep.subr.bf16.mxu0 0
  %218 = vmatpush1.bf16.msra.mxu0 0
  %219 = vmatprep.subr.bf16.mxu0 0
  %220 = vmatpush1.bf16.msra.mxu0 0
  %221 = vmatprep.subr.bf16.mxu0 0
  %222 = vmatpush1.bf16.msra.mxu0 0
  %223 = vmatprep.subr.bf16.mxu0 0
  %224 = vmatpush1.bf16.msra.mxu0 0
  %225 = vmatprep.subr.bf16.mxu0 0
  %226 = vmatpush1.bf16.msra.mxu0 0
  %227 = vmatprep.subr.bf16.mxu0 0
  %228 = vmatpush1.bf16.msra.mxu0 0
  %229 = vmatprep.mubr.bf16.mxu0 0
  %230 = vmatmul.mubr.bf16.gmra.mrb[0].mxu0 %v131
  %v231 = vpop.f32.mrb[0].mxu0
  %v232 = vadd.f32 0.0, %v231
  %v233 = vpop.f32.mrb[0].mxu0
  %v234 = vpop.f32.mrb[0].mxu0
  %v235 = vadd.f32 0.0, %v234
  %v236 = vpop.f32.mrb[0].mxu0
  %237 = vmatprep.mubr.bf16.mxu0 0
  %238 = vmatmul.mubr.bf16.gmra.mrb[0].mxu0 %v132
  %v239 = vpop.f32.mrb[0].mxu0
  %v240 = vadd.f32 0.0, %v239
  %v241 = vpop.f32.mrb[0].mxu0
  %v242 = vpop.f32.mrb[0].mxu0
  %v243 = vadd.f32 0.0, %v242
  %v244 = vpop.f32.mrb[0].mxu0
  %245 = vdwg.mxu0
  %v246 = vld [vmem:[%s4] sm:$0xf]
  %v247 = vld [vmem:[%s4 + $0x4] sm:$0xf]
  %v248 = vld [vmem:[%s4 + $0x8] sm:$0xf]
  %v249 = vld [vmem:[%s4 + $0xc] sm:$0xf]
  %v250 = vld [vmem:[%s4 + $0x10] sm:$0xf]
  %v251 = vld [vmem:[%s4 + $0x14] sm:$0xf]
  %v252 = vld [vmem:[%s4 + $0x18] sm:$0xf]
  %v253 = vld [vmem:[%s4 + $0x1c] sm:$0xf]
  %v254 = vld [vmem:[%s4 + $0x20] sm:$0xf]
  %v255 = vld [vmem:[%s4 + $0x24] sm:$0xf]
  %v256 = vld [vmem:[%s4 + $0x28] sm:$0xf]
  %v257 = vld [vmem:[%s4 + $0x2c] sm:$0xf]
  %v258 = vld [vmem:[%s4 + $0x30] sm:$0xf]
  %v259 = vld [vmem:[%s4 + $0x34] sm:$0xf]
  %v260 = vld [vmem:[%s4 + $0x38] sm:$0xf]
  %v261 = vld [vmem:[%s4 + $0x3c] sm:$0xf]
  %v262 = vld [vmem:[%s4 + $0x40] sm:$0xf]
  %v263 = vld [vmem:[%s4 + $0x44] sm:$0xf]
  %v264 = vld [vmem:[%s4 + $0x48] sm:$0xf]
  %v265 = vld [vmem:[%s4 + $0x4c] sm:$0xf]
  %v266 = vld [vmem:[%s4 + $0x50] sm:$0xf]
  %v267 = vld [vmem:[%s4 + $0x54] sm:$0xf]
  %v268 = vld [vmem:[%s4 + $0x58] sm:$0xf]
  %v269 = vld [vmem:[%s4 + $0x5c] sm:$0xf]
  %v270 = vld [vmem:[%s4 + $0x60] sm:$0xf]
  %v271 = vld [vmem:[%s4 + $0x64] sm:$0xf]
  %v272 = vld [vmem:[%s4 + $0x68] sm:$0xf]
  %v273 = vld [vmem:[%s4 + $0x6c] sm:$0xf]
  %v274 = vld [vmem:[%s4 + $0x70] sm:$0xf]
  %v275 = vld [vmem:[%s4 + $0x74] sm:$0xf]
  %v276 = vld [vmem:[%s4 + $0x78] sm:$0xf]
  %v277 = vld [vmem:[%s4 + $0x7c] sm:$0xf]
  %v278 = vld [vmem:[%s5] sm:$0xf]
  %v279 = vld [vmem:[%s5 + $0x4] sm:$0xf]
  %v280 = vld [vmem:[%s5 + $0x8] sm:$0xf]
  %v281 = vld [vmem:[%s5 + $0xc] sm:$0xf]
  %v282 = vld [vmem:[%s5 + $0x10] sm:$0xf]
  %v283 = vld [vmem:[%s5 + $0x14] sm:$0xf]
  %v284 = vld [vmem:[%s5 + $0x18] sm:$0xf]
  %v285 = vld [vmem:[%s5 + $0x1c] sm:$0xf]
  %v286 = vld [vmem:[%s5 + $0x20] sm:$0xf]
  %v287 = vld [vmem:[%s5 + $0x24] sm:$0xf]
  %v288 = vld [vmem:[%s5 + $0x28] sm:$0xf]
  %v289 = vld [vmem:[%s5 + $0x2c] sm:$0xf]
  %v290 = vld [vmem:[%s5 + $0x30] sm:$0xf]
  %v291 = vld [vmem:[%s5 + $0x34] sm:$0xf]
  %v292 = vld [vmem:[%s5 + $0x38] sm:$0xf]
  %v293 = vld [vmem:[%s5 + $0x3c] sm:$0xf]
  %v326 = vunpack.c.l.b16 %v99
  %v327 = vunpack.c.l.b16 %v100
  %v328 = vunpack.c.l.b16 %v101
  %v329 = vunpack.c.l.b16 %v102
  %v330 = vunpack.c.l.b16 %v103
  %v331 = vunpack.c.l.b16 %v104
  %v332 = vunpack.c.l.b16 %v105
  %v333 = vunpack.c.l.b16 %v106
  %v334 = vunpack.c.l.b16 %v107
  %v335 = vunpack.c.l.b16 %v108
  %v336 = vunpack.c.l.b16 %v109
  %v337 = vunpack.c.l.b16 %v110
  %v338 = vunpack.c.l.b16 %v111
  %v339 = vunpack.c.l.b16 %v112
  %v340 = vunpack.c.l.b16 %v113
  %v341 = vunpack.c.l.b16 %v114
  %v342 = vunpack.c.l.b16 %v115
  %v343 = vunpack.c.l.b16 %v116
  %v344 = vunpack.c.l.b16 %v117
  %v345 = vunpack.c.l.b16 %v118
  %v346 = vunpack.c.l.b16 %v119
  %v347 = vunpack.c.l.b16 %v120
  %v348 = vunpack.c.l.b16 %v121
  %v349 = vunpack.c.l.b16 %v122
  %v350 = vunpack.c.l.b16 %v123
  %v351 = vunpack.c.l.b16 %v124
  %v352 = vunpack.c.l.b16 %v125
  %v353 = vunpack.c.l.b16 %v126
  %v354 = vunpack.c.l.b16 %v127
  %v355 = vunpack.c.l.b16 %v128
  %v356 = vunpack.c.l.b16 %v129
  %v357 = vunpack.c.l.b16 %v130
  %v358 = vpack.c.b16 %v327, %v326
  %v359 = vpack.c.b16 %v329, %v328
  %v360 = vpack.c.b16 %v331, %v330
  %v361 = vpack.c.b16 %v333, %v332
  %v362 = vpack.c.b16 %v335, %v334
  %v363 = vpack.c.b16 %v337, %v336
  %v364 = vpack.c.b16 %v339, %v338
  %v365 = vpack.c.b16 %v341, %v340
  %v366 = vpack.c.b16 %v343, %v342
  %v367 = vpack.c.b16 %v345, %v344
  %v368 = vpack.c.b16 %v347, %v346
  %v369 = vpack.c.b16 %v349, %v348
  %v370 = vpack.c.b16 %v351, %v350
  %v371 = vpack.c.b16 %v353, %v352
  %v372 = vpack.c.b16 %v355, %v354
  %v373 = vpack.c.b16 %v357, %v356
  %v406 = vunpack.c.l.b16 %v278
  %v407 = vunpack.c.l.b16 %v279
  %v408 = vunpack.c.l.b16 %v280
  %v409 = vunpack.c.l.b16 %v281
  %v410 = vunpack.c.l.b16 %v282
  %v411 = vunpack.c.l.b16 %v283
  %v412 = vunpack.c.l.b16 %v284
  %v413 = vunpack.c.l.b16 %v285
  %v414 = vunpack.c.l.b16 %v286
  %v415 = vunpack.c.l.b16 %v287
  %v416 = vunpack.c.l.b16 %v288
  %v417 = vunpack.c.l.b16 %v289
  %v418 = vunpack.c.l.b16 %v290
  %v419 = vunpack.c.l.b16 %v291
  %v420 = vunpack.c.l.b16 %v292
  %v421 = vunpack.c.l.b16 %v293
  %v422 = vpack.c.b16 %v407, %v406
  %v423 = vpack.c.b16 %v409, %v408
  %v424 = vpack.c.b16 %v411, %v410
  %v425 = vpack.c.b16 %v413, %v412
  %v426 = vpack.c.b16 %v415, %v414
  %v427 = vpack.c.b16 %v417, %v416
  %v428 = vpack.c.b16 %v419, %v418
  %v429 = vpack.c.b16 %v421, %v420
  %438 = vmatprep.subr.bf16.mxu0 0
  %439 = vmatpush1.bf16.msra.mxu0 %v422
  %440 = vmatprep.subr.bf16.mxu0 0
  %441 = vmatpush1.bf16.msra.mxu0 %v423
  %442 = vmatprep.subr.bf16.mxu0 0
  %443 = vmatpush1.bf16.msra.mxu0 %v424
  %444 = vmatprep.subr.bf16.mxu0 0
  %445 = vmatpush1.bf16.msra.mxu0 %v425
  %446 = vmatprep.subr.bf16.mxu0 0
  %447 = vmatpush1.bf16.msra.mxu0 %v426
  %448 = vmatprep.subr.bf16.mxu0 0
  %449 = vmatpush1.bf16.msra.mxu0 %v427
  %450 = vmatprep.subr.bf16.mxu0 0
  %451 = vmatpush1.bf16.msra.mxu0 %v428
  %452 = vmatprep.subr.bf16.mxu0 0
  %453 = vmatpush1.bf16.msra.mxu0 %v429
  %454 = vmatprep.subr.bf16.mxu0 0
  %455 = vmatpush1.bf16.msra.mxu0 0
  %456 = vmatprep.subr.bf16.mxu0 0
  %457 = vmatpush1.bf16.msra.mxu0 0
  %458 = vmatprep.subr.bf16.mxu0 0
  %459 = vmatpush1.bf16.msra.mxu0 0
  %460 = vmatprep.subr.bf16.mxu0 0
  %461 = vmatpush1.bf16.msra.mxu0 0
  %462 = vmatprep.subr.bf16.mxu0 0
  %463 = vmatpush1.bf16.msra.mxu0 0
  %464 = vmatprep.subr.bf16.mxu0 0
  %465 = vmatpush1.bf16.msra.mxu0 0
  %466 = vmatprep.subr.bf16.mxu0 0
  %467 = vmatpush1.bf16.msra.mxu0 0
  %468 = vmatprep.subr.bf16.mxu0 0
  %469 = vmatpush1.bf16.msra.mxu0 0
  %470 = vmatprep.mubr.bf16.mxu0 0
  %471 = vmatmul.mubr.bf16.gmra.mrb[0].mxu0 %v358
  %v472 = vpop.f32.mrb[0].mxu0
  %v473 = vadd.f32 0.0, %v472
  %v474 = vpop.f32.mrb[0].mxu0
  %v475 = vpop.f32.mrb[0].mxu0
  %v476 = vadd.f32 0.0, %v475
  %v477 = vpop.f32.mrb[0].mxu0
  %478 = vmatprep.mubr.bf16.mxu0 0
  %479 = vmatmul.mubr.bf16.gmra.mrb[0].mxu0 %v359
  %v480 = vpop.f32.mrb[0].mxu0
  %v481 = vadd.f32 0.0, %v480
  %v482 = vpop.f32.mrb[0].mxu0
  %v483 = vpop.f32.mrb[0].mxu0
  %v484 = vadd.f32 0.0, %v483
  %v485 = vpop.f32.mrb[0].mxu0
  %486 = vmatprep.mubr.bf16.mxu0 0
  %487 = vmatmul.mubr.bf16.gmra.mrb[0].mxu0 %v360
  %v488 = vpop.f32.mrb[0].mxu0
  %v489 = vadd.f32 0.0, %v488
  %v490 = vpop.f32.mrb[0].mxu0
  %v491 = vpop.f32.mrb[0].mxu0
  %v492 = vadd.f32 0.0, %v491
  %v493 = vpop.f32.mrb[0].mxu0
  %494 = vmatprep.mubr.bf16.mxu0 0
  %495 = vmatmul.mubr.bf16.gmra.mrb[0].mxu0 %v361
  %v496 = vpop.f32.mrb[0].mxu0
  %v497 = vadd.f32 0.0, %v496
  %v498 = vpop.f32.mrb[0].mxu0
  %v499 = vpop.f32.mrb[0].mxu0
  %v500 = vadd.f32 0.0, %v499
  %v501 = vpop.f32.mrb[0].mxu0
  %502 = vmatprep.mubr.bf16.mxu0 0
  %503 = vmatmul.mubr.bf16.gmra.mrb[0].mxu0 %v362
  %v504 = vpop.f32.mrb[0].mxu0
  %v505 = vadd.f32 0.0, %v504
  %v506 = vpop.f32.mrb[0].mxu0
  %v507 = vpop.f32.mrb[0].mxu0
  %v508 = vadd.f32 0.0, %v507
  %v509 = vpop.f32.mrb[0].mxu0
  %510 = vmatprep.mubr.bf16.mxu0 0
  %511 = vmatmul.mubr.bf16.gmra.mrb[0].mxu0 %v363
  %v512 = vpop.f32.mrb[0].mxu0
  %v513 = vadd.f32 0.0, %v512
  %v514 = vpop.f32.mrb[0].mxu0
  %v515 = vpop.f32.mrb[0].mxu0
  %v516 = vadd.f32 0.0, %v515
  %v517 = vpop.f32.mrb[0].mxu0
  %518 = vmatprep.mubr.bf16.mxu0 0
  %519 = vmatmul.mubr.bf16.gmra.mrb[0].mxu0 %v364
  %v520 = vpop.f32.mrb[0].mxu0
  %v521 = vadd.f32 0.0, %v520
  %v522 = vpop.f32.mrb[0].mxu0
  %v523 = vpop.f32.mrb[0].mxu0
  %v524 = vadd.f32 0.0, %v523
  %v525 = vpop.f32.mrb[0].mxu0
  %526 = vmatprep.mubr.bf16.mxu0 0
  %527 = vmatmul.mubr.bf16.gmra.mrb[0].mxu0 %v365
  %v528 = vpop.f32.mrb[0].mxu0
  %v529 = vadd.f32 0.0, %v528
  %v530 = vpop.f32.mrb[0].mxu0
  %v531 = vpop.f32.mrb[0].mxu0
  %v532 = vadd.f32 0.0, %v531
  %v533 = vpop.f32.mrb[0].mxu0
  %534 = vmatprep.mubr.bf16.mxu0 0
  %535 = vmatmul.mubr.bf16.gmra.mrb[0].mxu0 %v366
  %v536 = vpop.f32.mrb[0].mxu0
  %v537 = vadd.f32 0.0, %v536
  %v538 = vpop.f32.mrb[0].mxu0
  %v539 = vpop.f32.mrb[0].mxu0
  %v540 = vadd.f32 0.0, %v539
  %v541 = vpop.f32.mrb[0].mxu0
  %542 = vmatprep.mubr.bf16.mxu0 0
  %543 = vmatmul.mubr.bf16.gmra.mrb[0].mxu0 %v367
  %v544 = vpop.f32.mrb[0].mxu0
  %v545 = vadd.f32 0.0, %v544
  %v546 = vpop.f32.mrb[0].mxu0
  %v547 = vpop.f32.mrb[0].mxu0
  %v548 = vadd.f32 0.0, %v547
  %v549 = vpop.f32.mrb[0].mxu0
  %550 = vmatprep.mubr.bf16.mxu0 0
  %551 = vmatmul.mubr.bf16.gmra.mrb[0].mxu0 %v368
  %v552 = vpop.f32.mrb[0].mxu0
  %v553 = vadd.f32 0.0, %v552
  %v554 = vpop.f32.mrb[0].mxu0
  %v555 = vpop.f32.mrb[0].mxu0
  %v556 = vadd.f32 0.0, %v555
  %v557 = vpop.f32.mrb[0].mxu0
  %558 = vmatprep.mubr.bf16.mxu0 0
  %559 = vmatmul.mubr.bf16.gmra.mrb[0].mxu0 %v369
  %v560 = vpop.f32.mrb[0].mxu0
  %v561 = vadd.f32 0.0, %v560
  %v562 = vpop.f32.mrb[0].mxu0
  %v563 = vpop.f32.mrb[0].mxu0
  %v564 = vadd.f32 0.0, %v563
  %v565 = vpop.f32.mrb[0].mxu0
  %566 = vmatprep.mubr.bf16.mxu0 0
  %567 = vmatmul.mubr.bf16.gmra.mrb[0].mxu0 %v370
  %v568 = vpop.f32.mrb[0].mxu0
  %v569 = vadd.f32 0.0, %v568
  %v570 = vpop.f32.mrb[0].mxu0
  %v571 = vpop.f32.mrb[0].mxu0
  %v572 = vadd.f32 0.0, %v571
  %v573 = vpop.f32.mrb[0].mxu0
  %574 = vmatprep.mubr.bf16.mxu0 0
  %575 = vmatmul.mubr.bf16.gmra.mrb[0].mxu0 %v371
  %v576 = vpop.f32.mrb[0].mxu0
  %v577 = vadd.f32 0.0, %v576
  %v578 = vpop.f32.mrb[0].mxu0
  %v579 = vpop.f32.mrb[0].mxu0
  %v580 = vadd.f32 0.0, %v579
  %v581 = vpop.f32.mrb[0].mxu0
  %582 = vmatprep.mubr.bf16.mxu0 0
  %583 = vmatmul.mubr.bf16.gmra.mrb[0].mxu0 %v372
  %v584 = vpop.f32.mrb[0].mxu0
  %v585 = vadd.f32 0.0, %v584
  %v586 = vpop.f32.mrb[0].mxu0
  %v587 = vpop.f32.mrb[0].mxu0
  %v588 = vadd.f32 0.0, %v587
  %v589 = vpop.f32.mrb[0].mxu0
  %590 = vmatprep.mubr.bf16.mxu0 0
  %591 = vmatmul.mubr.bf16.gmra.mrb[0].mxu0 %v373
  %v592 = vpop.f32.mrb[0].mxu0
  %v593 = vadd.f32 0.0, %v592
  %v594 = vpop.f32.mrb[0].mxu0
  %v595 = vpop.f32.mrb[0].mxu0
  %v596 = vadd.f32 0.0, %v595
  %v597 = vpop.f32.mrb[0].mxu0
  %598 = vdwg.mxu0
  %v631 = vunpack.c.l.b16 %v67
  %v632 = vunpack.c.h.b16 %v67
  %v633 = vunpack.c.l.b16 %v68
  %v634 = vunpack.c.h.b16 %v68
  %v635 = vunpack.c.l.b16 %v69
  %v636 = vunpack.c.h.b16 %v69
  %v637 = vunpack.c.l.b16 %v70
  %v638 = vunpack.c.h.b16 %v70
  %v639 = vunpack.c.l.b16 %v71
  %v640 = vunpack.c.h.b16 %v71
  %v641 = vunpack.c.l.b16 %v72
  %v642 = vunpack.c.h.b16 %v72
  %v643 = vunpack.c.l.b16 %v73
  %v644 = vunpack.c.h.b16 %v73
  %v645 = vunpack.c.l.b16 %v74
  %v646 = vunpack.c.h.b16 %v74
  %v647 = vunpack.c.l.b16 %v75
  %v648 = vunpack.c.h.b16 %v75
  %v649 = vunpack.c.l.b16 %v76
  %v650 = vunpack.c.h.b16 %v76
  %v651 = vunpack.c.l.b16 %v77
  %v652 = vunpack.c.h.b16 %v77
  %v653 = vunpack.c.l.b16 %v78
  %v654 = vunpack.c.h.b16 %v78
  %v655 = vunpack.c.l.b16 %v79
  %v656 = vunpack.c.h.b16 %v79
  %v657 = vunpack.c.l.b16 %v80
  %v658 = vunpack.c.h.b16 %v80
  %v659 = vunpack.c.l.b16 %v81
  %v660 = vunpack.c.h.b16 %v81
  %v661 = vunpack.c.l.b16 %v82
  %v662 = vunpack.c.h.b16 %v82
  %v663 = vunpack.c.l.b16 %v83
  %v664 = vunpack.c.h.b16 %v83
  %v665 = vunpack.c.l.b16 %v84
  %v666 = vunpack.c.h.b16 %v84
  %v667 = vunpack.c.l.b16 %v85
  %v668 = vunpack.c.h.b16 %v85
  %v669 = vunpack.c.l.b16 %v86
  %v670 = vunpack.c.h.b16 %v86
  %v671 = vunpack.c.l.b16 %v87
  %v672 = vunpack.c.h.b16 %v87
  %v673 = vunpack.c.l.b16 %v88
  %v674 = vunpack.c.h.b16 %v88
  %v675 = vunpack.c.l.b16 %v89
  %v676 = vunpack.c.h.b16 %v89
  %v677 = vunpack.c.l.b16 %v90
  %v678 = vunpack.c.h.b16 %v90
  %v679 = vunpack.c.l.b16 %v91
  %v680 = vunpack.c.h.b16 %v91
  %v681 = vunpack.c.l.b16 %v92
  %v682 = vunpack.c.h.b16 %v92
  %v683 = vunpack.c.l.b16 %v93
  %v684 = vunpack.c.h.b16 %v93
  %v685 = vunpack.c.l.b16 %v94
  %v686 = vunpack.c.h.b16 %v94
  %v687 = vunpack.c.l.b16 %v95
  %v688 = vunpack.c.h.b16 %v95
  %v689 = vunpack.c.l.b16 %v96
  %v690 = vunpack.c.h.b16 %v96
  %v691 = vunpack.c.l.b16 %v97
  %v692 = vunpack.c.h.b16 %v97
  %v693 = vunpack.c.l.b16 %v98
  %v694 = vunpack.c.h.b16 %v98
  %v695 = vpack.c.b16 %v633, %v631
  %v696 = vpack.c.b16 %v634, %v632
  %v697 = vpack.c.b16 %v637, %v635
  %v698 = vpack.c.b16 %v638, %v636
  %v699 = vpack.c.b16 %v641, %v639
  %v700 = vpack.c.b16 %v642, %v640
  %v701 = vpack.c.b16 %v645, %v643
  %v702 = vpack.c.b16 %v646, %v644
  %v703 = vpack.c.b16 %v649, %v647
  %v704 = vpack.c.b16 %v650, %v648
  %v705 = vpack.c.b16 %v653, %v651
  %v706 = vpack.c.b16 %v654, %v652
  %v707 = vpack.c.b16 %v657, %v655
  %v708 = vpack.c.b16 %v658, %v656
  %v709 = vpack.c.b16 %v661, %v659
  %v710 = vpack.c.b16 %v662, %v660
  %v711 = vpack.c.b16 %v665, %v663
  %v712 = vpack.c.b16 %v666, %v664
  %v713 = vpack.c.b16 %v669, %v667
  %v714 = vpack.c.b16 %v670, %v668
  %v715 = vpack.c.b16 %v673, %v671
  %v716 = vpack.c.b16 %v674, %v672
  %v717 = vpack.c.b16 %v677, %v675
  %v718 = vpack.c.b16 %v678, %v676
  %v719 = vpack.c.b16 %v681, %v679
  %v720 = vpack.c.b16 %v682, %v680
  %v721 = vpack.c.b16 %v685, %v683
  %v722 = vpack.c.b16 %v686, %v684
  %v723 = vpack.c.b16 %v689, %v687
  %v724 = vpack.c.b16 %v690, %v688
  %v725 = vpack.c.b16 %v693, %v691
  %v726 = vpack.c.b16 %v694, %v692
  %v791 = vunpack.c.l.b16 %v246
  %v792 = vunpack.c.l.b16 %v247
  %v793 = vunpack.c.l.b16 %v248
  %v794 = vunpack.c.l.b16 %v249
  %v795 = vunpack.c.l.b16 %v250
  %v796 = vunpack.c.l.b16 %v251
  %v797 = vunpack.c.l.b16 %v252
  %v798 = vunpack.c.l.b16 %v253
  %v799 = vunpack.c.l.b16 %v254
  %v800 = vunpack.c.l.b16 %v255
  %v801 = vunpack.c.l.b16 %v256
  %v802 = vunpack.c.l.b16 %v257
  %v803 = vunpack.c.l.b16 %v258
  %v804 = vunpack.c.l.b16 %v259
  %v805 = vunpack.c.l.b16 %v260
  %v806 = vunpack.c.l.b16 %v261
  %v807 = vunpack.c.l.b16 %v262
  %v808 = vunpack.c.l.b16 %v263
  %v809 = vunpack.c.l.b16 %v264
  %v810 = vunpack.c.l.b16 %v265
  %v811 = vunpack.c.l.b16 %v266
  %v812 = vunpack.c.l.b16 %v267
  %v813 = vunpack.c.l.b16 %v268
  %v814 = vunpack.c.l.b16 %v269
  %v815 = vunpack.c.l.b16 %v270
  %v816 = vunpack.c.l.b16 %v271
  %v817 = vunpack.c.l.b16 %v272
  %v818 = vunpack.c.l.b16 %v273
  %v819 = vunpack.c.l.b16 %v274
  %v820 = vunpack.c.l.b16 %v275
  %v821 = vunpack.c.l.b16 %v276
  %v822 = vunpack.c.l.b16 %v277
  %v823 = vpack.c.b16 %v792, %v791
  %v824 = vpack.c.b16 %v794, %v793
  %v825 = vpack.c.b16 %v796, %v795
  %v826 = vpack.c.b16 %v798, %v797
  %v827 = vpack.c.b16 %v800, %v799
  %v828 = vpack.c.b16 %v802, %v801
  %v829 = vpack.c.b16 %v804, %v803
  %v830 = vpack.c.b16 %v806, %v805
  %v831 = vpack.c.b16 %v808, %v807
  %v832 = vpack.c.b16 %v810, %v809
  %v833 = vpack.c.b16 %v812, %v811
  %v834 = vpack.c.b16 %v814, %v813
  %v835 = vpack.c.b16 %v816, %v815
  %v836 = vpack.c.b16 %v818, %v817
  %v837 = vpack.c.b16 %v820, %v819
  %v838 = vpack.c.b16 %v822, %v821
  %855 = vmatprep.subr.bf16.mxu0 0
  %856 = vmatpush1.bf16.msra.mxu0 %v823
  %857 = vmatprep.subr.bf16.mxu0 0
  %858 = vmatpush1.bf16.msra.mxu0 %v824
  %859 = vmatprep.subr.bf16.mxu0 0
  %860 = vmatpush1.bf16.msra.mxu0 %v825
  %861 = vmatprep.subr.bf16.mxu0 0
  %862 = vmatpush1.bf16.msra.mxu0 %v826
  %863 = vmatprep.subr.bf16.mxu0 0
  %864 = vmatpush1.bf16.msra.mxu0 %v827
  %865 = vmatprep.subr.bf16.mxu0 0
  %866 = vmatpush1.bf16.msra.mxu0 %v828
  %867 = vmatprep.subr.bf16.mxu0 0
  %868 = vmatpush1.bf16.msra.mxu0 %v829
  %869 = vmatprep.subr.bf16.mxu0 0
  %870 = vmatpush1.bf16.msra.mxu0 %v830
  %871 = vmatprep.subr.bf16.mxu0 0
  %872 = vmatpush1.bf16.msra.mxu0 %v831
  %873 = vmatprep.subr.bf16.mxu0 0
  %874 = vmatpush1.bf16.msra.mxu0 %v832
  %875 = vmatprep.subr.bf16.mxu0 0
  %876 = vmatpush1.bf16.msra.mxu0 %v833
  %877 = vmatprep.subr.bf16.mxu0 0
  %878 = vmatpush1.bf16.msra.mxu0 %v834
  %879 = vmatprep.subr.bf16.mxu0 0
  %880 = vmatpush1.bf16.msra.mxu0 %v835
  %881 = vmatprep.subr.bf16.mxu0 0
  %882 = vmatpush1.bf16.msra.mxu0 %v836
  %883 = vmatprep.subr.bf16.mxu0 0
  %884 = vmatpush1.bf16.msra.mxu0 %v837
  %885 = vmatprep.subr.bf16.mxu0 0
  %886 = vmatpush1.bf16.msra.mxu0 %v838
  %887 = vmatprep.mubr.bf16.mxu0 %v696
  %888 = vmatmul.mubr.bf16.gmra.mrb[0].mxu0 %v695
  %v889 = vpop.f32.mrb[0].mxu0
  %v890 = vadd.f32 %v473, %v889
  %v891 = vpop.f32.mrb[0].mxu0
  %v892 = vpop.f32.mrb[0].mxu0
  %v893 = vadd.f32 %v476, %v892
  %v894 = vpop.f32.mrb[0].mxu0
  %895 = vmatprep.mubr.bf16.mxu0 %v698
  %896 = vmatmul.mubr.bf16.gmra.mrb[0].mxu0 %v697
  %v897 = vpop.f32.mrb[0].mxu0
  %v898 = vadd.f32 %v481, %v897
  %v899 = vpop.f32.mrb[0].mxu0
  %v900 = vpop.f32.mrb[0].mxu0
  %v901 = vadd.f32 %v484, %v900
  %v902 = vpop.f32.mrb[0].mxu0
  %903 = vmatprep.mubr.bf16.mxu0 %v700
  %904 = vmatmul.mubr.bf16.gmra.mrb[0].mxu0 %v699
  %v905 = vpop.f32.mrb[0].mxu0
  %v906 = vadd.f32 %v489, %v905
  %v907 = vpop.f32.mrb[0].mxu0
  %v908 = vpop.f32.mrb[0].mxu0
  %v909 = vadd.f32 %v492, %v908
  %v910 = vpop.f32.mrb[0].mxu0
  %911 = vmatprep.mubr.bf16.mxu0 %v702
  %912 = vmatmul.mubr.bf16.gmra.mrb[0].mxu0 %v701
  %v913 = vpop.f32.mrb[0].mxu0
  %v914 = vadd.f32 %v497, %v913
  %v915 = vpop.f32.mrb[0].mxu0
  %v916 = vpop.f32.mrb[0].mxu0
  %v917 = vadd.f32 %v500, %v916
  %v918 = vpop.f32.mrb[0].mxu0
  %919 = vmatprep.mubr.bf16.mxu0 %v704
  %920 = vmatmul.mubr.bf16.gmra.mrb[0].mxu0 %v703
  %v921 = vpop.f32.mrb[0].mxu0
  %v922 = vadd.f32 %v505, %v921
  %v923 = vpop.f32.mrb[0].mxu0
  %v924 = vpop.f32.mrb[0].mxu0
  %v925 = vadd.f32 %v508, %v924
  %v926 = vpop.f32.mrb[0].mxu0
  %927 = vmatprep.mubr.bf16.mxu0 %v706
  %928 = vmatmul.mubr.bf16.gmra.mrb[0].mxu0 %v705
  %v929 = vpop.f32.mrb[0].mxu0
  %v930 = vadd.f32 %v513, %v929
  %v931 = vpop.f32.mrb[0].mxu0
  %v932 = vpop.f32.mrb[0].mxu0
  %v933 = vadd.f32 %v516, %v932
  %v934 = vpop.f32.mrb[0].mxu0
  %935 = vmatprep.mubr.bf16.mxu0 %v708
  %936 = vmatmul.mubr.bf16.gmra.mrb[0].mxu0 %v707
  %v937 = vpop.f32.mrb[0].mxu0
  %v938 = vadd.f32 %v521, %v937
  %v939 = vpop.f32.mrb[0].mxu0
  %v940 = vpop.f32.mrb[0].mxu0
  %v941 = vadd.f32 %v524, %v940
  %v942 = vpop.f32.mrb[0].mxu0
  %943 = vmatprep.mubr.bf16.mxu0 %v710
  %944 = vmatmul.mubr.bf16.gmra.mrb[0].mxu0 %v709
  %v945 = vpop.f32.mrb[0].mxu0
  %v946 = vadd.f32 %v529, %v945
  %v947 = vpop.f32.mrb[0].mxu0
  %v948 = vpop.f32.mrb[0].mxu0
  %v949 = vadd.f32 %v532, %v948
  %v950 = vpop.f32.mrb[0].mxu0
  %951 = vmatprep.mubr.bf16.mxu0 %v712
  %952 = vmatmul.mubr.bf16.gmra.mrb[0].mxu0 %v711
  %v953 = vpop.f32.mrb[0].mxu0
  %v954 = vadd.f32 %v537, %v953
  %v955 = vpop.f32.mrb[0].mxu0
  %v956 = vpop.f32.mrb[0].mxu0
  %v957 = vadd.f32 %v540, %v956
  %v958 = vpop.f32.mrb[0].mxu0
  %959 = vmatprep.mubr.bf16.mxu0 %v714
  %960 = vmatmul.mubr.bf16.gmra.mrb[0].mxu0 %v713
  %v961 = vpop.f32.mrb[0].mxu0
  %v962 = vadd.f32 %v545, %v961
  %v963 = vpop.f32.mrb[0].mxu0
  %v964 = vpop.f32.mrb[0].mxu0
  %v965 = vadd.f32 %v548, %v964
  %v966 = vpop.f32.mrb[0].mxu0
  %967 = vmatprep.mubr.bf16.mxu0 %v716
  %968 = vmatmul.mubr.bf16.gmra.mrb[0].mxu0 %v715
  %v969 = vpop.f32.mrb[0].mxu0
  %v970 = vadd.f32 %v553, %v969
  %v971 = vpop.f32.mrb[0].mxu0
  %v972 = vpop.f32.mrb[0].mxu0
  %v973 = vadd.f32 %v556, %v972
  %v974 = vpop.f32.mrb[0].mxu0
  %975 = vmatprep.mubr.bf16.mxu0 %v718
  %976 = vmatmul.mubr.bf16.gmra.mrb[0].mxu0 %v717
  %v977 = vpop.f32.mrb[0].mxu0
  %v978 = vadd.f32 %v561, %v977
  %v979 = vpop.f32.mrb[0].mxu0
  %v980 = vpop.f32.mrb[0].mxu0
  %v981 = vadd.f32 %v564, %v980
  %v982 = vpop.f32.mrb[0].mxu0
  %983 = vmatprep.mubr.bf16.mxu0 %v720
  %984 = vmatmul.mubr.bf16.gmra.mrb[0].mxu0 %v719
  %v985 = vpop.f32.mrb[0].mxu0
  %v986 = vadd.f32 %v569, %v985
  %v987 = vpop.f32.mrb[0].mxu0
  %v988 = vpop.f32.mrb[0].mxu0
  %v989 = vadd.f32 %v572, %v988
  %v990 = vpop.f32.mrb[0].mxu0
  %991 = vmatprep.mubr.bf16.mxu0 %v722
  %992 = vmatmul.mubr.bf16.gmra.mrb[0].mxu0 %v721
  %v993 = vpop.f32.mrb[0].mxu0
  %v994 = vadd.f32 %v577, %v993
  %v995 = vpop.f32.mrb[0].mxu0
  %v996 = vpop.f32.mrb[0].mxu0
  %v997 = vadd.f32 %v580, %v996
  %v998 = vpop.f32.mrb[0].mxu0
  %999 = vmatprep.mubr.bf16.mxu0 %v724
  %1000 = vmatmul.mubr.bf16.gmra.mrb[0].mxu0 %v723
  %v1001 = vpop.f32.mrb[0].mxu0
  %v1002 = vadd.f32 %v585, %v1001
  %v1003 = vpop.f32.mrb[0].mxu0
  %v1004 = vpop.f32.mrb[0].mxu0
  %v1005 = vadd.f32 %v588, %v1004
  %v1006 = vpop.f32.mrb[0].mxu0
  %1007 = vmatprep.mubr.bf16.mxu0 %v726
  %1008 = vmatmul.mubr.bf16.gmra.mrb[0].mxu0 %v725
  %v1009 = vpop.f32.mrb[0].mxu0
  %v1010 = vadd.f32 %v593, %v1009
  %v1011 = vpop.f32.mrb[0].mxu0
  %v1012 = vpop.f32.mrb[0].mxu0
  %v1013 = vadd.f32 %v596, %v1012
  %v1014 = vpop.f32.mrb[0].mxu0
  %1015 = vdwg.mxu0
  %v1020 = vcombine.high %v232, %v232
  %v1022 = vunpack.c.l.s4 1966171168
  %v1023 = vunpack.c.0.s8 %v1022
  %v1024 = vlaneseq
  %v1025 = vshrl.u32 %v1024, 7
  %v1026 = vsub.s32 %v1023, %v1025
  %v1027 = vrot.slane %v232, %v1026
  %v1029 = vunpack.c.l.s4 1966171168
  %v1030 = vunpack.c.0.s8 %v1029
  %v1031 = vlaneseq
  %v1032 = vshrl.u32 %v1031, 7
  %v1033 = vsub.s32 %v1030, %v1032
  %v1034 = vrot.slane %v1020, %v1033
  %v1035 = vcombine.high %v1027, %v1027
  %v1036 = vcombine.high %v1034, %v1034
  %v1038 = vunpack.c.l.s4 1966171168
  %v1039 = vunpack.c.0.s8 %v1038
  %v1040 = vlaneseq
  %v1041 = vshrl.u32 %v1040, 7
  %v1042 = vsub.s32 %v1039, %v1041
  %v1043 = vrot.slane %v1027, %v1042
  %v1045 = vunpack.c.l.s4 1966171168
  %v1046 = vunpack.c.0.s8 %v1045
  %v1047 = vlaneseq
  %v1048 = vshrl.u32 %v1047, 7
  %v1049 = vsub.s32 %v1046, %v1048
  %v1050 = vrot.slane %v1034, %v1049
  %v1052 = vunpack.c.l.s4 1966171168
  %v1053 = vunpack.c.0.s8 %v1052
  %v1054 = vlaneseq
  %v1055 = vshrl.u32 %v1054, 7
  %v1056 = vsub.s32 %v1053, %v1055
  %v1057 = vrot.slane %v1035, %v1056
  %v1059 = vunpack.c.l.s4 1966171168
  %v1060 = vunpack.c.0.s8 %v1059
  %v1061 = vlaneseq
  %v1062 = vshrl.u32 %v1061, 7
  %v1063 = vsub.s32 %v1060, %v1062
  %v1064 = vrot.slane %v1036, %v1063
  %v1065 = vcombine.high %v1043, %v1043
  %v1066 = vcombine.high %v1050, %v1050
  %v1067 = vcombine.high %v1057, %v1057
  %v1068 = vcombine.high %v1064, %v1064
  %v1069 = vcombine.high %v235, %v235
  %v1071 = vunpack.c.l.s4 1966171168
  %v1072 = vunpack.c.0.s8 %v1071
  %v1073 = vlaneseq
  %v1074 = vshrl.u32 %v1073, 7
  %v1075 = vsub.s32 %v1072, %v1074
  %v1076 = vrot.slane %v235, %v1075
  %v1078 = vunpack.c.l.s4 1966171168
  %v1079 = vunpack.c.0.s8 %v1078
  %v1080 = vlaneseq
  %v1081 = vshrl.u32 %v1080, 7
  %v1082 = vsub.s32 %v1079, %v1081
  %v1083 = vrot.slane %v1069, %v1082
  %v1084 = vcombine.high %v1076, %v1076
  %v1085 = vcombine.high %v1083, %v1083
  %v1087 = vunpack.c.l.s4 1966171168
  %v1088 = vunpack.c.0.s8 %v1087
  %v1089 = vlaneseq
  %v1090 = vshrl.u32 %v1089, 7
  %v1091 = vsub.s32 %v1088, %v1090
  %v1092 = vrot.slane %v1076, %v1091
  %v1094 = vunpack.c.l.s4 1966171168
  %v1095 = vunpack.c.0.s8 %v1094
  %v1096 = vlaneseq
  %v1097 = vshrl.u32 %v1096, 7
  %v1098 = vsub.s32 %v1095, %v1097
  %v1099 = vrot.slane %v1083, %v1098
  %v1101 = vunpack.c.l.s4 1966171168
  %v1102 = vunpack.c.0.s8 %v1101
  %v1103 = vlaneseq
  %v1104 = vshrl.u32 %v1103, 7
  %v1105 = vsub.s32 %v1102, %v1104
  %v1106 = vrot.slane %v1084, %v1105
  %v1108 = vunpack.c.l.s4 1966171168
  %v1109 = vunpack.c.0.s8 %v1108
  %v1110 = vlaneseq
  %v1111 = vshrl.u32 %v1110, 7
  %v1112 = vsub.s32 %v1109, %v1111
  %v1113 = vrot.slane %v1085, %v1112
  %v1114 = vcombine.high %v1092, %v1092
  %v1115 = vcombine.high %v1099, %v1099
  %v1116 = vcombine.high %v1106, %v1106
  %v1117 = vcombine.high %v1113, %v1113
  %v1118 = vcombine.high %v240, %v240
  %v1120 = vunpack.c.l.s4 1966171168
  %v1121 = vunpack.c.0.s8 %v1120
  %v1122 = vlaneseq
  %v1123 = vshrl.u32 %v1122, 7
  %v1124 = vsub.s32 %v1121, %v1123
  %v1125 = vrot.slane %v240, %v1124
  %v1127 = vunpack.c.l.s4 1966171168
  %v1128 = vunpack.c.0.s8 %v1127
  %v1129 = vlaneseq
  %v1130 = vshrl.u32 %v1129, 7
  %v1131 = vsub.s32 %v1128, %v1130
  %v1132 = vrot.slane %v1118, %v1131
  %v1133 = vcombine.high %v1125, %v1125
  %v1134 = vcombine.high %v1132, %v1132
  %v1136 = vunpack.c.l.s4 1966171168
  %v1137 = vunpack.c.0.s8 %v1136
  %v1138 = vlaneseq
  %v1139 = vshrl.u32 %v1138, 7
  %v1140 = vsub.s32 %v1137, %v1139
  %v1141 = vrot.slane %v1125, %v1140
  %v1143 = vunpack.c.l.s4 1966171168
  %v1144 = vunpack.c.0.s8 %v1143
  %v1145 = vlaneseq
  %v1146 = vshrl.u32 %v1145, 7
  %v1147 = vsub.s32 %v1144, %v1146
  %v1148 = vrot.slane %v1132, %v1147
  %v1150 = vunpack.c.l.s4 1966171168
  %v1151 = vunpack.c.0.s8 %v1150
  %v1152 = vlaneseq
  %v1153 = vshrl.u32 %v1152, 7
  %v1154 = vsub.s32 %v1151, %v1153
  %v1155 = vrot.slane %v1133, %v1154
  %v1157 = vunpack.c.l.s4 1966171168
  %v1158 = vunpack.c.0.s8 %v1157
  %v1159 = vlaneseq
  %v1160 = vshrl.u32 %v1159, 7
  %v1161 = vsub.s32 %v1158, %v1160
  %v1162 = vrot.slane %v1134, %v1161
  %v1163 = vcombine.high %v1141, %v1141
  %v1164 = vcombine.high %v1148, %v1148
  %v1165 = vcombine.high %v1155, %v1155
  %v1166 = vcombine.high %v1162, %v1162
  %v1167 = vcombine.high %v243, %v243
  %v1169 = vunpack.c.l.s4 1966171168
  %v1170 = vunpack.c.0.s8 %v1169
  %v1171 = vlaneseq
  %v1172 = vshrl.u32 %v1171, 7
  %v1173 = vsub.s32 %v1170, %v1172
  %v1174 = vrot.slane %v243, %v1173
  %v1176 = vunpack.c.l.s4 1966171168
  %v1177 = vunpack.c.0.s8 %v1176
  %v1178 = vlaneseq
  %v1179 = vshrl.u32 %v1178, 7
  %v1180 = vsub.s32 %v1177, %v1179
  %v1181 = vrot.slane %v1167, %v1180
  %v1182 = vcombine.high %v1174, %v1174
  %v1183 = vcombine.high %v1181, %v1181
  %v1185 = vunpack.c.l.s4 1966171168
  %v1186 = vunpack.c.0.s8 %v1185
  %v1187 = vlaneseq
  %v1188 = vshrl.u32 %v1187, 7
  %v1189 = vsub.s32 %v1186, %v1188
  %v1190 = vrot.slane %v1174, %v1189
  %v1192 = vunpack.c.l.s4 1966171168
  %v1193 = vunpack.c.0.s8 %v1192
  %v1194 = vlaneseq
  %v1195 = vshrl.u32 %v1194, 7
  %v1196 = vsub.s32 %v1193, %v1195
  %v1197 = vrot.slane %v1181, %v1196
  %v1199 = vunpack.c.l.s4 1966171168
  %v1200 = vunpack.c.0.s8 %v1199
  %v1201 = vlaneseq
  %v1202 = vshrl.u32 %v1201, 7
  %v1203 = vsub.s32 %v1200, %v1202
  %v1204 = vrot.slane %v1182, %v1203
  %v1206 = vunpack.c.l.s4 1966171168
  %v1207 = vunpack.c.0.s8 %v1206
  %v1208 = vlaneseq
  %v1209 = vshrl.u32 %v1208, 7
  %v1210 = vsub.s32 %v1207, %v1209
  %v1211 = vrot.slane %v1183, %v1210
  %v1212 = vcombine.high %v1190, %v1190
  %v1213 = vcombine.high %v1197, %v1197
  %v1214 = vcombine.high %v1204, %v1204
  %v1215 = vcombine.high %v1211, %v1211
  %v1216 = vlaneseq
  %v1217 = vshrl.u32 %v1216, 7
  %v1218 = vsub.s32 0, %v1217
  %v1219 = vrot.slane %v1043, %v1218
  %v1220 = vlaneseq
  %v1221 = vshrl.u32 %v1220, 7
  %v1222 = vsub.s32 0, %v1221
  %v1223 = vrot.slane %v1057, %v1222
  %v1224 = vlaneseq
  %v1225 = vshrl.u32 %v1224, 7
  %v1226 = vsub.s32 0, %v1225
  %v1227 = vrot.slane %v1065, %v1226
  %v1228 = vlaneseq
  %v1229 = vshrl.u32 %v1228, 7
  %v1230 = vsub.s32 0, %v1229
  %v1231 = vrot.slane %v1067, %v1230
  %v1232 = vlaneseq
  %v1233 = vshrl.u32 %v1232, 7
  %v1234 = vsub.s32 0, %v1233
  %v1235 = vrot.slane %v1050, %v1234
  %v1236 = vlaneseq
  %v1237 = vshrl.u32 %v1236, 7
  %v1238 = vsub.s32 0, %v1237
  %v1239 = vrot.slane %v1064, %v1238
  %v1240 = vlaneseq
  %v1241 = vshrl.u32 %v1240, 7
  %v1242 = vsub.s32 0, %v1241
  %v1243 = vrot.slane %v1066, %v1242
  %v1244 = vlaneseq
  %v1245 = vshrl.u32 %v1244, 7
  %v1246 = vsub.s32 0, %v1245
  %v1247 = vrot.slane %v1068, %v1246
  %v1248 = vlaneseq
  %v1249 = vshrl.u32 %v1248, 7
  %v1250 = vsub.s32 0, %v1249
  %v1251 = vrot.slane %v1092, %v1250
  %v1252 = vlaneseq
  %v1253 = vshrl.u32 %v1252, 7
  %v1254 = vsub.s32 0, %v1253
  %v1255 = vrot.slane %v1106, %v1254
  %v1256 = vlaneseq
  %v1257 = vshrl.u32 %v1256, 7
  %v1258 = vsub.s32 0, %v1257
  %v1259 = vrot.slane %v1114, %v1258
  %v1260 = vlaneseq
  %v1261 = vshrl.u32 %v1260, 7
  %v1262 = vsub.s32 0, %v1261
  %v1263 = vrot.slane %v1116, %v1262
  %v1264 = vlaneseq
  %v1265 = vshrl.u32 %v1264, 7
  %v1266 = vsub.s32 0, %v1265
  %v1267 = vrot.slane %v1099, %v1266
  %v1268 = vlaneseq
  %v1269 = vshrl.u32 %v1268, 7
  %v1270 = vsub.s32 0, %v1269
  %v1271 = vrot.slane %v1113, %v1270
  %v1272 = vlaneseq
  %v1273 = vshrl.u32 %v1272, 7
  %v1274 = vsub.s32 0, %v1273
  %v1275 = vrot.slane %v1115, %v1274
  %v1276 = vlaneseq
  %v1277 = vshrl.u32 %v1276, 7
  %v1278 = vsub.s32 0, %v1277
  %v1279 = vrot.slane %v1117, %v1278
  %v1280 = vlaneseq
  %v1281 = vshrl.u32 %v1280, 7
  %v1282 = vsub.s32 0, %v1281
  %v1283 = vrot.slane %v1141, %v1282
  %v1284 = vlaneseq
  %v1285 = vshrl.u32 %v1284, 7
  %v1286 = vsub.s32 0, %v1285
  %v1287 = vrot.slane %v1155, %v1286
  %v1288 = vlaneseq
  %v1289 = vshrl.u32 %v1288, 7
  %v1290 = vsub.s32 0, %v1289
  %v1291 = vrot.slane %v1163, %v1290
  %v1292 = vlaneseq
  %v1293 = vshrl.u32 %v1292, 7
  %v1294 = vsub.s32 0, %v1293
  %v1295 = vrot.slane %v1165, %v1294
  %v1296 = vlaneseq
  %v1297 = vshrl.u32 %v1296, 7
  %v1298 = vsub.s32 0, %v1297
  %v1299 = vrot.slane %v1148, %v1298
  %v1300 = vlaneseq
  %v1301 = vshrl.u32 %v1300, 7
  %v1302 = vsub.s32 0, %v1301
  %v1303 = vrot.slane %v1162, %v1302
  %v1304 = vlaneseq
  %v1305 = vshrl.u32 %v1304, 7
  %v1306 = vsub.s32 0, %v1305
  %v1307 = vrot.slane %v1164, %v1306
  %v1308 = vlaneseq
  %v1309 = vshrl.u32 %v1308, 7
  %v1310 = vsub.s32 0, %v1309
  %v1311 = vrot.slane %v1166, %v1310
  %v1312 = vlaneseq
  %v1313 = vshrl.u32 %v1312, 7
  %v1314 = vsub.s32 0, %v1313
  %v1315 = vrot.slane %v1190, %v1314
  %v1316 = vlaneseq
  %v1317 = vshrl.u32 %v1316, 7
  %v1318 = vsub.s32 0, %v1317
  %v1319 = vrot.slane %v1204, %v1318
  %v1320 = vlaneseq
  %v1321 = vshrl.u32 %v1320, 7
  %v1322 = vsub.s32 0, %v1321
  %v1323 = vrot.slane %v1212, %v1322
  %v1324 = vlaneseq
  %v1325 = vshrl.u32 %v1324, 7
  %v1326 = vsub.s32 0, %v1325
  %v1327 = vrot.slane %v1214, %v1326
  %v1328 = vlaneseq
  %v1329 = vshrl.u32 %v1328, 7
  %v1330 = vsub.s32 0, %v1329
  %v1331 = vrot.slane %v1197, %v1330
  %v1332 = vlaneseq
  %v1333 = vshrl.u32 %v1332, 7
  %v1334 = vsub.s32 0, %v1333
  %v1335 = vrot.slane %v1211, %v1334
  %v1336 = vlaneseq
  %v1337 = vshrl.u32 %v1336, 7
  %v1338 = vsub.s32 0, %v1337
  %v1339 = vrot.slane %v1213, %v1338
  %v1340 = vlaneseq
  %v1341 = vshrl.u32 %v1340, 7
  %v1342 = vsub.s32 0, %v1341
  %v1343 = vrot.slane %v1215, %v1342
  %v1376 = vadd.f32 %v890, %v1219
  %v1377 = vadd.f32 %v893, %v1223
  %v1378 = vadd.f32 %v898, %v1227
  %v1379 = vadd.f32 %v901, %v1231
  %v1380 = vadd.f32 %v906, %v1235
  %v1381 = vadd.f32 %v909, %v1239
  %v1382 = vadd.f32 %v914, %v1243
  %v1383 = vadd.f32 %v917, %v1247
  %v1384 = vadd.f32 %v922, %v1251
  %v1385 = vadd.f32 %v925, %v1255
  %v1386 = vadd.f32 %v930, %v1259
  %v1387 = vadd.f32 %v933, %v1263
  %v1388 = vadd.f32 %v938, %v1267
  %v1389 = vadd.f32 %v941, %v1271
  %v1390 = vadd.f32 %v946, %v1275
  %v1391 = vadd.f32 %v949, %v1279
  %v1392 = vadd.f32 %v954, %v1283
  %v1393 = vadd.f32 %v957, %v1287
  %v1394 = vadd.f32 %v962, %v1291
  %v1395 = vadd.f32 %v965, %v1295
  %v1396 = vadd.f32 %v970, %v1299
  %v1397 = vadd.f32 %v973, %v1303
  %v1398 = vadd.f32 %v978, %v1307
  %v1399 = vadd.f32 %v981, %v1311
  %v1400 = vadd.f32 %v986, %v1315
  %v1401 = vadd.f32 %v989, %v1319
  %v1402 = vadd.f32 %v994, %v1323
  %v1403 = vadd.f32 %v997, %v1327
  %v1404 = vadd.f32 %v1002, %v1331
  %v1405 = vadd.f32 %v1005, %v1335
  %v1406 = vadd.f32 %v1010, %v1339
  %v1407 = vadd.f32 %v1013, %v1343
  %v1408 = vld [vmem:[%s6] sm:$0x1]
  %v1410 = vlaneseq
  %v1411 = vshrl.u32 %v1410, 7
  %v1412 = vsub.s32 0, %v1411
  %v1413 = vrot.slane %v1408, %v1412
  %v1415 = vadd.f32 %v1376, %v1413
  %v1416 = vadd.f32 %v1377, %v1413
  %v1417 = vadd.f32 %v1378, %v1413
  %v1418 = vadd.f32 %v1379, %v1413
  %v1419 = vadd.f32 %v1380, %v1413
  %v1420 = vadd.f32 %v1381, %v1413
  %v1421 = vadd.f32 %v1382, %v1413
  %v1422 = vadd.f32 %v1383, %v1413
  %v1423 = vadd.f32 %v1384, %v1413
  %v1424 = vadd.f32 %v1385, %v1413
  %v1425 = vadd.f32 %v1386, %v1413
  %v1426 = vadd.f32 %v1387, %v1413
  %v1427 = vadd.f32 %v1388, %v1413
  %v1428 = vadd.f32 %v1389, %v1413
  %v1429 = vadd.f32 %v1390, %v1413
  %v1430 = vadd.f32 %v1391, %v1413
  %v1431 = vadd.f32 %v1392, %v1413
  %v1432 = vadd.f32 %v1393, %v1413
  %v1433 = vadd.f32 %v1394, %v1413
  %v1434 = vadd.f32 %v1395, %v1413
  %v1435 = vadd.f32 %v1396, %v1413
  %v1436 = vadd.f32 %v1397, %v1413
  %v1437 = vadd.f32 %v1398, %v1413
  %v1438 = vadd.f32 %v1399, %v1413
  %v1439 = vadd.f32 %v1400, %v1413
  %v1440 = vadd.f32 %v1401, %v1413
  %v1441 = vadd.f32 %v1402, %v1413
  %v1442 = vadd.f32 %v1403, %v1413
  %v1443 = vadd.f32 %v1404, %v1413
  %v1444 = vadd.f32 %v1405, %v1413
  %v1445 = vadd.f32 %v1406, %v1413
  %v1446 = vadd.f32 %v1407, %v1413
  %v1447 = vmax.f32 %v1415, 0.0
  %v1448 = vmax.f32 %v1416, 0.0
  %v1449 = vmax.f32 %v1417, 0.0
  %v1450 = vmax.f32 %v1418, 0.0
  %v1451 = vmax.f32 %v1419, 0.0
  %v1452 = vmax.f32 %v1420, 0.0
  %v1453 = vmax.f32 %v1421, 0.0
  %v1454 = vmax.f32 %v1422, 0.0
  %v1455 = vmax.f32 %v1423, 0.0
  %v1456 = vmax.f32 %v1424, 0.0
  %v1457 = vmax.f32 %v1425, 0.0
  %v1458 = vmax.f32 %v1426, 0.0
  %v1459 = vmax.f32 %v1427, 0.0
  %v1460 = vmax.f32 %v1428, 0.0
  %v1461 = vmax.f32 %v1429, 0.0
  %v1462 = vmax.f32 %v1430, 0.0
  %v1463 = vmax.f32 %v1431, 0.0
  %v1464 = vmax.f32 %v1432, 0.0
  %v1465 = vmax.f32 %v1433, 0.0
  %v1466 = vmax.f32 %v1434, 0.0
  %v1467 = vmax.f32 %v1435, 0.0
  %v1468 = vmax.f32 %v1436, 0.0
  %v1469 = vmax.f32 %v1437, 0.0
  %v1470 = vmax.f32 %v1438, 0.0
  %v1471 = vmax.f32 %v1439, 0.0
  %v1472 = vmax.f32 %v1440, 0.0
  %v1473 = vmax.f32 %v1441, 0.0
  %v1474 = vmax.f32 %v1442, 0.0
  %v1475 = vmax.f32 %v1443, 0.0
  %v1476 = vmax.f32 %v1444, 0.0
  %v1477 = vmax.f32 %v1445, 0.0
  %v1478 = vmax.f32 %v1446, 0.0
  %v1479 = vpack.c.bf16 %v1448, %v1447
  %v1480 = vpack.c.bf16 %v1450, %v1449
  %v1481 = vpack.c.bf16 %v1452, %v1451
  %v1482 = vpack.c.bf16 %v1454, %v1453
  %v1483 = vpack.c.bf16 %v1456, %v1455
  %v1484 = vpack.c.bf16 %v1458, %v1457
  %v1485 = vpack.c.bf16 %v1460, %v1459
  %v1486 = vpack.c.bf16 %v1462, %v1461
  %v1487 = vpack.c.bf16 %v1464, %v1463
  %v1488 = vpack.c.bf16 %v1466, %v1465
  %v1489 = vpack.c.bf16 %v1468, %v1467
  %v1490 = vpack.c.bf16 %v1470, %v1469
  %v1491 = vpack.c.bf16 %v1472, %v1471
  %v1492 = vpack.c.bf16 %v1474, %v1473
  %v1493 = vpack.c.bf16 %v1476, %v1475
  %v1494 = vpack.c.bf16 %v1478, %v1477
  %v1495 = vld [vmem:[%s7] sm:$0xf]
  %v1496 = vld [vmem:[%s7 + $0x4] sm:$0xf]
  %v1497 = vld [vmem:[%s7 + $0x8] sm:$0xf]
  %v1498 = vld [vmem:[%s7 + $0xc] sm:$0xf]
  %v1499 = vld [vmem:[%s7 + $0x10] sm:$0xf]
  %v1500 = vld [vmem:[%s7 + $0x14] sm:$0xf]
  %v1501 = vld [vmem:[%s7 + $0x18] sm:$0xf]
  %v1502 = vld [vmem:[%s7 + $0x1c] sm:$0xf]
  %v1503 = vld [vmem:[%s7 + $0x20] sm:$0xf]
  %v1504 = vld [vmem:[%s7 + $0x24] sm:$0xf]
  %v1505 = vld [vmem:[%s7 + $0x28] sm:$0xf]
  %v1506 = vld [vmem:[%s7 + $0x2c] sm:$0xf]
  %v1507 = vld [vmem:[%s7 + $0x30] sm:$0xf]
  %v1508 = vld [vmem:[%s7 + $0x34] sm:$0xf]
  %v1509 = vld [vmem:[%s7 + $0x38] sm:$0xf]
  %v1510 = vld [vmem:[%s7 + $0x3c] sm:$0xf]
  %v1511 = vld [vmem:[%s8] sm:$0x1]
  %v1513 = vlaneseq
  %v1514 = vshrl.u32 %v1513, 7
  %v1515 = vsub.s32 0, %v1514
  %v1516 = vrot.slane %v1511, %v1515
  %v1534 = vunpack.c.l.b16 %v1495
  %v1535 = vunpack.c.l.b16 %v1496
  %v1536 = vunpack.c.l.b16 %v1497
  %v1537 = vunpack.c.l.b16 %v1498
  %v1538 = vunpack.c.l.b16 %v1499
  %v1539 = vunpack.c.l.b16 %v1500
  %v1540 = vunpack.c.l.b16 %v1501
  %v1541 = vunpack.c.l.b16 %v1502
  %v1542 = vunpack.c.l.b16 %v1503
  %v1543 = vunpack.c.l.b16 %v1504
  %v1544 = vunpack.c.l.b16 %v1505
  %v1545 = vunpack.c.l.b16 %v1506
  %v1546 = vunpack.c.l.b16 %v1507
  %v1547 = vunpack.c.l.b16 %v1508
  %v1548 = vunpack.c.l.b16 %v1509
  %v1549 = vunpack.c.l.b16 %v1510
  %v1550 = vpack.c.b16 %v1535, %v1534
  %v1551 = vpack.c.b16 %v1537, %v1536
  %v1552 = vpack.c.b16 %v1539, %v1538
  %v1553 = vpack.c.b16 %v1541, %v1540
  %v1554 = vpack.c.b16 %v1543, %v1542
  %v1555 = vpack.c.b16 %v1545, %v1544
  %v1556 = vpack.c.b16 %v1547, %v1546
  %v1557 = vpack.c.b16 %v1549, %v1548
  %1566 = vmatprep.subr.bf16.mxu0 0
  %1567 = vmatpush1.bf16.msra.mxu0 %v1550
  %1568 = vmatprep.subr.bf16.mxu0 0
  %1569 = vmatpush1.bf16.msra.mxu0 %v1551
  %1570 = vmatprep.subr.bf16.mxu0 0
  %1571 = vmatpush1.bf16.msra.mxu0 %v1552
  %1572 = vmatprep.subr.bf16.mxu0 0
  %1573 = vmatpush1.bf16.msra.mxu0 %v1553
  %1574 = vmatprep.subr.bf16.mxu0 0
  %1575 = vmatpush1.bf16.msra.mxu0 %v1554
  %1576 = vmatprep.subr.bf16.mxu0 0
  %1577 = vmatpush1.bf16.msra.mxu0 %v1555
  %1578 = vmatprep.subr.bf16.mxu0 0
  %1579 = vmatpush1.bf16.msra.mxu0 %v1556
  %1580 = vmatprep.subr.bf16.mxu0 0
  %1581 = vmatpush1.bf16.msra.mxu0 %v1557
  %1582 = vmatprep.subr.bf16.mxu0 0
  %1583 = vmatpush1.bf16.msra.mxu0 0
  %1584 = vmatprep.subr.bf16.mxu0 0
  %1585 = vmatpush1.bf16.msra.mxu0 0
  %1586 = vmatprep.subr.bf16.mxu0 0
  %1587 = vmatpush1.bf16.msra.mxu0 0
  %1588 = vmatprep.subr.bf16.mxu0 0
  %1589 = vmatpush1.bf16.msra.mxu0 0
  %1590 = vmatprep.subr.bf16.mxu0 0
  %1591 = vmatpush1.bf16.msra.mxu0 0
  %1592 = vmatprep.subr.bf16.mxu0 0
  %1593 = vmatpush1.bf16.msra.mxu0 0
  %1594 = vmatprep.subr.bf16.mxu0 0
  %1595 = vmatpush1.bf16.msra.mxu0 0
  %1596 = vmatprep.subr.bf16.mxu0 0
  %1597 = vmatpush1.bf16.msra.mxu0 0
  %1598 = vmatprep.mubr.bf16.mxu0 0
  %1599 = vmatmul.mubr.bf16.gmra.mrb[0].mxu0 %v1479
  %v1600 = vpop.f32.mrb[0].mxu0
  %v1601 = vadd.f32 %v1516, %v1600
  %v1602 = vpop.f32.mrb[0].mxu0
  %v1603 = vpop.f32.mrb[0].mxu0
  %v1604 = vadd.f32 %v1516, %v1603
  %v1605 = vpop.f32.mrb[0].mxu0
  %1606 = vmatprep.mubr.bf16.mxu0 0
  %1607 = vmatmul.mubr.bf16.gmra.mrb[0].mxu0 %v1480
  %v1608 = vpop.f32.mrb[0].mxu0
  %v1609 = vadd.f32 %v1516, %v1608
  %v1610 = vpop.f32.mrb[0].mxu0
  %v1611 = vpop.f32.mrb[0].mxu0
  %v1612 = vadd.f32 %v1516, %v1611
  %v1613 = vpop.f32.mrb[0].mxu0
  %1614 = vmatprep.mubr.bf16.mxu0 0
  %1615 = vmatmul.mubr.bf16.gmra.mrb[0].mxu0 %v1481
  %v1616 = vpop.f32.mrb[0].mxu0
  %v1617 = vadd.f32 %v1516, %v1616
  %v1618 = vpop.f32.mrb[0].mxu0
  %v1619 = vpop.f32.mrb[0].mxu0
  %v1620 = vadd.f32 %v1516, %v1619
  %v1621 = vpop.f32.mrb[0].mxu0
  %1622 = vmatprep.mubr.bf16.mxu0 0
  %1623 = vmatmul.mubr.bf16.gmra.mrb[0].mxu0 %v1482
  %v1624 = vpop.f32.mrb[0].mxu0
  %v1625 = vadd.f32 %v1516, %v1624
  %v1626 = vpop.f32.mrb[0].mxu0
  %v1627 = vpop.f32.mrb[0].mxu0
  %v1628 = vadd.f32 %v1516, %v1627
  %v1629 = vpop.f32.mrb[0].mxu0
  %1630 = vmatprep.mubr.bf16.mxu0 0
  %1631 = vmatmul.mubr.bf16.gmra.mrb[0].mxu0 %v1483
  %v1632 = vpop.f32.mrb[0].mxu0
  %v1633 = vadd.f32 %v1516, %v1632
  %v1634 = vpop.f32.mrb[0].mxu0
  %v1635 = vpop.f32.mrb[0].mxu0
  %v1636 = vadd.f32 %v1516, %v1635
  %v1637 = vpop.f32.mrb[0].mxu0
  %1638 = vmatprep.mubr.bf16.mxu0 0
  %1639 = vmatmul.mubr.bf16.gmra.mrb[0].mxu0 %v1484
  %v1640 = vpop.f32.mrb[0].mxu0
  %v1641 = vadd.f32 %v1516, %v1640
  %v1642 = vpop.f32.mrb[0].mxu0
  %v1643 = vpop.f32.mrb[0].mxu0
  %v1644 = vadd.f32 %v1516, %v1643
  %v1645 = vpop.f32.mrb[0].mxu0
  %1646 = vmatprep.mubr.bf16.mxu0 0
  %1647 = vmatmul.mubr.bf16.gmra.mrb[0].mxu0 %v1485
  %v1648 = vpop.f32.mrb[0].mxu0
  %v1649 = vadd.f32 %v1516, %v1648
  %v1650 = vpop.f32.mrb[0].mxu0
  %v1651 = vpop.f32.mrb[0].mxu0
  %v1652 = vadd.f32 %v1516, %v1651
  %v1653 = vpop.f32.mrb[0].mxu0
  %1654 = vmatprep.mubr.bf16.mxu0 0
  %1655 = vmatmul.mubr.bf16.gmra.mrb[0].mxu0 %v1486
  %v1656 = vpop.f32.mrb[0].mxu0
  %v1657 = vadd.f32 %v1516, %v1656
  %v1658 = vpop.f32.mrb[0].mxu0
  %v1659 = vpop.f32.mrb[0].mxu0
  %v1660 = vadd.f32 %v1516, %v1659
  %v1661 = vpop.f32.mrb[0].mxu0
  %1662 = vmatprep.mubr.bf16.mxu0 0
  %1663 = vmatmul.mubr.bf16.gmra.mrb[0].mxu0 %v1487
  %v1664 = vpop.f32.mrb[0].mxu0
  %v1665 = vadd.f32 %v1516, %v1664
  %v1666 = vpop.f32.mrb[0].mxu0
  %v1667 = vpop.f32.mrb[0].mxu0
  %v1668 = vadd.f32 %v1516, %v1667
  %v1669 = vpop.f32.mrb[0].mxu0
  %1670 = vmatprep.mubr.bf16.mxu0 0
  %1671 = vmatmul.mubr.bf16.gmra.mrb[0].mxu0 %v1488
  %v1672 = vpop.f32.mrb[0].mxu0
  %v1673 = vadd.f32 %v1516, %v1672
  %v1674 = vpop.f32.mrb[0].mxu0
  %v1675 = vpop.f32.mrb[0].mxu0
  %v1676 = vadd.f32 %v1516, %v1675
  %v1677 = vpop.f32.mrb[0].mxu0
  %1678 = vmatprep.mubr.bf16.mxu0 0
  %1679 = vmatmul.mubr.bf16.gmra.mrb[0].mxu0 %v1489
  %v1680 = vpop.f32.mrb[0].mxu0
  %v1681 = vadd.f32 %v1516, %v1680
  %v1682 = vpop.f32.mrb[0].mxu0
  %v1683 = vpop.f32.mrb[0].mxu0
  %v1684 = vadd.f32 %v1516, %v1683
  %v1685 = vpop.f32.mrb[0].mxu0
  %1686 = vmatprep.mubr.bf16.mxu0 0
  %1687 = vmatmul.mubr.bf16.gmra.mrb[0].mxu0 %v1490
  %v1688 = vpop.f32.mrb[0].mxu0
  %v1689 = vadd.f32 %v1516, %v1688
  %v1690 = vpop.f32.mrb[0].mxu0
  %v1691 = vpop.f32.mrb[0].mxu0
  %v1692 = vadd.f32 %v1516, %v1691
  %v1693 = vpop.f32.mrb[0].mxu0
  %1694 = vmatprep.mubr.bf16.mxu0 0
  %1695 = vmatmul.mubr.bf16.gmra.mrb[0].mxu0 %v1491
  %v1696 = vpop.f32.mrb[0].mxu0
  %v1697 = vadd.f32 %v1516, %v1696
  %v1698 = vpop.f32.mrb[0].mxu0
  %v1699 = vpop.f32.mrb[0].mxu0
  %v1700 = vadd.f32 %v1516, %v1699
  %v1701 = vpop.f32.mrb[0].mxu0
  %1702 = vmatprep.mubr.bf16.mxu0 0
  %1703 = vmatmul.mubr.bf16.gmra.mrb[0].mxu0 %v1492
  %v1704 = vpop.f32.mrb[0].mxu0
  %v1705 = vadd.f32 %v1516, %v1704
  %v1706 = vpop.f32.mrb[0].mxu0
  %v1707 = vpop.f32.mrb[0].mxu0
  %v1708 = vadd.f32 %v1516, %v1707
  %v1709 = vpop.f32.mrb[0].mxu0
  %1710 = vmatprep.mubr.bf16.mxu0 0
  %1711 = vmatmul.mubr.bf16.gmra.mrb[0].mxu0 %v1493
  %v1712 = vpop.f32.mrb[0].mxu0
  %v1713 = vadd.f32 %v1516, %v1712
  %v1714 = vpop.f32.mrb[0].mxu0
  %v1715 = vpop.f32.mrb[0].mxu0
  %v1716 = vadd.f32 %v1516, %v1715
  %v1717 = vpop.f32.mrb[0].mxu0
  %1718 = vmatprep.mubr.bf16.mxu0 0
  %1719 = vmatmul.mubr.bf16.gmra.mrb[0].mxu0 %v1494
  %v1720 = vpop.f32.mrb[0].mxu0
  %v1721 = vadd.f32 %v1516, %v1720
  %v1722 = vpop.f32.mrb[0].mxu0
  %v1723 = vpop.f32.mrb[0].mxu0
  %v1724 = vadd.f32 %v1516, %v1723
  %v1725 = vpop.f32.mrb[0].mxu0
  %1726 = vdwg.mxu0
  %v1727 = vmax.f32 %v1601, 0.0
  %v1728 = vmax.f32 %v1604, 0.0
  %v1729 = vmax.f32 %v1609, 0.0
  %v1730 = vmax.f32 %v1612, 0.0
  %v1731 = vmax.f32 %v1617, 0.0
  %v1732 = vmax.f32 %v1620, 0.0
  %v1733 = vmax.f32 %v1625, 0.0
  %v1734 = vmax.f32 %v1628, 0.0
  %v1735 = vmax.f32 %v1633, 0.0
  %v1736 = vmax.f32 %v1636, 0.0
  %v1737 = vmax.f32 %v1641, 0.0
  %v1738 = vmax.f32 %v1644, 0.0
  %v1739 = vmax.f32 %v1649, 0.0
  %v1740 = vmax.f32 %v1652, 0.0
  %v1741 = vmax.f32 %v1657, 0.0
  %v1742 = vmax.f32 %v1660, 0.0
  %v1743 = vmax.f32 %v1665, 0.0
  %v1744 = vmax.f32 %v1668, 0.0
  %v1745 = vmax.f32 %v1673, 0.0
  %v1746 = vmax.f32 %v1676, 0.0
  %v1747 = vmax.f32 %v1681, 0.0
  %v1748 = vmax.f32 %v1684, 0.0
  %v1749 = vmax.f32 %v1689, 0.0
  %v1750 = vmax.f32 %v1692, 0.0
  %v1751 = vmax.f32 %v1697, 0.0
  %v1752 = vmax.f32 %v1700, 0.0
  %v1753 = vmax.f32 %v1705, 0.0
  %v1754 = vmax.f32 %v1708, 0.0
  %v1755 = vmax.f32 %v1713, 0.0
  %v1756 = vmax.f32 %v1716, 0.0
  %v1757 = vmax.f32 %v1721, 0.0
  %v1758 = vmax.f32 %v1724, 0.0
  %v1759 = vrot.slane %v1727, 4
  %v1760 = vadd.f32 %v1727, %v1759
  %v1761 = vrot.slane %v1760, 2
  %v1762 = vadd.f32 %v1760, %v1761
  %v1763 = vrot.slane %v1762, 1
  %v1764 = vadd.f32 %v1762, %v1763
  %v1765 = vrot.slane %v1728, 4
  %v1766 = vadd.f32 %v1728, %v1765
  %v1767 = vrot.slane %v1766, 2
  %v1768 = vadd.f32 %v1766, %v1767
  %v1769 = vrot.slane %v1768, 1
  %v1770 = vadd.f32 %v1768, %v1769
  %v1771 = vrot.slane %v1729, 4
  %v1772 = vadd.f32 %v1729, %v1771
  %v1773 = vrot.slane %v1772, 2
  %v1774 = vadd.f32 %v1772, %v1773
  %v1775 = vrot.slane %v1774, 1
  %v1776 = vadd.f32 %v1774, %v1775
  %v1777 = vrot.slane %v1730, 4
  %v1778 = vadd.f32 %v1730, %v1777
  %v1779 = vrot.slane %v1778, 2
  %v1780 = vadd.f32 %v1778, %v1779
  %v1781 = vrot.slane %v1780, 1
  %v1782 = vadd.f32 %v1780, %v1781
  %v1783 = vrot.slane %v1731, 4
  %v1784 = vadd.f32 %v1731, %v1783
  %v1785 = vrot.slane %v1784, 2
  %v1786 = vadd.f32 %v1784, %v1785
  %v1787 = vrot.slane %v1786, 1
  %v1788 = vadd.f32 %v1786, %v1787
  %v1789 = vrot.slane %v1732, 4
  %v1790 = vadd.f32 %v1732, %v1789
  %v1791 = vrot.slane %v1790, 2
  %v1792 = vadd.f32 %v1790, %v1791
  %v1793 = vrot.slane %v1792, 1
  %v1794 = vadd.f32 %v1792, %v1793
  %v1795 = vrot.slane %v1733, 4
  %v1796 = vadd.f32 %v1733, %v1795
  %v1797 = vrot.slane %v1796, 2
  %v1798 = vadd.f32 %v1796, %v1797
  %v1799 = vrot.slane %v1798, 1
  %v1800 = vadd.f32 %v1798, %v1799
  %v1801 = vrot.slane %v1734, 4
  %v1802 = vadd.f32 %v1734, %v1801
  %v1803 = vrot.slane %v1802, 2
  %v1804 = vadd.f32 %v1802, %v1803
  %v1805 = vrot.slane %v1804, 1
  %v1806 = vadd.f32 %v1804, %v1805
  %v1807 = vrot.slane %v1735, 4
  %v1808 = vadd.f32 %v1735, %v1807
  %v1809 = vrot.slane %v1808, 2
  %v1810 = vadd.f32 %v1808, %v1809
  %v1811 = vrot.slane %v1810, 1
  %v1812 = vadd.f32 %v1810, %v1811
  %v1813 = vrot.slane %v1736, 4
  %v1814 = vadd.f32 %v1736, %v1813
  %v1815 = vrot.slane %v1814, 2
  %v1816 = vadd.f32 %v1814, %v1815
  %v1817 = vrot.slane %v1816, 1
  %v1818 = vadd.f32 %v1816, %v1817
  %v1819 = vrot.slane %v1737, 4
  %v1820 = vadd.f32 %v1737, %v1819
  %v1821 = vrot.slane %v1820, 2
  %v1822 = vadd.f32 %v1820, %v1821
  %v1823 = vrot.slane %v1822, 1
  %v1824 = vadd.f32 %v1822, %v1823
  %v1825 = vrot.slane %v1738, 4
  %v1826 = vadd.f32 %v1738, %v1825
  %v1827 = vrot.slane %v1826, 2
  %v1828 = vadd.f32 %v1826, %v1827
  %v1829 = vrot.slane %v1828, 1
  %v1830 = vadd.f32 %v1828, %v1829
  %v1831 = vrot.slane %v1739, 4
  %v1832 = vadd.f32 %v1739, %v1831
  %v1833 = vrot.slane %v1832, 2
  %v1834 = vadd.f32 %v1832, %v1833
  %v1835 = vrot.slane %v1834, 1
  %v1836 = vadd.f32 %v1834, %v1835
  %v1837 = vrot.slane %v1740, 4
  %v1838 = vadd.f32 %v1740, %v1837
  %v1839 = vrot.slane %v1838, 2
  %v1840 = vadd.f32 %v1838, %v1839
  %v1841 = vrot.slane %v1840, 1
  %v1842 = vadd.f32 %v1840, %v1841
  %v1843 = vrot.slane %v1741, 4
  %v1844 = vadd.f32 %v1741, %v1843
  %v1845 = vrot.slane %v1844, 2
  %v1846 = vadd.f32 %v1844, %v1845
  %v1847 = vrot.slane %v1846, 1
  %v1848 = vadd.f32 %v1846, %v1847
  %v1849 = vrot.slane %v1742, 4
  %v1850 = vadd.f32 %v1742, %v1849
  %v1851 = vrot.slane %v1850, 2
  %v1852 = vadd.f32 %v1850, %v1851
  %v1853 = vrot.slane %v1852, 1
  %v1854 = vadd.f32 %v1852, %v1853
  %v1855 = vrot.slane %v1743, 4
  %v1856 = vadd.f32 %v1743, %v1855
  %v1857 = vrot.slane %v1856, 2
  %v1858 = vadd.f32 %v1856, %v1857
  %v1859 = vrot.slane %v1858, 1
  %v1860 = vadd.f32 %v1858, %v1859
  %v1861 = vrot.slane %v1744, 4
  %v1862 = vadd.f32 %v1744, %v1861
  %v1863 = vrot.slane %v1862, 2
  %v1864 = vadd.f32 %v1862, %v1863
  %v1865 = vrot.slane %v1864, 1
  %v1866 = vadd.f32 %v1864, %v1865
  %v1867 = vrot.slane %v1745, 4
  %v1868 = vadd.f32 %v1745, %v1867
  %v1869 = vrot.slane %v1868, 2
  %v1870 = vadd.f32 %v1868, %v1869
  %v1871 = vrot.slane %v1870, 1
  %v1872 = vadd.f32 %v1870, %v1871
  %v1873 = vrot.slane %v1746, 4
  %v1874 = vadd.f32 %v1746, %v1873
  %v1875 = vrot.slane %v1874, 2
  %v1876 = vadd.f32 %v1874, %v1875
  %v1877 = vrot.slane %v1876, 1
  %v1878 = vadd.f32 %v1876, %v1877
  %v1879 = vrot.slane %v1747, 4
  %v1880 = vadd.f32 %v1747, %v1879
  %v1881 = vrot.slane %v1880, 2
  %v1882 = vadd.f32 %v1880, %v1881
  %v1883 = vrot.slane %v1882, 1
  %v1884 = vadd.f32 %v1882, %v1883
  %v1885 = vrot.slane %v1748, 4
  %v1886 = vadd.f32 %v1748, %v1885
  %v1887 = vrot.slane %v1886, 2
  %v1888 = vadd.f32 %v1886, %v1887
  %v1889 = vrot.slane %v1888, 1
  %v1890 = vadd.f32 %v1888, %v1889
  %v1891 = vrot.slane %v1749, 4
  %v1892 = vadd.f32 %v1749, %v1891
  %v1893 = vrot.slane %v1892, 2
  %v1894 = vadd.f32 %v1892, %v1893
  %v1895 = vrot.slane %v1894, 1
  %v1896 = vadd.f32 %v1894, %v1895
  %v1897 = vrot.slane %v1750, 4
  %v1898 = vadd.f32 %v1750, %v1897
  %v1899 = vrot.slane %v1898, 2
  %v1900 = vadd.f32 %v1898, %v1899
  %v1901 = vrot.slane %v1900, 1
  %v1902 = vadd.f32 %v1900, %v1901
  %v1903 = vrot.slane %v1751, 4
  %v1904 = vadd.f32 %v1751, %v1903
  %v1905 = vrot.slane %v1904, 2
  %v1906 = vadd.f32 %v1904, %v1905
  %v1907 = vrot.slane %v1906, 1
  %v1908 = vadd.f32 %v1906, %v1907
  %v1909 = vrot.slane %v1752, 4
  %v1910 = vadd.f32 %v1752, %v1909
  %v1911 = vrot.slane %v1910, 2
  %v1912 = vadd.f32 %v1910, %v1911
  %v1913 = vrot.slane %v1912, 1
  %v1914 = vadd.f32 %v1912, %v1913
  %v1915 = vrot.slane %v1753, 4
  %v1916 = vadd.f32 %v1753, %v1915
  %v1917 = vrot.slane %v1916, 2
  %v1918 = vadd.f32 %v1916, %v1917
  %v1919 = vrot.slane %v1918, 1
  %v1920 = vadd.f32 %v1918, %v1919
  %v1921 = vrot.slane %v1754, 4
  %v1922 = vadd.f32 %v1754, %v1921
  %v1923 = vrot.slane %v1922, 2
  %v1924 = vadd.f32 %v1922, %v1923
  %v1925 = vrot.slane %v1924, 1
  %v1926 = vadd.f32 %v1924, %v1925
  %v1927 = vrot.slane %v1755, 4
  %v1928 = vadd.f32 %v1755, %v1927
  %v1929 = vrot.slane %v1928, 2
  %v1930 = vadd.f32 %v1928, %v1929
  %v1931 = vrot.slane %v1930, 1
  %v1932 = vadd.f32 %v1930, %v1931
  %v1933 = vrot.slane %v1756, 4
  %v1934 = vadd.f32 %v1756, %v1933
  %v1935 = vrot.slane %v1934, 2
  %v1936 = vadd.f32 %v1934, %v1935
  %v1937 = vrot.slane %v1936, 1
  %v1938 = vadd.f32 %v1936, %v1937
  %v1939 = vrot.slane %v1757, 4
  %v1940 = vadd.f32 %v1757, %v1939
  %v1941 = vrot.slane %v1940, 2
  %v1942 = vadd.f32 %v1940, %v1941
  %v1943 = vrot.slane %v1942, 1
  %v1944 = vadd.f32 %v1942, %v1943
  %v1945 = vrot.slane %v1758, 4
  %v1946 = vadd.f32 %v1758, %v1945
  %v1947 = vrot.slane %v1946, 2
  %v1948 = vadd.f32 %v1946, %v1947
  %v1949 = vrot.slane %v1948, 1
  %v1950 = vadd.f32 %v1948, %v1949
  %v1951 = vpack.c.bf16 %v1764, %v1764
  %v1952 = vpack.c.bf16 %v1770, %v1770
  %v1953 = vpack.c.bf16 %v1776, %v1776
  %v1954 = vpack.c.bf16 %v1782, %v1782
  %v1955 = vpack.c.bf16 %v1788, %v1788
  %v1956 = vpack.c.bf16 %v1794, %v1794
  %v1957 = vpack.c.bf16 %v1800, %v1800
  %v1958 = vpack.c.bf16 %v1806, %v1806
  %v1959 = vpack.c.bf16 %v1812, %v1812
  %v1960 = vpack.c.bf16 %v1818, %v1818
  %v1961 = vpack.c.bf16 %v1824, %v1824
  %v1962 = vpack.c.bf16 %v1830, %v1830
  %v1963 = vpack.c.bf16 %v1836, %v1836
  %v1964 = vpack.c.bf16 %v1842, %v1842
  %v1965 = vpack.c.bf16 %v1848, %v1848
  %v1966 = vpack.c.bf16 %v1854, %v1854
  %v1967 = vpack.c.bf16 %v1860, %v1860
  %v1968 = vpack.c.bf16 %v1866, %v1866
  %v1969 = vpack.c.bf16 %v1872, %v1872
  %v1970 = vpack.c.bf16 %v1878, %v1878
  %v1971 = vpack.c.bf16 %v1884, %v1884
  %v1972 = vpack.c.bf16 %v1890, %v1890
  %v1973 = vpack.c.bf16 %v1896, %v1896
  %v1974 = vpack.c.bf16 %v1902, %v1902
  %v1975 = vpack.c.bf16 %v1908, %v1908
  %v1976 = vpack.c.bf16 %v1914, %v1914
  %v1977 = vpack.c.bf16 %v1920, %v1920
  %v1978 = vpack.c.bf16 %v1926, %v1926
  %v1979 = vpack.c.bf16 %v1932, %v1932
  %v1980 = vpack.c.bf16 %v1938, %v1938
  %v1981 = vpack.c.bf16 %v1944, %v1944
  %v1982 = vpack.c.bf16 %v1950, %v1950
  %v1983 = vld [vmem:[%s9] sm:$0xf]
  %v1984 = vld [vmem:[%s9 + $0x4] sm:$0xf]
  %v1985 = vld [vmem:[%s9 + $0x8] sm:$0xf]
  %v1986 = vld [vmem:[%s9 + $0xc] sm:$0xf]
  %v1987 = vld [vmem:[%s9 + $0x10] sm:$0xf]
  %v1988 = vld [vmem:[%s9 + $0x14] sm:$0xf]
  %v1989 = vld [vmem:[%s9 + $0x18] sm:$0xf]
  %v1990 = vld [vmem:[%s9 + $0x1c] sm:$0xf]
  %v1991 = vld [vmem:[%s9 + $0x20] sm:$0xf]
  %v1992 = vld [vmem:[%s9 + $0x24] sm:$0xf]
  %v1993 = vld [vmem:[%s9 + $0x28] sm:$0xf]
  %v1994 = vld [vmem:[%s9 + $0x2c] sm:$0xf]
  %v1995 = vld [vmem:[%s9 + $0x30] sm:$0xf]
  %v1996 = vld [vmem:[%s9 + $0x34] sm:$0xf]
  %v1997 = vld [vmem:[%s9 + $0x38] sm:$0xf]
  %v1998 = vld [vmem:[%s9 + $0x3c] sm:$0xf]
  %v1999 = vld [vmem:[%s10] sm:$0x1]
  %v2000 = vmul.f32 %v1999, 8.0
  %v2002 = vlaneseq
  %v2003 = vshrl.u32 %v2002, 7
  %v2004 = vsub.s32 0, %v2003
  %v2005 = vrot.slane %v2000, %v2004
  %v2039 = vunpack.c.l.b16 %v1951
  %v2040 = vunpack.c.l.b16 %v1952
  %v2041 = vunpack.c.l.b16 %v1953
  %v2042 = vunpack.c.l.b16 %v1954
  %v2043 = vunpack.c.l.b16 %v1955
  %v2044 = vunpack.c.l.b16 %v1956
  %v2045 = vunpack.c.l.b16 %v1957
  %v2046 = vunpack.c.l.b16 %v1958
  %v2047 = vunpack.c.l.b16 %v1959
  %v2048 = vunpack.c.l.b16 %v1960
  %v2049 = vunpack.c.l.b16 %v1961
  %v2050 = vunpack.c.l.b16 %v1962
  %v2051 = vunpack.c.l.b16 %v1963
  %v2052 = vunpack.c.l.b16 %v1964
  %v2053 = vunpack.c.l.b16 %v1965
  %v2054 = vunpack.c.l.b16 %v1966
  %v2055 = vunpack.c.l.b16 %v1967
  %v2056 = vunpack.c.l.b16 %v1968
  %v2057 = vunpack.c.l.b16 %v1969
  %v2058 = vunpack.c.l.b16 %v1970
  %v2059 = vunpack.c.l.b16 %v1971
  %v2060 = vunpack.c.l.b16 %v1972
  %v2061 = vunpack.c.l.b16 %v1973
  %v2062 = vunpack.c.l.b16 %v1974
  %v2063 = vunpack.c.l.b16 %v1975
  %v2064 = vunpack.c.l.b16 %v1976
  %v2065 = vunpack.c.l.b16 %v1977
  %v2066 = vunpack.c.l.b16 %v1978
  %v2067 = vunpack.c.l.b16 %v1979
  %v2068 = vunpack.c.l.b16 %v1980
  %v2069 = vunpack.c.l.b16 %v1981
  %v2070 = vunpack.c.l.b16 %v1982
  %vm2071 = vcmask 1041409
  %v2072 = vsel %vm2071, %v2040, %v2039
  %vm2073 = vcmask 1042434
  %v2074 = vsel %vm2073, %v2041, %v2072
  %vm2075 = vcmask 1043459
  %v2076 = vsel %vm2075, %v2042, %v2074
  %vm2077 = vcmask 1044484
  %v2078 = vsel %vm2077, %v2043, %v2076
  %vm2079 = vcmask 1045509
  %v2080 = vsel %vm2079, %v2044, %v2078
  %vm2081 = vcmask 1046534
  %v2082 = vsel %vm2081, %v2045, %v2080
  %vm2083 = vcmask 1047559
  %v2084 = vsel %vm2083, %v2046, %v2082
  %v2085 = vsel %vm2071, %v2048, %v2047
  %v2086 = vsel %vm2073, %v2049, %v2085
  %v2087 = vsel %vm2075, %v2050, %v2086
  %v2088 = vsel %vm2077, %v2051, %v2087
  %v2089 = vsel %vm2079, %v2052, %v2088
  %v2090 = vsel %vm2081, %v2053, %v2089
  %v2091 = vsel %vm2083, %v2054, %v2090
  %v2092 = vsel %vm2071, %v2056, %v2055
  %v2093 = vsel %vm2073, %v2057, %v2092
  %v2094 = vsel %vm2075, %v2058, %v2093
  %v2095 = vsel %vm2077, %v2059, %v2094
  %v2096 = vsel %vm2079, %v2060, %v2095
  %v2097 = vsel %vm2081, %v2061, %v2096
  %v2098 = vsel %vm2083, %v2062, %v2097
  %v2099 = vsel %vm2071, %v2064, %v2063
  %v2100 = vsel %vm2073, %v2065, %v2099
  %v2101 = vsel %vm2075, %v2066, %v2100
  %v2102 = vsel %vm2077, %v2067, %v2101
  %v2103 = vsel %vm2079, %v2068, %v2102
  %v2104 = vsel %vm2081, %v2069, %v2103
  %v2105 = vsel %vm2083, %v2070, %v2104
  %v2106 = vpack.c.b16 %v2091, %v2084
  %v2107 = vpack.c.b16 %v2105, %v2098
  %v2126 = vunpack.c.l.b16 %v1983
  %v2127 = vunpack.c.l.b16 %v1984
  %v2128 = vunpack.c.l.b16 %v1985
  %v2129 = vunpack.c.l.b16 %v1986
  %v2130 = vunpack.c.l.b16 %v1987
  %v2131 = vunpack.c.l.b16 %v1988
  %v2132 = vunpack.c.l.b16 %v1989
  %v2133 = vunpack.c.l.b16 %v1990
  %v2134 = vunpack.c.l.b16 %v1991
  %v2135 = vunpack.c.l.b16 %v1992
  %v2136 = vunpack.c.l.b16 %v1993
  %v2137 = vunpack.c.l.b16 %v1994
  %v2138 = vunpack.c.l.b16 %v1995
  %v2139 = vunpack.c.l.b16 %v1996
  %v2140 = vunpack.c.l.b16 %v1997
  %v2141 = vunpack.c.l.b16 %v1998
  %v2142 = vpack.c.b16 %v2127, %v2126
  %v2143 = vpack.c.b16 %v2129, %v2128
  %v2144 = vpack.c.b16 %v2131, %v2130
  %v2145 = vpack.c.b16 %v2133, %v2132
  %v2146 = vpack.c.b16 %v2135, %v2134
  %v2147 = vpack.c.b16 %v2137, %v2136
  %v2148 = vpack.c.b16 %v2139, %v2138
  %v2149 = vpack.c.b16 %v2141, %v2140
  %2158 = vmatprep.subr.bf16.mxu0 0
  %2159 = vmatpush1.bf16.msra.mxu0 %v2142
  %2160 = vmatprep.subr.bf16.mxu0 0
  %2161 = vmatpush1.bf16.msra.mxu0 %v2143
  %2162 = vmatprep.subr.bf16.mxu0 0
  %2163 = vmatpush1.bf16.msra.mxu0 %v2144
  %2164 = vmatprep.subr.bf16.mxu0 0
  %2165 = vmatpush1.bf16.msra.mxu0 %v2145
  %2166 = vmatprep.subr.bf16.mxu0 0
  %2167 = vmatpush1.bf16.msra.mxu0 %v2146
  %2168 = vmatprep.subr.bf16.mxu0 0
  %2169 = vmatpush1.bf16.msra.mxu0 %v2147
  %2170 = vmatprep.subr.bf16.mxu0 0
  %2171 = vmatpush1.bf16.msra.mxu0 %v2148
  %2172 = vmatprep.subr.bf16.mxu0 0
  %2173 = vmatpush1.bf16.msra.mxu0 %v2149
  %2174 = vmatprep.subr.bf16.mxu0 0
  %2175 = vmatpush1.bf16.msra.mxu0 0
  %2176 = vmatprep.subr.bf16.mxu0 0
  %2177 = vmatpush1.bf16.msra.mxu0 0
  %2178 = vmatprep.subr.bf16.mxu0 0
  %2179 = vmatpush1.bf16.msra.mxu0 0
  %2180 = vmatprep.subr.bf16.mxu0 0
  %2181 = vmatpush1.bf16.msra.mxu0 0
  %2182 = vmatprep.subr.bf16.mxu0 0
  %2183 = vmatpush1.bf16.msra.mxu0 0
  %2184 = vmatprep.subr.bf16.mxu0 0
  %2185 = vmatpush1.bf16.msra.mxu0 0
  %2186 = vmatprep.subr.bf16.mxu0 0
  %2187 = vmatpush1.bf16.msra.mxu0 0
  %2188 = vmatprep.subr.bf16.mxu0 0
  %2189 = vmatpush1.bf16.msra.mxu0 0
  %2190 = vmatprep.mubr.bf16.mxu0 0
  %2191 = vmatmul.mubr.bf16.gmra.mrb[0].mxu0 %v2106
  %v2192 = vpop.f32.mrb[0].mxu0
  %v2193 = vadd.f32 %v2005, %v2192
  %v2194 = vpop.f32.mrb[0].mxu0
  %v2195 = vpop.f32.mrb[0].mxu0
  %v2196 = vadd.f32 %v2005, %v2195
  %v2197 = vpop.f32.mrb[0].mxu0
  %2198 = vmatprep.mubr.bf16.mxu0 0
  %2199 = vmatmul.mubr.bf16.gmra.mrb[0].mxu0 %v2107
  %v2200 = vpop.f32.mrb[0].mxu0
  %v2201 = vadd.f32 %v2005, %v2200
  %v2202 = vpop.f32.mrb[0].mxu0
  %v2203 = vpop.f32.mrb[0].mxu0
  %v2204 = vadd.f32 %v2005, %v2203
  %v2205 = vpop.f32.mrb[0].mxu0
  %2206 = vdwg.mxu0
  %v2207 = vmul.f32 %v2193, 0.033333335
  %v2208 = vmul.f32 %v2196, 0.033333335
  %v2209 = vmul.f32 %v2201, 0.033333335
  %v2210 = vmul.f32 %v2204, 0.033333335
  %v2211 = vadd.f32 %v63, %v2207
  %v2212 = vadd.f32 %v64, %v2208
  %v2213 = vadd.f32 %v65, %v2209
  %v2214 = vadd.f32 %v66, %v2210
  %v2215 = vld [vmem:[%s11] sm:$0x1]
  %v2216 = vld [vmem:[%s12] sm:$0x1]
  %2217 = vadd.xlane.f32.xlu0 %v2211
  %v2218 = vpop.xlane.xlu0 %2217
  %2219 = vadd.xlane.f32.xlu0 %v2212
  %v2220 = vpop.xlane.xlu0 %2219
  %2221 = vadd.xlane.f32.xlu0 %v2213
  %v2222 = vpop.xlane.xlu0 %2221
  %2223 = vadd.xlane.f32.xlu0 %v2214
  %v2224 = vpop.xlane.xlu0 %2223
  %v2225 = vrcp.pop 128.0
  %v2226 = vmul.f32 %v2218, %v2225
  %v2227 = vmul.f32 %v2220, %v2225
  %v2228 = vmul.f32 %v2222, %v2225
  %v2229 = vmul.f32 %v2224, %v2225
  %v2230 = vsub.f32 %v2211, %v2226
  %v2231 = vsub.f32 %v2212, %v2227
  %v2232 = vsub.f32 %v2213, %v2228
  %v2233 = vsub.f32 %v2214, %v2229
  %v2234 = vmul.f32 %v2230, %v2230
  %v2235 = vmul.f32 %v2231, %v2231
  %v2236 = vmul.f32 %v2232, %v2232
  %v2237 = vmul.f32 %v2233, %v2233
  %2238 = vadd.xlane.f32.xlu0 %v2234
  %v2239 = vpop.xlane.xlu0 %2238
  %2240 = vadd.xlane.f32.xlu0 %v2235
  %v2241 = vpop.xlane.xlu0 %2240
  %2242 = vadd.xlane.f32.xlu0 %v2236
  %v2243 = vpop.xlane.xlu0 %2242
  %2244 = vadd.xlane.f32.xlu0 %v2237
  %v2245 = vpop.xlane.xlu0 %2244
  %v2246 = vmul.f32 %v2239, %v2225
  %v2247 = vmul.f32 %v2241, %v2225
  %v2248 = vmul.f32 %v2243, %v2225
  %v2249 = vmul.f32 %v2245, %v2225
  %v2250 = vadd.f32 %v2246, 1e-06
  %v2251 = vadd.f32 %v2247, 1e-06
  %v2252 = vadd.f32 %v2248, 1e-06
  %v2253 = vadd.f32 %v2249, 1e-06
  %v2254 = vrsqrt.pop %v2250
  %v2255 = vrsqrt.pop %v2251
  %v2256 = vrsqrt.pop %v2252
  %v2257 = vrsqrt.pop %v2253
  %v2258 = vmul.f32 %v2230, %v2254
  %v2259 = vmul.f32 %v2231, %v2255
  %v2260 = vmul.f32 %v2232, %v2256
  %v2261 = vmul.f32 %v2233, %v2257
  %v2263 = vlaneseq
  %v2264 = vshrl.u32 %v2263, 7
  %v2265 = vsub.s32 0, %v2264
  %v2266 = vrot.slane %v2215, %v2265
  %v2268 = vmul.f32 %v2258, %v2266
  %v2269 = vmul.f32 %v2259, %v2266
  %v2270 = vmul.f32 %v2260, %v2266
  %v2271 = vmul.f32 %v2261, %v2266
  %v2273 = vlaneseq
  %v2274 = vshrl.u32 %v2273, 7
  %v2275 = vsub.s32 0, %v2274
  %v2276 = vrot.slane %v2216, %v2275
  %v2278 = vadd.f32 %v2268, %v2276
  %v2279 = vadd.f32 %v2269, %v2276
  %v2280 = vadd.f32 %v2270, %v2276
  %v2281 = vadd.f32 %v2271, %v2276
  %v2282 = vpack.c.bf16 %v2279, %v2278
  %v2283 = vpack.c.bf16 %v2281, %v2280
  %v2284 = vld [vmem:[%s13] sm:$0xff]
  %v2285 = vld [vmem:[%s13 + $0x8] sm:$0xff]
  %v2286 = vld [vmem:[%s13 + $0x10] sm:$0xff]
  %v2287 = vld [vmem:[%s13 + $0x18] sm:$0xff]
  %v2288 = vld [vmem:[%s13 + $0x20] sm:$0xff]
  %v2289 = vld [vmem:[%s13 + $0x28] sm:$0xff]
  %v2290 = vld [vmem:[%s13 + $0x30] sm:$0xff]
  %v2291 = vld [vmem:[%s13 + $0x38] sm:$0xff]
  %v2292 = vld [vmem:[%s13 + $0x40] sm:$0xff]
  %v2293 = vld [vmem:[%s13 + $0x48] sm:$0xff]
  %v2294 = vld [vmem:[%s13 + $0x50] sm:$0xff]
  %v2295 = vld [vmem:[%s13 + $0x58] sm:$0xff]
  %v2296 = vld [vmem:[%s13 + $0x60] sm:$0xff]
  %v2297 = vld [vmem:[%s13 + $0x68] sm:$0xff]
  %v2298 = vld [vmem:[%s13 + $0x70] sm:$0xff]
  %v2299 = vld [vmem:[%s13 + $0x78] sm:$0xff]
  %v2300 = vld [vmem:[%s13 + $0x80] sm:$0xff]
  %v2301 = vld [vmem:[%s13 + $0x88] sm:$0xff]
  %v2302 = vld [vmem:[%s13 + $0x90] sm:$0xff]
  %v2303 = vld [vmem:[%s13 + $0x98] sm:$0xff]
  %v2304 = vld [vmem:[%s13 + $0xa0] sm:$0xff]
  %v2305 = vld [vmem:[%s13 + $0xa8] sm:$0xff]
  %v2306 = vld [vmem:[%s13 + $0xb0] sm:$0xff]
  %v2307 = vld [vmem:[%s13 + $0xb8] sm:$0xff]
  %v2308 = vld [vmem:[%s13 + $0xc0] sm:$0xff]
  %v2309 = vld [vmem:[%s13 + $0xc8] sm:$0xff]
  %v2310 = vld [vmem:[%s13 + $0xd0] sm:$0xff]
  %v2311 = vld [vmem:[%s13 + $0xd8] sm:$0xff]
  %v2312 = vld [vmem:[%s13 + $0xe0] sm:$0xff]
  %v2313 = vld [vmem:[%s13 + $0xe8] sm:$0xff]
  %v2314 = vld [vmem:[%s13 + $0xf0] sm:$0xff]
  %v2315 = vld [vmem:[%s13 + $0xf8] sm:$0xff]
  %v2316 = vld [vmem:[%s14] sm:$0xf]
  %v2318 = vlaneseq
  %v2319 = vshrl.u32 %v2318, 7
  %v2320 = vsub.s32 0, %v2319
  %v2321 = vrot.slane %v2316, %v2320
  %v2322 = vlaneseq
  %v2323 = vshrl.u32 %v2322, 7
  %v2324 = vsub.s32 1, %v2323
  %v2325 = vrot.slane %v2316, %v2324
  %v2326 = vlaneseq
  %v2327 = vshrl.u32 %v2326, 7
  %v2328 = vsub.s32 2, %v2327
  %v2329 = vrot.slane %v2316, %v2328
  %v2330 = vlaneseq
  %v2331 = vshrl.u32 %v2330, 7
  %v2332 = vsub.s32 3, %v2331
  %v2333 = vrot.slane %v2316, %v2332
  %v2370 = vunpack.c.l.b16 %v2284
  %v2371 = vunpack.c.h.b16 %v2284
  %v2372 = vunpack.c.l.b16 %v2285
  %v2373 = vunpack.c.h.b16 %v2285
  %v2374 = vunpack.c.l.b16 %v2286
  %v2375 = vunpack.c.h.b16 %v2286
  %v2376 = vunpack.c.l.b16 %v2287
  %v2377 = vunpack.c.h.b16 %v2287
  %v2378 = vunpack.c.l.b16 %v2288
  %v2379 = vunpack.c.h.b16 %v2288
  %v2380 = vunpack.c.l.b16 %v2289
  %v2381 = vunpack.c.h.b16 %v2289
  %v2382 = vunpack.c.l.b16 %v2290
  %v2383 = vunpack.c.h.b16 %v2290
  %v2384 = vunpack.c.l.b16 %v2291
  %v2385 = vunpack.c.h.b16 %v2291
  %v2386 = vunpack.c.l.b16 %v2292
  %v2387 = vunpack.c.h.b16 %v2292
  %v2388 = vunpack.c.l.b16 %v2293
  %v2389 = vunpack.c.h.b16 %v2293
  %v2390 = vunpack.c.l.b16 %v2294
  %v2391 = vunpack.c.h.b16 %v2294
  %v2392 = vunpack.c.l.b16 %v2295
  %v2393 = vunpack.c.h.b16 %v2295
  %v2394 = vunpack.c.l.b16 %v2296
  %v2395 = vunpack.c.h.b16 %v2296
  %v2396 = vunpack.c.l.b16 %v2297
  %v2397 = vunpack.c.h.b16 %v2297
  %v2398 = vunpack.c.l.b16 %v2298
  %v2399 = vunpack.c.h.b16 %v2298
  %v2400 = vunpack.c.l.b16 %v2299
  %v2401 = vunpack.c.h.b16 %v2299
  %v2402 = vunpack.c.l.b16 %v2300
  %v2403 = vunpack.c.h.b16 %v2300
  %v2404 = vunpack.c.l.b16 %v2301
  %v2405 = vunpack.c.h.b16 %v2301
  %v2406 = vunpack.c.l.b16 %v2302
  %v2407 = vunpack.c.h.b16 %v2302
  %v2408 = vunpack.c.l.b16 %v2303
  %v2409 = vunpack.c.h.b16 %v2303
  %v2410 = vunpack.c.l.b16 %v2304
  %v2411 = vunpack.c.h.b16 %v2304
  %v2412 = vunpack.c.l.b16 %v2305
  %v2413 = vunpack.c.h.b16 %v2305
  %v2414 = vunpack.c.l.b16 %v2306
  %v2415 = vunpack.c.h.b16 %v2306
  %v2416 = vunpack.c.l.b16 %v2307
  %v2417 = vunpack.c.h.b16 %v2307
  %v2418 = vunpack.c.l.b16 %v2308
  %v2419 = vunpack.c.h.b16 %v2308
  %v2420 = vunpack.c.l.b16 %v2309
  %v2421 = vunpack.c.h.b16 %v2309
  %v2422 = vunpack.c.l.b16 %v2310
  %v2423 = vunpack.c.h.b16 %v2310
  %v2424 = vunpack.c.l.b16 %v2311
  %v2425 = vunpack.c.h.b16 %v2311
  %v2426 = vunpack.c.l.b16 %v2312
  %v2427 = vunpack.c.h.b16 %v2312
  %v2428 = vunpack.c.l.b16 %v2313
  %v2429 = vunpack.c.h.b16 %v2313
  %v2430 = vunpack.c.l.b16 %v2314
  %v2431 = vunpack.c.h.b16 %v2314
  %v2432 = vunpack.c.l.b16 %v2315
  %v2433 = vunpack.c.h.b16 %v2315
  %v2434 = vpack.c.b16 %v2374, %v2370
  %v2435 = vpack.c.b16 %v2375, %v2371
  %v2436 = vpack.c.b16 %v2376, %v2372
  %v2437 = vpack.c.b16 %v2377, %v2373
  %v2438 = vpack.c.b16 %v2382, %v2378
  %v2439 = vpack.c.b16 %v2383, %v2379
  %v2440 = vpack.c.b16 %v2384, %v2380
  %v2441 = vpack.c.b16 %v2385, %v2381
  %v2442 = vpack.c.b16 %v2390, %v2386
  %v2443 = vpack.c.b16 %v2391, %v2387
  %v2444 = vpack.c.b16 %v2392, %v2388
  %v2445 = vpack.c.b16 %v2393, %v2389
  %v2446 = vpack.c.b16 %v2398, %v2394
  %v2447 = vpack.c.b16 %v2399, %v2395
  %v2448 = vpack.c.b16 %v2400, %v2396
  %v2449 = vpack.c.b16 %v2401, %v2397
  %v2450 = vpack.c.b16 %v2406, %v2402
  %v2451 = vpack.c.b16 %v2407, %v2403
  %v2452 = vpack.c.b16 %v2408, %v2404
  %v2453 = vpack.c.b16 %v2409, %v2405
  %v2454 = vpack.c.b16 %v2414, %v2410
  %v2455 = vpack.c.b16 %v2415, %v2411
  %v2456 = vpack.c.b16 %v2416, %v2412
  %v2457 = vpack.c.b16 %v2417, %v2413
  %v2458 = vpack.c.b16 %v2422, %v2418
  %v2459 = vpack.c.b16 %v2423, %v2419
  %v2460 = vpack.c.b16 %v2424, %v2420
  %v2461 = vpack.c.b16 %v2425, %v2421
  %v2462 = vpack.c.b16 %v2430, %v2426
  %v2463 = vpack.c.b16 %v2431, %v2427
  %v2464 = vpack.c.b16 %v2432, %v2428
  %v2465 = vpack.c.b16 %v2433, %v2429
  %2498 = vmatprep.subr.bf16.mxu0 %v2435
  %2499 = vmatpush1.bf16.msra.mxu0 %v2434
  %2500 = vmatprep.subr.bf16.mxu0 %v2439
  %2501 = vmatpush1.bf16.msra.mxu0 %v2438
  %2502 = vmatprep.subr.bf16.mxu0 %v2443
  %2503 = vmatpush1.bf16.msra.mxu0 %v2442
  %2504 = vmatprep.subr.bf16.mxu0 %v2447
  %2505 = vmatpush1.bf16.msra.mxu0 %v2446
  %2506 = vmatprep.subr.bf16.mxu0 %v2451
  %2507 = vmatpush1.bf16.msra.mxu0 %v2450
  %2508 = vmatprep.subr.bf16.mxu0 %v2455
  %2509 = vmatpush1.bf16.msra.mxu0 %v2454
  %2510 = vmatprep.subr.bf16.mxu0 %v2459
  %2511 = vmatpush1.bf16.msra.mxu0 %v2458
  %2512 = vmatprep.subr.bf16.mxu0 %v2463
  %2513 = vmatpush1.bf16.msra.mxu0 %v2462
  %2514 = vmatprep.subr.bf16.mxu0 0
  %2515 = vmatpush1.bf16.msra.mxu0 0
  %2516 = vmatprep.subr.bf16.mxu0 0
  %2517 = vmatpush1.bf16.msra.mxu0 0
  %2518 = vmatprep.subr.bf16.mxu0 0
  %2519 = vmatpush1.bf16.msra.mxu0 0
  %2520 = vmatprep.subr.bf16.mxu0 0
  %2521 = vmatpush1.bf16.msra.mxu0 0
  %2522 = vmatprep.subr.bf16.mxu0 0
  %2523 = vmatpush1.bf16.msra.mxu0 0
  %2524 = vmatprep.subr.bf16.mxu0 0
  %2525 = vmatpush1.bf16.msra.mxu0 0
  %2526 = vmatprep.subr.bf16.mxu0 0
  %2527 = vmatpush1.bf16.msra.mxu0 0
  %2528 = vmatprep.subr.bf16.mxu0 0
  %2529 = vmatpush1.bf16.msra.mxu0 0
  %2530 = vmatprep.mubr.bf16.mxu0 0
  %2531 = vmatmul.mubr.bf16.gmra.mrb[0].mxu0 %v2282
  %v2532 = vpop.f32.mrb[0].mxu0
  %v2533 = vadd.f32 %v2321, %v2532
  %v2534 = vpop.f32.mrb[0].mxu0
  %v2535 = vadd.f32 %v2325, %v2534
  %v2536 = vpop.f32.mrb[0].mxu0
  %v2537 = vadd.f32 %v2321, %v2536
  %v2538 = vpop.f32.mrb[0].mxu0
  %v2539 = vadd.f32 %v2325, %v2538
  %2540 = vmatprep.mubr.bf16.mxu0 0
  %2541 = vmatmul.mubr.bf16.gmra.mrb[0].mxu0 %v2283
  %v2542 = vpop.f32.mrb[0].mxu0
  %v2543 = vadd.f32 %v2321, %v2542
  %v2544 = vpop.f32.mrb[0].mxu0
  %v2545 = vadd.f32 %v2325, %v2544
  %v2546 = vpop.f32.mrb[0].mxu0
  %v2547 = vadd.f32 %v2321, %v2546
  %v2548 = vpop.f32.mrb[0].mxu0
  %v2549 = vadd.f32 %v2325, %v2548
  %2550 = vdwg.mxu0
  %2551 = vmatprep.subr.bf16.mxu0 %v2437
  %2552 = vmatpush1.bf16.msra.mxu0 %v2436
  %2553 = vmatprep.subr.bf16.mxu0 %v2441
  %2554 = vmatpush1.bf16.msra.mxu0 %v2440
  %2555 = vmatprep.subr.bf16.mxu0 %v2445
  %2556 = vmatpush1.bf16.msra.mxu0 %v2444
  %2557 = vmatprep.subr.bf16.mxu0 %v2449
  %2558 = vmatpush1.bf16.msra.mxu0 %v2448
  %2559 = vmatprep.subr.bf16.mxu0 %v2453
  %2560 = vmatpush1.bf16.msra.mxu0 %v2452
  %2561 = vmatprep.subr.bf16.mxu0 %v2457
  %2562 = vmatpush1.bf16.msra.mxu0 %v2456
  %2563 = vmatprep.subr.bf16.mxu0 %v2461
  %2564 = vmatpush1.bf16.msra.mxu0 %v2460
  %2565 = vmatprep.subr.bf16.mxu0 %v2465
  %2566 = vmatpush1.bf16.msra.mxu0 %v2464
  %2567 = vmatprep.subr.bf16.mxu0 0
  %2568 = vmatpush1.bf16.msra.mxu0 0
  %2569 = vmatprep.subr.bf16.mxu0 0
  %2570 = vmatpush1.bf16.msra.mxu0 0
  %2571 = vmatprep.subr.bf16.mxu0 0
  %2572 = vmatpush1.bf16.msra.mxu0 0
  %2573 = vmatprep.subr.bf16.mxu0 0
  %2574 = vmatpush1.bf16.msra.mxu0 0
  %2575 = vmatprep.subr.bf16.mxu0 0
  %2576 = vmatpush1.bf16.msra.mxu0 0
  %2577 = vmatprep.subr.bf16.mxu0 0
  %2578 = vmatpush1.bf16.msra.mxu0 0
  %2579 = vmatprep.subr.bf16.mxu0 0
  %2580 = vmatpush1.bf16.msra.mxu0 0
  %2581 = vmatprep.subr.bf16.mxu0 0
  %2582 = vmatpush1.bf16.msra.mxu0 0
  %2583 = vmatprep.mubr.bf16.mxu0 0
  %2584 = vmatmul.mubr.bf16.gmra.mrb[0].mxu0 %v2282
  %v2585 = vpop.f32.mrb[0].mxu0
  %v2586 = vadd.f32 %v2329, %v2585
  %v2587 = vpop.f32.mrb[0].mxu0
  %v2588 = vadd.f32 %v2333, %v2587
  %v2589 = vpop.f32.mrb[0].mxu0
  %v2590 = vadd.f32 %v2329, %v2589
  %v2591 = vpop.f32.mrb[0].mxu0
  %v2592 = vadd.f32 %v2333, %v2591
  %2593 = vmatprep.mubr.bf16.mxu0 0
  %2594 = vmatmul.mubr.bf16.gmra.mrb[0].mxu0 %v2283
  %v2595 = vpop.f32.mrb[0].mxu0
  %v2596 = vadd.f32 %v2329, %v2595
  %v2597 = vpop.f32.mrb[0].mxu0
  %v2598 = vadd.f32 %v2333, %v2597
  %v2599 = vpop.f32.mrb[0].mxu0
  %v2600 = vadd.f32 %v2329, %v2599
  %v2601 = vpop.f32.mrb[0].mxu0
  %v2602 = vadd.f32 %v2333, %v2601
  %2603 = vdwg.mxu0
  %v2604 = vmax.f32 %v2533, 0.0
  %v2605 = vmax.f32 %v2535, 0.0
  %v2606 = vmax.f32 %v2586, 0.0
  %v2607 = vmax.f32 %v2588, 0.0
  %v2608 = vmax.f32 %v2537, 0.0
  %v2609 = vmax.f32 %v2539, 0.0
  %v2610 = vmax.f32 %v2590, 0.0
  %v2611 = vmax.f32 %v2592, 0.0
  %v2612 = vmax.f32 %v2543, 0.0
  %v2613 = vmax.f32 %v2545, 0.0
  %v2614 = vmax.f32 %v2596, 0.0
  %v2615 = vmax.f32 %v2598, 0.0
  %v2616 = vmax.f32 %v2547, 0.0
  %v2617 = vmax.f32 %v2549, 0.0
  %v2618 = vmax.f32 %v2600, 0.0
  %v2619 = vmax.f32 %v2602, 0.0
  %v2620 = vpack.c.bf16 %v2608, %v2604
  %v2621 = vpack.c.bf16 %v2609, %v2605
  %v2622 = vpack.c.bf16 %v2610, %v2606
  %v2623 = vpack.c.bf16 %v2611, %v2607
  %v2624 = vpack.c.bf16 %v2616, %v2612
  %v2625 = vpack.c.bf16 %v2617, %v2613
  %v2626 = vpack.c.bf16 %v2618, %v2614
  %v2627 = vpack.c.bf16 %v2619, %v2615
  %v2628 = vld [vmem:[%s15] sm:$0xf]
  %v2629 = vld [vmem:[%s15 + $0x4] sm:$0xf]
  %v2630 = vld [vmem:[%s15 + $0x8] sm:$0xf]
  %v2631 = vld [vmem:[%s15 + $0xc] sm:$0xf]
  %v2632 = vld [vmem:[%s15 + $0x10] sm:$0xf]
  %v2633 = vld [vmem:[%s15 + $0x14] sm:$0xf]
  %v2634 = vld [vmem:[%s15 + $0x18] sm:$0xf]
  %v2635 = vld [vmem:[%s15 + $0x1c] sm:$0xf]
  %v2636 = vld [vmem:[%s15 + $0x20] sm:$0xf]
  %v2637 = vld [vmem:[%s15 + $0x24] sm:$0xf]
  %v2638 = vld [vmem:[%s15 + $0x28] sm:$0xf]
  %v2639 = vld [vmem:[%s15 + $0x2c] sm:$0xf]
  %v2640 = vld [vmem:[%s15 + $0x30] sm:$0xf]
  %v2641 = vld [vmem:[%s15 + $0x34] sm:$0xf]
  %v2642 = vld [vmem:[%s15 + $0x38] sm:$0xf]
  %v2643 = vld [vmem:[%s15 + $0x3c] sm:$0xf]
  %v2644 = vld [vmem:[%s15 + $0x40] sm:$0xf]
  %v2645 = vld [vmem:[%s15 + $0x44] sm:$0xf]
  %v2646 = vld [vmem:[%s15 + $0x48] sm:$0xf]
  %v2647 = vld [vmem:[%s15 + $0x4c] sm:$0xf]
  %v2648 = vld [vmem:[%s15 + $0x50] sm:$0xf]
  %v2649 = vld [vmem:[%s15 + $0x54] sm:$0xf]
  %v2650 = vld [vmem:[%s15 + $0x58] sm:$0xf]
  %v2651 = vld [vmem:[%s15 + $0x5c] sm:$0xf]
  %v2652 = vld [vmem:[%s15 + $0x60] sm:$0xf]
  %v2653 = vld [vmem:[%s15 + $0x64] sm:$0xf]
  %v2654 = vld [vmem:[%s15 + $0x68] sm:$0xf]
  %v2655 = vld [vmem:[%s15 + $0x6c] sm:$0xf]
  %v2656 = vld [vmem:[%s15 + $0x70] sm:$0xf]
  %v2657 = vld [vmem:[%s15 + $0x74] sm:$0xf]
  %v2658 = vld [vmem:[%s15 + $0x78] sm:$0xf]
  %v2659 = vld [vmem:[%s15 + $0x7c] sm:$0xf]
  %v2660 = vld [vmem:[%s15 + $0x80] sm:$0xf]
  %v2661 = vld [vmem:[%s15 + $0x84] sm:$0xf]
  %v2662 = vld [vmem:[%s15 + $0x88] sm:$0xf]
  %v2663 = vld [vmem:[%s15 + $0x8c] sm:$0xf]
  %v2664 = vld [vmem:[%s15 + $0x90] sm:$0xf]
  %v2665 = vld [vmem:[%s15 + $0x94] sm:$0xf]
  %v2666 = vld [vmem:[%s15 + $0x98] sm:$0xf]
  %v2667 = vld [vmem:[%s15 + $0x9c] sm:$0xf]
  %v2668 = vld [vmem:[%s15 + $0xa0] sm:$0xf]
  %v2669 = vld [vmem:[%s15 + $0xa4] sm:$0xf]
  %v2670 = vld [vmem:[%s15 + $0xa8] sm:$0xf]
  %v2671 = vld [vmem:[%s15 + $0xac] sm:$0xf]
  %v2672 = vld [vmem:[%s15 + $0xb0] sm:$0xf]
  %v2673 = vld [vmem:[%s15 + $0xb4] sm:$0xf]
  %v2674 = vld [vmem:[%s15 + $0xb8] sm:$0xf]
  %v2675 = vld [vmem:[%s15 + $0xbc] sm:$0xf]
  %v2676 = vld [vmem:[%s15 + $0xc0] sm:$0xf]
  %v2677 = vld [vmem:[%s15 + $0xc4] sm:$0xf]
  %v2678 = vld [vmem:[%s15 + $0xc8] sm:$0xf]
  %v2679 = vld [vmem:[%s15 + $0xcc] sm:$0xf]
  %v2680 = vld [vmem:[%s15 + $0xd0] sm:$0xf]
  %v2681 = vld [vmem:[%s15 + $0xd4] sm:$0xf]
  %v2682 = vld [vmem:[%s15 + $0xd8] sm:$0xf]
  %v2683 = vld [vmem:[%s15 + $0xdc] sm:$0xf]
  %v2684 = vld [vmem:[%s15 + $0xe0] sm:$0xf]
  %v2685 = vld [vmem:[%s15 + $0xe4] sm:$0xf]
  %v2686 = vld [vmem:[%s15 + $0xe8] sm:$0xf]
  %v2687 = vld [vmem:[%s15 + $0xec] sm:$0xf]
  %v2688 = vld [vmem:[%s15 + $0xf0] sm:$0xf]
  %v2689 = vld [vmem:[%s15 + $0xf4] sm:$0xf]
  %v2690 = vld [vmem:[%s15 + $0xf8] sm:$0xf]
  %v2691 = vld [vmem:[%s15 + $0xfc] sm:$0xf]
  %v2692 = vld [vmem:[%s16] sm:$0x1]
  %v2694 = vlaneseq
  %v2695 = vshrl.u32 %v2694, 7
  %v2696 = vsub.s32 0, %v2695
  %v2697 = vrot.slane %v2692, %v2696
  %v2763 = vunpack.c.l.b16 %v2628
  %v2764 = vunpack.c.l.b16 %v2629
  %v2765 = vunpack.c.l.b16 %v2630
  %v2766 = vunpack.c.l.b16 %v2631
  %v2767 = vunpack.c.l.b16 %v2632
  %v2768 = vunpack.c.l.b16 %v2633
  %v2769 = vunpack.c.l.b16 %v2634
  %v2770 = vunpack.c.l.b16 %v2635
  %v2771 = vunpack.c.l.b16 %v2636
  %v2772 = vunpack.c.l.b16 %v2637
  %v2773 = vunpack.c.l.b16 %v2638
  %v2774 = vunpack.c.l.b16 %v2639
  %v2775 = vunpack.c.l.b16 %v2640
  %v2776 = vunpack.c.l.b16 %v2641
  %v2777 = vunpack.c.l.b16 %v2642
  %v2778 = vunpack.c.l.b16 %v2643
  %v2779 = vunpack.c.l.b16 %v2644
  %v2780 = vunpack.c.l.b16 %v2645
  %v2781 = vunpack.c.l.b16 %v2646
  %v2782 = vunpack.c.l.b16 %v2647
  %v2783 = vunpack.c.l.b16 %v2648
  %v2784 = vunpack.c.l.b16 %v2649
  %v2785 = vunpack.c.l.b16 %v2650
  %v2786 = vunpack.c.l.b16 %v2651
  %v2787 = vunpack.c.l.b16 %v2652
  %v2788 = vunpack.c.l.b16 %v2653
  %v2789 = vunpack.c.l.b16 %v2654
  %v2790 = vunpack.c.l.b16 %v2655
  %v2791 = vunpack.c.l.b16 %v2656
  %v2792 = vunpack.c.l.b16 %v2657
  %v2793 = vunpack.c.l.b16 %v2658
  %v2794 = vunpack.c.l.b16 %v2659
  %v2795 = vunpack.c.l.b16 %v2660
  %v2796 = vunpack.c.l.b16 %v2661
  %v2797 = vunpack.c.l.b16 %v2662
  %v2798 = vunpack.c.l.b16 %v2663
  %v2799 = vunpack.c.l.b16 %v2664
  %v2800 = vunpack.c.l.b16 %v2665
  %v2801 = vunpack.c.l.b16 %v2666
  %v2802 = vunpack.c.l.b16 %v2667
  %v2803 = vunpack.c.l.b16 %v2668
  %v2804 = vunpack.c.l.b16 %v2669
  %v2805 = vunpack.c.l.b16 %v2670
  %v2806 = vunpack.c.l.b16 %v2671
  %v2807 = vunpack.c.l.b16 %v2672
  %v2808 = vunpack.c.l.b16 %v2673
  %v2809 = vunpack.c.l.b16 %v2674
  %v2810 = vunpack.c.l.b16 %v2675
  %v2811 = vunpack.c.l.b16 %v2676
  %v2812 = vunpack.c.l.b16 %v2677
  %v2813 = vunpack.c.l.b16 %v2678
  %v2814 = vunpack.c.l.b16 %v2679
  %v2815 = vunpack.c.l.b16 %v2680
  %v2816 = vunpack.c.l.b16 %v2681
  %v2817 = vunpack.c.l.b16 %v2682
  %v2818 = vunpack.c.l.b16 %v2683
  %v2819 = vunpack.c.l.b16 %v2684
  %v2820 = vunpack.c.l.b16 %v2685
  %v2821 = vunpack.c.l.b16 %v2686
  %v2822 = vunpack.c.l.b16 %v2687
  %v2823 = vunpack.c.l.b16 %v2688
  %v2824 = vunpack.c.l.b16 %v2689
  %v2825 = vunpack.c.l.b16 %v2690
  %v2826 = vunpack.c.l.b16 %v2691
  %v2827 = vpack.c.b16 %v2764, %v2763
  %v2828 = vpack.c.b16 %v2766, %v2765
  %v2829 = vpack.c.b16 %v2768, %v2767
  %v2830 = vpack.c.b16 %v2770, %v2769
  %v2831 = vpack.c.b16 %v2772, %v2771
  %v2832 = vpack.c.b16 %v2774, %v2773
  %v2833 = vpack.c.b16 %v2776, %v2775
  %v2834 = vpack.c.b16 %v2778, %v2777
  %v2835 = vpack.c.b16 %v2780, %v2779
  %v2836 = vpack.c.b16 %v2782, %v2781
  %v2837 = vpack.c.b16 %v2784, %v2783
  %v2838 = vpack.c.b16 %v2786, %v2785
  %v2839 = vpack.c.b16 %v2788, %v2787
  %v2840 = vpack.c.b16 %v2790, %v2789
  %v2841 = vpack.c.b16 %v2792, %v2791
  %v2842 = vpack.c.b16 %v2794, %v2793
  %v2843 = vpack.c.b16 %v2796, %v2795
  %v2844 = vpack.c.b16 %v2798, %v2797
  %v2845 = vpack.c.b16 %v2800, %v2799
  %v2846 = vpack.c.b16 %v2802, %v2801
  %v2847 = vpack.c.b16 %v2804, %v2803
  %v2848 = vpack.c.b16 %v2806, %v2805
  %v2849 = vpack.c.b16 %v2808, %v2807
  %v2850 = vpack.c.b16 %v2810, %v2809
  %v2851 = vpack.c.b16 %v2812, %v2811
  %v2852 = vpack.c.b16 %v2814, %v2813
  %v2853 = vpack.c.b16 %v2816, %v2815
  %v2854 = vpack.c.b16 %v2818, %v2817
  %v2855 = vpack.c.b16 %v2820, %v2819
  %v2856 = vpack.c.b16 %v2822, %v2821
  %v2857 = vpack.c.b16 %v2824, %v2823
  %v2858 = vpack.c.b16 %v2826, %v2825
  %2891 = vmatprep.subr.bf16.mxu0 0
  %2892 = vmatpush1.bf16.msra.mxu0 %v2827
  %2893 = vmatprep.subr.bf16.mxu0 0
  %2894 = vmatpush1.bf16.msra.mxu0 %v2828
  %2895 = vmatprep.subr.bf16.mxu0 0
  %2896 = vmatpush1.bf16.msra.mxu0 %v2829
  %2897 = vmatprep.subr.bf16.mxu0 0
  %2898 = vmatpush1.bf16.msra.mxu0 %v2830
  %2899 = vmatprep.subr.bf16.mxu0 0
  %2900 = vmatpush1.bf16.msra.mxu0 %v2831
  %2901 = vmatprep.subr.bf16.mxu0 0
  %2902 = vmatpush1.bf16.msra.mxu0 %v2832
  %2903 = vmatprep.subr.bf16.mxu0 0
  %2904 = vmatpush1.bf16.msra.mxu0 %v2833
  %2905 = vmatprep.subr.bf16.mxu0 0
  %2906 = vmatpush1.bf16.msra.mxu0 %v2834
  %2907 = vmatprep.subr.bf16.mxu0 0
  %2908 = vmatpush1.bf16.msra.mxu0 %v2835
  %2909 = vmatprep.subr.bf16.mxu0 0
  %2910 = vmatpush1.bf16.msra.mxu0 %v2836
  %2911 = vmatprep.subr.bf16.mxu0 0
  %2912 = vmatpush1.bf16.msra.mxu0 %v2837
  %2913 = vmatprep.subr.bf16.mxu0 0
  %2914 = vmatpush1.bf16.msra.mxu0 %v2838
  %2915 = vmatprep.subr.bf16.mxu0 0
  %2916 = vmatpush1.bf16.msra.mxu0 %v2839
  %2917 = vmatprep.subr.bf16.mxu0 0
  %2918 = vmatpush1.bf16.msra.mxu0 %v2840
  %2919 = vmatprep.subr.bf16.mxu0 0
  %2920 = vmatpush1.bf16.msra.mxu0 %v2841
  %2921 = vmatprep.subr.bf16.mxu0 0
  %2922 = vmatpush1.bf16.msra.mxu0 %v2842
  %2923 = vmatprep.mubr.bf16.mxu0 %v2621
  %2924 = vmatmul.mubr.bf16.gmra.mrb[0].mxu0 %v2620
  %v2925 = vpop.f32.mrb[0].mxu0
  %v2926 = vadd.f32 %v2697, %v2925
  %v2927 = vpop.f32.mrb[0].mxu0
  %v2928 = vpop.f32.mrb[0].mxu0
  %v2929 = vadd.f32 %v2697, %v2928
  %v2930 = vpop.f32.mrb[0].mxu0
  %2931 = vmatprep.mubr.bf16.mxu0 %v2625
  %2932 = vmatmul.mubr.bf16.gmra.mrb[0].mxu0 %v2624
  %v2933 = vpop.f32.mrb[0].mxu0
  %v2934 = vadd.f32 %v2697, %v2933
  %v2935 = vpop.f32.mrb[0].mxu0
  %v2936 = vpop.f32.mrb[0].mxu0
  %v2937 = vadd.f32 %v2697, %v2936
  %v2938 = vpop.f32.mrb[0].mxu0
  %2939 = vdwg.mxu0
  %2940 = vmatprep.subr.bf16.mxu0 0
  %2941 = vmatpush1.bf16.msra.mxu0 %v2843
  %2942 = vmatprep.subr.bf16.mxu0 0
  %2943 = vmatpush1.bf16.msra.mxu0 %v2844
  %2944 = vmatprep.subr.bf16.mxu0 0
  %2945 = vmatpush1.bf16.msra.mxu0 %v2845
  %2946 = vmatprep.subr.bf16.mxu0 0
  %2947 = vmatpush1.bf16.msra.mxu0 %v2846
  %2948 = vmatprep.subr.bf16.mxu0 0
  %2949 = vmatpush1.bf16.msra.mxu0 %v2847
  %2950 = vmatprep.subr.bf16.mxu0 0
  %2951 = vmatpush1.bf16.msra.mxu0 %v2848
  %2952 = vmatprep.subr.bf16.mxu0 0
  %2953 = vmatpush1.bf16.msra.mxu0 %v2849
  %2954 = vmatprep.subr.bf16.mxu0 0
  %2955 = vmatpush1.bf16.msra.mxu0 %v2850
  %2956 = vmatprep.subr.bf16.mxu0 0
  %2957 = vmatpush1.bf16.msra.mxu0 %v2851
  %2958 = vmatprep.subr.bf16.mxu0 0
  %2959 = vmatpush1.bf16.msra.mxu0 %v2852
  %2960 = vmatprep.subr.bf16.mxu0 0
  %2961 = vmatpush1.bf16.msra.mxu0 %v2853
  %2962 = vmatprep.subr.bf16.mxu0 0
  %2963 = vmatpush1.bf16.msra.mxu0 %v2854
  %2964 = vmatprep.subr.bf16.mxu0 0
  %2965 = vmatpush1.bf16.msra.mxu0 %v2855
  %2966 = vmatprep.subr.bf16.mxu0 0
  %2967 = vmatpush1.bf16.msra.mxu0 %v2856
  %2968 = vmatprep.subr.bf16.mxu0 0
  %2969 = vmatpush1.bf16.msra.mxu0 %v2857
  %2970 = vmatprep.subr.bf16.mxu0 0
  %2971 = vmatpush1.bf16.msra.mxu0 %v2858
  %2972 = vmatprep.mubr.bf16.mxu0 %v2623
  %2973 = vmatmul.mubr.bf16.gmra.mrb[0].mxu0 %v2622
  %v2974 = vpop.f32.mrb[0].mxu0
  %v2975 = vadd.f32 %v2926, %v2974
  %v2976 = vpop.f32.mrb[0].mxu0
  %v2977 = vpop.f32.mrb[0].mxu0
  %v2978 = vadd.f32 %v2929, %v2977
  %v2979 = vpop.f32.mrb[0].mxu0
  %2980 = vmatprep.mubr.bf16.mxu0 %v2627
  %2981 = vmatmul.mubr.bf16.gmra.mrb[0].mxu0 %v2626
  %v2982 = vpop.f32.mrb[0].mxu0
  %v2983 = vadd.f32 %v2934, %v2982
  %v2984 = vpop.f32.mrb[0].mxu0
  %v2985 = vpop.f32.mrb[0].mxu0
  %v2986 = vadd.f32 %v2937, %v2985
  %v2987 = vpop.f32.mrb[0].mxu0
  %2988 = vdwg.mxu0
  %v2989 = vadd.f32 %v2278, %v2975
  %v2990 = vadd.f32 %v2279, %v2978
  %v2991 = vadd.f32 %v2280, %v2983
  %v2992 = vadd.f32 %v2281, %v2986
  %v2993 = vld [vmem:[%s17] sm:$0x1]
  %v2994 = vld [vmem:[%s18] sm:$0x1]
  %2995 = vadd.xlane.f32.xlu0 %v2989
  %v2996 = vpop.xlane.xlu0 %2995
  %2997 = vadd.xlane.f32.xlu0 %v2990
  %v2998 = vpop.xlane.xlu0 %2997
  %2999 = vadd.xlane.f32.xlu0 %v2991
  %v3000 = vpop.xlane.xlu0 %2999
  %3001 = vadd.xlane.f32.xlu0 %v2992
  %v3002 = vpop.xlane.xlu0 %3001
  %v3003 = vmul.f32 %v2996, %v2225
  %v3004 = vmul.f32 %v2998, %v2225
  %v3005 = vmul.f32 %v3000, %v2225
  %v3006 = vmul.f32 %v3002, %v2225
  %v3007 = vsub.f32 %v2989, %v3003
  %v3008 = vsub.f32 %v2990, %v3004
  %v3009 = vsub.f32 %v2991, %v3005
  %v3010 = vsub.f32 %v2992, %v3006
  %v3011 = vmul.f32 %v3007, %v3007
  %v3012 = vmul.f32 %v3008, %v3008
  %v3013 = vmul.f32 %v3009, %v3009
  %v3014 = vmul.f32 %v3010, %v3010
  %3015 = vadd.xlane.f32.xlu0 %v3011
  %v3016 = vpop.xlane.xlu0 %3015
  %3017 = vadd.xlane.f32.xlu0 %v3012
  %v3018 = vpop.xlane.xlu0 %3017
  %3019 = vadd.xlane.f32.xlu0 %v3013
  %v3020 = vpop.xlane.xlu0 %3019
  %3021 = vadd.xlane.f32.xlu0 %v3014
  %v3022 = vpop.xlane.xlu0 %3021
  %v3023 = vmul.f32 %v3016, %v2225
  %v3024 = vmul.f32 %v3018, %v2225
  %v3025 = vmul.f32 %v3020, %v2225
  %v3026 = vmul.f32 %v3022, %v2225
  %v3027 = vadd.f32 %v3023, 1e-06
  %v3028 = vadd.f32 %v3024, 1e-06
  %v3029 = vadd.f32 %v3025, 1e-06
  %v3030 = vadd.f32 %v3026, 1e-06
  %v3031 = vrsqrt.pop %v3027
  %v3032 = vrsqrt.pop %v3028
  %v3033 = vrsqrt.pop %v3029
  %v3034 = vrsqrt.pop %v3030
  %v3035 = vmul.f32 %v3007, %v3031
  %v3036 = vmul.f32 %v3008, %v3032
  %v3037 = vmul.f32 %v3009, %v3033
  %v3038 = vmul.f32 %v3010, %v3034
  %v3040 = vlaneseq
  %v3041 = vshrl.u32 %v3040, 7
  %v3042 = vsub.s32 0, %v3041
  %v3043 = vrot.slane %v2993, %v3042
  %v3045 = vmul.f32 %v3035, %v3043
  %v3046 = vmul.f32 %v3036, %v3043
  %v3047 = vmul.f32 %v3037, %v3043
  %v3048 = vmul.f32 %v3038, %v3043
  %v3050 = vlaneseq
  %v3051 = vshrl.u32 %v3050, 7
  %v3052 = vsub.s32 0, %v3051
  %v3053 = vrot.slane %v2994, %v3052
  %v3055 = vadd.f32 %v3045, %v3053
  %v3056 = vadd.f32 %v3046, %v3053
  %v3057 = vadd.f32 %v3047, %v3053
  %v3058 = vadd.f32 %v3048, %v3053
  %3059 = vst [vmem:[%s19] sm:$0xff] %v3055
  %3060 = vst [vmem:[%s19 + $0x8] sm:$0xff] %v3056
  %3061 = vst [vmem:[%s19 + $0x10] sm:$0xff] %v3057
  %3062 = vst [vmem:[%s19 + $0x18] sm:$0xff] %v3058
  // Predicated region
  $region78: #{struct2seq_decoder.8} parent=0 // pred_check
    _
  $region79: #{struct2seq_decoder.8} parent=0 // pred_check_branch
    %3064 = sbr.rel (0) target = $region81
  $region80: #{struct2seq_decoder.8} parent=0 // pred_region
    _
  $region81: #{struct2seq_decoder.8} parent=0 // pred_fallthru
    _
  // Predicated region
  $region82: #{struct2seq_decoder.8} parent=0 // pred_check
    _
  $region83: #{struct2seq_decoder.8} parent=0 // pred_check_branch
    %3066 = sbr.rel (0) target = $region85
  $region84: #{struct2seq_decoder.8} parent=0 // pred_region
    _
  $region85: #{struct2seq_decoder.8} parent=0 // pred_fallthru
    _

</llo_original>
